<compile_context>
chip_gen: v5e
topology: v5e:2x2
jax: 0.10.0
libtpu: 0.0.40
codegen_flags: <defaults>
</compile_context>

<pallas_src>
import functools
import math

import jax
import jax.numpy as jnp
from jax.experimental import pallas as pl
from jax.experimental.pallas import tpu as pltpu


def _vmem_limit_bytes():
    """Scoped-VMEM budget per generation: ~half of physical, >= 32 MiB."""
    try:
        cap = pltpu.get_tpu_info().vmem_capacity_bytes
    except Exception:
        return 32 * 1024 * 1024
    return max(32 * 1024 * 1024, min(cap // 2, 64 * 1024 * 1024))


# ----------------------------------------------------------------------------
# Pallas kernels
# ----------------------------------------------------------------------------
def _spectral_mix_kernel(ar_ref, ai_ref, wr_ref, wi_ref, o_ref):
    # Per-mode complex channel contraction, modes as the MXU batch axis:
    #   out[m,b,o] = sum_i a[m,b,i] * w[m,i,o]   (plain 4-matmul complex form)
    ar = ar_ref[...]                       # (tile_m, B, Cin)
    ai = ai_ref[...]
    wr = wr_ref[...]                       # (tile_m, Cin, Cout)
    wi = wi_ref[...]
    rr = jnp.einsum('mbi,mio->mbo', ar, wr, preferred_element_type=jnp.float32)
    ii = jnp.einsum('mbi,mio->mbo', ai, wi, preferred_element_type=jnp.float32)
    ri = jnp.einsum('mbi,mio->mbo', ar, wi, preferred_element_type=jnp.float32)
    ir = jnp.einsum('mbi,mio->mbo', ai, wr, preferred_element_type=jnp.float32)
    # real / imag packed on the lane axis -> one wider store per step
    o_ref[...] = jnp.concatenate([rr - ii, ri + ir], axis=-1)


def spectral_mix(a_r, a_i, w_r, w_i, tile_m=128):
    """a_{r,i}: (2M, B, Cin); w_{r,i}: (2M, Cin, Cout) -> (2M, B, 2*Cout)."""
    M2, B, Cin = a_r.shape
    Cout = w_r.shape[-1]
    tile_m = min(tile_m, M2)
    grid = (pl.cdiv(M2, tile_m),)          # ragged last block handled by Pallas
    a_spec = pl.BlockSpec((tile_m, B, Cin), lambda m: (m, 0, 0))
    w_spec = pl.BlockSpec((tile_m, Cin, Cout), lambda m: (m, 0, 0))
    o_spec = pl.BlockSpec((tile_m, B, 2 * Cout), lambda m: (m, 0, 0))
    return pl.pallas_call(
        _spectral_mix_kernel,
        out_shape=jax.ShapeDtypeStruct((M2, B, 2 * Cout), jnp.float32),
        grid=grid,
        in_specs=[a_spec, a_spec, w_spec, w_spec],
        out_specs=o_spec,
        compiler_params=pltpu.CompilerParams(
            dimension_semantics=("parallel",),
            vmem_limit_bytes=_vmem_limit_bytes()),
    )(a_r, a_i, w_r, w_i)


def _pointwise_gelu_kernel(x_ref, spec_ref, w_ref, b_ref, o_ref):
    # channels on sublanes, tokens on lanes -> lane-dense (Cout, tile_t) store.
    y = jnp.dot(w_ref[...], x_ref[...], preferred_element_type=jnp.float32)
    y = y + b_ref[...] + spec_ref[...]
    # exact erf-based GELU (matches torch.nn.functional.gelu default)
    o_ref[...] = 0.5 * y * (1.0 + jax.lax.erf(y * (1.0 / math.sqrt(2.0))))


def pointwise_conv_gelu(x3, spec3, w_oc_ic, bias_col, tile_t=4096):
    """x3: (B, Cin, N); spec3: (B, Cout, N); w: (Cout, Cin); bias: (Cout, 1)."""
    B, Cin, N = x3.shape
    Cout = w_oc_ic.shape[0]
    tile_t = min(tile_t, N)                # single full-width block when small
    grid = (B, pl.cdiv(N, tile_t))         # no host-side pad, no output slice
    return pl.pallas_call(
        _pointwise_gelu_kernel,
        out_shape=jax.ShapeDtypeStruct((B, Cout, N), jnp.float32),
        grid=grid,
        in_specs=[
            pl.BlockSpec((None, Cin, tile_t), lambda b, t: (b, 0, t)),
            pl.BlockSpec((None, Cout, tile_t), lambda b, t: (b, 0, t)),
            pl.BlockSpec((Cout, Cin), lambda b, t: (0, 0)),
            pl.BlockSpec((Cout, 1), lambda b, t: (0, 0)),
        ],
        out_specs=pl.BlockSpec((None, Cout, tile_t), lambda b, t: (b, 0, t)),
        compiler_params=pltpu.CompilerParams(
            dimension_semantics=("parallel", "parallel"),
            vmem_limit_bytes=_vmem_limit_bytes()),
    )(x3, spec3, w_oc_ic, bias_col)


# ----------------------------------------------------------------------------
# Hoisted weight preparation (do ONCE, outside the per-step forward)
# ----------------------------------------------------------------------------
def prepare_spectral_weights(params, modes1, modes2):
    """(Cin,Cout,m1,m2) cfloat x2 -> real/imag (2*M, Cin, Cout) float32."""
    M = modes1 * modes2
    Cin, Cout = params["weights1"].shape[:2]
    w = jnp.concatenate(
        [params["weights1"].reshape(Cin, Cout, M),
         params["weights2"].reshape(Cin, Cout, M)], axis=-1)      # (Cin,Cout,2M)
    w = jnp.transpose(w, (2, 0, 1))                               # (2M,Cin,Cout)
    return jnp.real(w).astype(jnp.float32), jnp.imag(w).astype(jnp.float32)


# ----------------------------------------------------------------------------
# FourierBlock2D forward (Pallas for the hot paths, JAX for FFT glue)
# ----------------------------------------------------------------------------
def fourier_block2d_forward(x, params, spectral_w, *, modes1, modes2):
    """gelu(SpectralConv2d(x) + Conv2d_1x1(x)); x: (B, C, H, W) float32 NCHW."""
    B, C, H, W = x.shape
    Wf = W // 2 + 1
    M = modes1 * modes2
    w_r, w_i = spectral_w                                         # (2M,Cin,Cout)
    Cout = w_r.shape[-1]

    # --- spectral convolution ------------------------------------------------
    # TODO(synk): rfft2/irfft2 have no Pallas primitive; a pruned inverse FFT
    # over the 2*modes1 nonzero rows would further cut the irfft2 cost.
    x_ft = jnp.fft.rfft2(x)                                       # (B,C,H,Wf) c64

    lo = x_ft[:, :, :modes1, :modes2]
    hi = x_ft[:, :, H - modes1:, :modes2]
    a = jnp.concatenate([lo, hi], axis=2).reshape(B, C, 2 * M)    # (B,Cin,2M)
    a_r = jnp.real(a).transpose(2, 0, 1)                          # (2M,B,Cin)
    a_i = jnp.imag(a).transpose(2, 0, 1)

    o = spectral_mix(a_r, a_i, w_r, w_i)                          # (2M,B,2*Cout)
    o = jax.lax.complex(o[..., :Cout], o[..., Cout:])             # (2M,B,Cout)
    o = o.transpose(1, 2, 0).reshape(B, Cout, 2 * modes1, modes2)

    # kept-mode scatter into the zero spectrum: one concat + one pad write pass
    if 2 * modes1 <= H:
        mid = jnp.zeros((B, Cout, H - 2 * modes1, modes2), jnp.complex64)
        col = jnp.concatenate([o[:, :, :modes1], mid, o[:, :, modes1:]], axis=2)
        out_ft = jnp.pad(col, ((0, 0), (0, 0), (0, 0), (0, Wf - modes2)))
    else:  # overlapping-slab corner case: keep reference scatter semantics
        out_ft = jnp.zeros((B, Cout, H, Wf), dtype=jnp.complex64)
        out_ft = out_ft.at[:, :, :modes1, :modes2].set(o[:, :, :modes1])
        out_ft = out_ft.at[:, :, H - modes1:, :modes2].set(o[:, :, modes1:])
    spec = jnp.fft.irfft2(out_ft, s=(H, W))                       # (B,Cout,H,W)

    # --- fused 1x1 conv + residual + GELU (Pallas) ---------------------------
    x3 = x.reshape(B, C, H * W)
    spec3 = spec.reshape(B, Cout, H * W)
    w_mat = params["conv_w"][:, :, 0, 0]                          # (Cout, Cin)
    bias_col = params["conv_b"].reshape(Cout, 1)
    y = pointwise_conv_gelu(x3, spec3, w_mat, bias_col)           # (B,Cout,H*W)
    return y.reshape(B, Cout, H, W)


# ----------------------------------------------------------------------------
# Pure-JAX reference (mirrors the PyTorch forward) for verification
# ----------------------------------------------------------------------------
def fourier_block2d_reference(x, params, modes1, modes2):
    B, C, H, W = x.shape
    Wf = W // 2 + 1
    x_ft = jnp.fft.rfft2(x)
    out_ft = jnp.zeros((B, C, H, Wf), dtype=jnp.complex64)
    out_ft = out_ft.at[:, :, :modes1, :modes2].set(
        jnp.einsum('bixy,ioxy->boxy', x_ft[:, :, :modes1, :modes2],
                   params["weights1"]))
    out_ft = out_ft.at[:, :, H - modes1:, :modes2].set(
        jnp.einsum('bixy,ioxy->boxy', x_ft[:, :, H - modes1:, :modes2],
                   params["weights2"]))
    spec = jnp.fft.irfft2(out_ft, s=(H, W))
    conv = (jnp.einsum('oi,bihw->bohw', params["conv_w"][:, :, 0, 0], x)
            + params["conv_b"][None, :, None, None])
    y = spec + conv
    return 0.5 * y * (1.0 + jax.lax.erf(y / math.sqrt(2.0)))


# ----------------------------------------------------------------------------
# Deterministic parameter init (shapes match the PyTorch module __init__)
# ----------------------------------------------------------------------------
def init_params(key, width, modes1, modes2):
    scale = 1.0 / (width * width)
    k1, k2, k3, k4, k5, k6 = jax.random.split(key, 6)

    def cplx_weights(kr, ki):
        re = jax.random.uniform(kr, (width, width, modes1, modes2), jnp.float32)
        im = jax.random.uniform(ki, (width, width, modes1, modes2), jnp.float32)
        return scale * jax.lax.complex(re, im)

    bound = 1.0 / math.sqrt(width)  # Conv2d(width, width, 1) fan_in = width
    return {
        "weights1": cplx_weights(k1, k2),
        "weights2": cplx_weights(k3, k4),
        "conv_w": jax.random.uniform(k5, (width, width, 1, 1), jnp.float32,
                                     minval=-bound, maxval=bound),
        "conv_b": jax.random.uniform(k6, (width,), jnp.float32,
                                     minval=-bound, maxval=bound),
    }


if __name__ == "__main__":
    B, width, H, W = 2, 8, 16, 16
    modes1, modes2 = 4, 4

    key = jax.random.PRNGKey(0)
    kx, kp = jax.random.split(key)
    x = jax.random.normal(kx, (B, width, H, W), jnp.float32)
    params = init_params(kp, width, modes1, modes2)

    # hoisted once (outside the per-call forward), per review feedback
    spectral_w = jax.block_until_ready(
        prepare_spectral_weights(params, modes1, modes2))

    fwd = jax.jit(functools.partial(fourier_block2d_forward,
                                    modes1=modes1, modes2=modes2))
    out = jax.block_until_ready(fwd(x, params, spectral_w))

    ref = fourier_block2d_reference(x, params, modes1, modes2)
    assert out.shape == (B, width, H, W) and out.dtype == jnp.float32
    max_err = float(jnp.max(jnp.abs(out - ref)))
    assert jnp.allclose(out, ref, rtol=1e-3, atol=1e-4), max_err

    print("KERNEL_OK")
</pallas_src>

<mosaic_0001>
module attributes {stable_mosaic.version = 11 : i64} {
  func.func @_spectral_mix_kernel(%arg0: i32, %arg1: memref<32x2x8xf32, #tpu.memory_space<vmem>>, %arg2: memref<32x2x8xf32, #tpu.memory_space<vmem>>, %arg3: memref<32x8x8xf32, #tpu.memory_space<vmem>>, %arg4: memref<32x8x8xf32, #tpu.memory_space<vmem>>, %arg5: memref<32x2x16xf32, #tpu.memory_space<vmem>>) attributes {dimension_semantics = [#tpu.dimension_semantics<parallel>], iteration_bounds = array<i64: 1>, scalar_prefetch = 0 : i64, scratch_operands = 0 : i64, tpu.core_type = #tpu.core_type<tc>, window_params = [{transform_indices = @transform_0, window_bounds = array<i64: 32, 2, 8>}, {transform_indices = @transform_1, window_bounds = array<i64: 32, 2, 8>}, {transform_indices = @transform_2, window_bounds = array<i64: 32, 8, 8>}, {transform_indices = @transform_3, window_bounds = array<i64: 32, 8, 8>}, {transform_indices = @transform_4, window_bounds = array<i64: 32, 2, 16>}]} {
    %c0 = arith.constant 0 : index
    %c0_0 = arith.constant 0 : index
    %c0_1 = arith.constant 0 : index
    %0 = vector.load %arg1[%c0, %c0_0, %c0_1] : memref<32x2x8xf32, #tpu.memory_space<vmem>>, vector<32x2x8xf32>
    %c0_2 = arith.constant 0 : index
    %c0_3 = arith.constant 0 : index
    %c0_4 = arith.constant 0 : index
    %1 = vector.load %arg2[%c0_2, %c0_3, %c0_4] : memref<32x2x8xf32, #tpu.memory_space<vmem>>, vector<32x2x8xf32>
    %c0_5 = arith.constant 0 : index
    %c0_6 = arith.constant 0 : index
    %c0_7 = arith.constant 0 : index
    %2 = vector.load %arg3[%c0_5, %c0_6, %c0_7] : memref<32x8x8xf32, #tpu.memory_space<vmem>>, vector<32x8x8xf32>
    %c0_8 = arith.constant 0 : index
    %c0_9 = arith.constant 0 : index
    %c0_10 = arith.constant 0 : index
    %3 = vector.load %arg4[%c0_8, %c0_9, %c0_10] : memref<32x8x8xf32, #tpu.memory_space<vmem>>, vector<32x8x8xf32>
    "tpu.trace_start"() <{level = 10 : i32, message = "mbi,mio->mbo"}> : () -> ()
    %cst = arith.constant dense<0.000000e+00> : vector<32x2x8xf32>
    %4 = tpu.matmul %0, %2, %cst {dimension_numbers = #tpu.dot_dimension_numbers<[2], [1], [1], [2], [0, 0, 0, 1, 1, 2], [0], [0]>} : vector<32x2x8xf32>, vector<32x8x8xf32>, vector<32x2x8xf32> -> vector<32x2x8xf32>
    %cst_11 = arith.constant dense<0.000000e+00> : vector<32x2x8xf32>
    %5 = tpu.matmul %1, %3, %cst_11 {dimension_numbers = #tpu.dot_dimension_numbers<[2], [1], [1], [2], [0, 0, 0, 1, 1, 2], [0], [0]>} : vector<32x2x8xf32>, vector<32x8x8xf32>, vector<32x2x8xf32> -> vector<32x2x8xf32>
    %cst_12 = arith.constant dense<0.000000e+00> : vector<32x2x8xf32>
    %6 = tpu.matmul %0, %3, %cst_12 {dimension_numbers = #tpu.dot_dimension_numbers<[2], [1], [1], [2], [0, 0, 0, 1, 1, 2], [0], [0]>} : vector<32x2x8xf32>, vector<32x8x8xf32>, vector<32x2x8xf32> -> vector<32x2x8xf32>
    %cst_13 = arith.constant dense<0.000000e+00> : vector<32x2x8xf32>
    %7 = tpu.matmul %1, %2, %cst_13 {dimension_numbers = #tpu.dot_dimension_numbers<[2], [1], [1], [2], [0, 0, 0, 1, 1, 2], [0], [0]>} : vector<32x2x8xf32>, vector<32x8x8xf32>, vector<32x2x8xf32> -> vector<32x2x8xf32>
    "tpu.trace_stop"() : () -> ()
    %8 = arith.subf %4, %5 : vector<32x2x8xf32>
    %9 = arith.addf %6, %7 : vector<32x2x8xf32>
    %10 = tpu.concatenate %8, %9 in 2 : vector<32x2x8xf32>, vector<32x2x8xf32> -> vector<32x2x16xf32>
    %c0_14 = arith.constant 0 : index
    %c0_15 = arith.constant 0 : index
    %c0_16 = arith.constant 0 : index
    %11 = vector.load %arg5[%c0_14, %c0_15, %c0_16] : memref<32x2x16xf32, #tpu.memory_space<vmem>>, vector<32x2x16xf32>
    tpu.vector_store %arg5[%c0_14, %c0_15, %c0_16], %10 {strides = array<i32>} : memref<32x2x16xf32, #tpu.memory_space<vmem>>, vector<32x2x16xf32>,
    return
  }
  func.func @transform_0(%arg0: i32) -> (i32, i32, i32) {
    %c0_i32 = arith.constant 0 : i32
    %c0_i32_0 = arith.constant 0 : i32
    %c0_i32_1 = arith.constant 0 : i32
    return %arg0, %c0_i32, %c0_i32_0 : i32, i32, i32
  }
  func.func @transform_1(%arg0: i32) -> (i32, i32, i32) {
    %c0_i32 = arith.constant 0 : i32
    %c0_i32_0 = arith.constant 0 : i32
    %c0_i32_1 = arith.constant 0 : i32
    return %arg0, %c0_i32, %c0_i32_0 : i32, i32, i32
  }
  func.func @transform_2(%arg0: i32) -> (i32, i32, i32) {
    %c0_i32 = arith.constant 0 : i32
    %c0_i32_0 = arith.constant 0 : i32
    %c0_i32_1 = arith.constant 0 : i32
    return %arg0, %c0_i32, %c0_i32_0 : i32, i32, i32
  }
  func.func @transform_3(%arg0: i32) -> (i32, i32, i32) {
    %c0_i32 = arith.constant 0 : i32
    %c0_i32_0 = arith.constant 0 : i32
    %c0_i32_1 = arith.constant 0 : i32
    return %arg0, %c0_i32, %c0_i32_0 : i32, i32, i32
  }
  func.func @transform_4(%arg0: i32) -> (i32, i32, i32) {
    %c0_i32 = arith.constant 0 : i32
    %c0_i32_0 = arith.constant 0 : i32
    %c0_i32_1 = arith.constant 0 : i32
    return %arg0, %c0_i32, %c0_i32_0 : i32, i32, i32
  }
}

module attributes {stable_mosaic.version = 11 : i64} {
  func.func @_pointwise_gelu_kernel(%arg0: i32, %arg1: i32, %arg2: memref<1x8x256xf32, #tpu.memory_space<vmem>>, %arg3: memref<1x8x256xf32, #tpu.memory_space<vmem>>, %arg4: memref<8x8xf32, #tpu.memory_space<vmem>>, %arg5: memref<8x1xf32, #tpu.memory_space<vmem>>, %arg6: memref<1x8x256xf32, #tpu.memory_space<vmem>>) attributes {dimension_semantics = [#tpu.dimension_semantics<parallel>, #tpu.dimension_semantics<parallel>], iteration_bounds = array<i64: 2, 1>, scalar_prefetch = 0 : i64, scratch_operands = 0 : i64, tpu.core_type = #tpu.core_type<tc>, window_params = [{transform_indices = @transform_0, window_bounds = array<i64: 1, 8, 256>}, {transform_indices = @transform_1, window_bounds = array<i64: 1, 8, 256>}, {pipeline_mode = #tpu.pipeline_mode<synchronous>, transform_indices = @transform_2, window_bounds = array<i64: 8, 8>}, {pipeline_mode = #tpu.pipeline_mode<synchronous>, transform_indices = @transform_3, window_bounds = array<i64: 8, 1>}, {transform_indices = @transform_4, window_bounds = array<i64: 1, 8, 256>}]} {
    %c0 = arith.constant 0 : index
    %c0_0 = arith.constant 0 : index
    %0 = vector.load %arg4[%c0, %c0_0] : memref<8x8xf32, #tpu.memory_space<vmem>>, vector<8x8xf32>
    %c0_1 = arith.constant 0 : index
    %c0_2 = arith.constant 0 : index
    %c0_3 = arith.constant 0 : index
    %1 = vector.load %arg2[%c0_1, %c0_2, %c0_3] : memref<1x8x256xf32, #tpu.memory_space<vmem>>, vector<1x8x256xf32>
    %2 = vector.shape_cast %1 : vector<1x8x256xf32> to vector<8x256xf32>
    %cst = arith.constant dense<0.000000e+00> : vector<8x256xf32>
    %3 = tpu.matmul %0, %2, %cst {dimension_numbers = #tpu.dot_dimension_numbers<[1], [0], [0], [1], [0, 0, 1, 1], [], []>} : vector<8x8xf32>, vector<8x256xf32>, vector<8x256xf32> -> vector<8x256xf32>
    %c0_4 = arith.constant 0 : index
    %c0_5 = arith.constant 0 : index
    %4 = vector.load %arg5[%c0_4, %c0_5] : memref<8x1xf32, #tpu.memory_space<vmem>>, vector<8x1xf32>
    %5 = vector.broadcast %4 : vector<8x1xf32> to vector<8x256xf32>
    %6 = arith.addf %3, %5 : vector<8x256xf32>
    %c0_6 = arith.constant 0 : index
    %c0_7 = arith.constant 0 : index
    %c0_8 = arith.constant 0 : index
    %7 = vector.load %arg3[%c0_6, %c0_7, %c0_8] : memref<1x8x256xf32, #tpu.memory_space<vmem>>, vector<1x8x256xf32>
    %8 = vector.shape_cast %7 : vector<1x8x256xf32> to vector<8x256xf32>
    %9 = arith.addf %6, %8 : vector<8x256xf32>
    %cst_9 = arith.constant 5.000000e-01 : f32
    %10 = vector.broadcast %cst_9 : f32 to vector<8x256xf32>
    %11 = arith.mulf %10, %9 : vector<8x256xf32>
    %cst_10 = arith.constant 0.707106769 : f32
    %12 = vector.broadcast %cst_10 : f32 to vector<8x256xf32>
    %13 = arith.mulf %9, %12 : vector<8x256xf32>
    %14 = math.erf %13 : vector<8x256xf32>
    %cst_11 = arith.constant 1.000000e+00 : f32
    %15 = vector.broadcast %cst_11 : f32 to vector<8x256xf32>
    %16 = arith.addf %15, %14 : vector<8x256xf32>
    %17 = arith.mulf %11, %16 : vector<8x256xf32>
    %c0_12 = arith.constant 0 : index
    %c0_13 = arith.constant 0 : index
    %c0_14 = arith.constant 0 : index
    %18 = vector.load %arg6[%c0_12, %c0_13, %c0_14] : memref<1x8x256xf32, #tpu.memory_space<vmem>>, vector<1x8x256xf32>
    %19 = vector.shape_cast %18 : vector<1x8x256xf32> to vector<8x256xf32>
    %20 = vector.shape_cast %17 : vector<8x256xf32> to vector<1x8x256xf32>
    tpu.vector_store %arg6[%c0_12, %c0_13, %c0_14], %20 {strides = array<i32>} : memref<1x8x256xf32, #tpu.memory_space<vmem>>, vector<1x8x256xf32>,
    return
  }
  func.func @transform_0(%arg0: i32, %arg1: i32) -> (i32, i32, i32) {
    %c0_i32 = arith.constant 0 : i32
    %c0_i32_0 = arith.constant 0 : i32
    return %arg0, %c0_i32, %arg1 : i32, i32, i32
  }
  func.func @transform_1(%arg0: i32, %arg1: i32) -> (i32, i32, i32) {
    %c0_i32 = arith.constant 0 : i32
    %c0_i32_0 = arith.constant 0 : i32
    return %arg0, %c0_i32, %arg1 : i32, i32, i32
  }
  func.func @transform_2(%arg0: i32, %arg1: i32) -> (i32, i32) {
    %c0_i32 = arith.constant 0 : i32
    %c0_i32_0 = arith.constant 0 : i32
    %c0_i32_1 = arith.constant 0 : i32
    return %c0_i32, %c0_i32_0 : i32, i32
  }
  func.func @transform_3(%arg0: i32, %arg1: i32) -> (i32, i32) {
    %c0_i32 = arith.constant 0 : i32
    %c0_i32_0 = arith.constant 0 : i32
    %c0_i32_1 = arith.constant 0 : i32
    return %c0_i32, %c0_i32_0 : i32, i32
  }
  func.func @transform_4(%arg0: i32, %arg1: i32) -> (i32, i32, i32) {
    %c0_i32 = arith.constant 0 : i32
    %c0_i32_0 = arith.constant 0 : i32
    return %arg0, %c0_i32, %arg1 : i32, i32, i32
  }
}

</mosaic_0001>

<llo_original>
// kernel: reverse.0
$region0: #{reverse.0}
  %s0 = inlined_call_operand.vmem [shape: f32[2,8,16,7], index: 0, kind: input, shape index: {}]
  %s1 = inlined_call_operand.vmem [shape: f32[2,8,16,7], index: 1, kind: output, shape index: {}]
  $region1: #{reverse.0} parent=0
    #allocation0 [shape = 'u8[131072]{0}', space=vmem, size = 0x20000, scoped, tag = 'operand span for operand 0']
    #allocation1 [shape = 'u8[65536]{0}', space=vmem, size = 0x10000, scoped, tag = 'operand span for operand 1']
    %s2 = scalar_lea.vmem [#allocation0], 8
    // Predicated region
    $region2: #{reverse.0} parent=1 // pred_check
      _
    $region3: #{reverse.0} parent=1 // pred_check_branch
      %4 = sbr.rel (0) target = $region5
    $region4: #{reverse.0} parent=1 // pred_region
      // Predicated region
      $region6: #{reverse.0} parent=4 // pred_check
        _
      $region7: #{reverse.0} parent=4 // pred_check_branch
        %6 = sbr.rel (0) target = $region9
      $region8: #{reverse.0} parent=4 // pred_region
        // Predicated region
        $region21: #{reverse.0} parent=8 // pred_check
          _
        $region22: #{reverse.0} parent=8 // pred_check_branch
          %52 = sbr.rel (0) target = $region24
        $region23: #{reverse.0} parent=8 // pred_region
          loop: start=0, step=1, limit=1
          $region25: #{reverse.0} parent=23 // loop_pre_header
            _
          $region26: #{reverse.0} parent=23 // loop_header
            %s54 = sphi 0, %s58
            %p55 = scmp.ge.s32.totalorder %s54, 1
            %s59 = sphi %s0, %s0
            %s60 = sphi %s2, %s2
          $region27: #{reverse.0} parent=23 // loop_header_branch
            %57 = sbr.rel (%p55) target = $region31
          $region28: #{reverse.0} parent=23 // loop_body
            %v61 = vld [vmem:[%s59] sm:$0xff]
            %62 = vst [vmem:[%s60] sm:$0xff] %v61
            %v63 = vld [vmem:[%s59 + $0x8] sm:$0xff]
            %64 = vst [vmem:[%s60 + $0x10] sm:$0xff] %v63
            %v65 = vld [vmem:[%s59 + $0x10] sm:$0xff]
            %66 = vst [vmem:[%s60 + $0x20] sm:$0xff] %v65
            %v67 = vld [vmem:[%s59 + $0x18] sm:$0xff]
            %68 = vst [vmem:[%s60 + $0x30] sm:$0xff] %v67
            %v69 = vld [vmem:[%s59 + $0x20] sm:$0xff]
            %70 = vst [vmem:[%s60 + $0x40] sm:$0xff] %v69
            %v71 = vld [vmem:[%s59 + $0x28] sm:$0xff]
            %72 = vst [vmem:[%s60 + $0x50] sm:$0xff] %v71
            %v73 = vld [vmem:[%s59 + $0x30] sm:$0xff]
            %74 = vst [vmem:[%s60 + $0x60] sm:$0xff] %v73
            %v75 = vld [vmem:[%s59 + $0x38] sm:$0xff]
            %76 = vst [vmem:[%s60 + $0x70] sm:$0xff] %v75
            %v77 = vld [vmem:[%s59 + $0x40] sm:$0xff]
            %78 = vst [vmem:[%s60 + $0x80] sm:$0xff] %v77
            %v79 = vld [vmem:[%s59 + $0x48] sm:$0xff]
            %80 = vst [vmem:[%s60 + $0x90] sm:$0xff] %v79
            %v81 = vld [vmem:[%s59 + $0x50] sm:$0xff]
            %82 = vst [vmem:[%s60 + $0xa0] sm:$0xff] %v81
            %v83 = vld [vmem:[%s59 + $0x58] sm:$0xff]
            %84 = vst [vmem:[%s60 + $0xb0] sm:$0xff] %v83
            %v85 = vld [vmem:[%s59 + $0x60] sm:$0xff]
            %86 = vst [vmem:[%s60 + $0xc0] sm:$0xff] %v85
            %v87 = vld [vmem:[%s59 + $0x68] sm:$0xff]
            %88 = vst [vmem:[%s60 + $0xd0] sm:$0xff] %v87
            %v89 = vld [vmem:[%s59 + $0x70] sm:$0xff]
            %90 = vst [vmem:[%s60 + $0xe0] sm:$0xff] %v89
            %v91 = vld [vmem:[%s59 + $0x78] sm:$0xff]
            %92 = vst [vmem:[%s60 + $0xf0] sm:$0xff] %v91
          $region29: #{reverse.0} parent=23 // loop_footer
            %s58 = sadd.s32 1, %s54
          $region30: #{reverse.0} parent=23 // loop_footer_branch
            %53 = sbr.rel target = $region26
          $region31: #{reverse.0} parent=23 // loop_exit
            _
        $region24: #{reverse.0} parent=8 // pred_fallthru
          _
        // Predicated region
        $region32: #{reverse.0} parent=8 // pred_check
          _
        $region33: #{reverse.0} parent=8 // pred_check_branch
          %94 = sbr.rel target = $region35
        $region34: #{reverse.0} parent=8 // pred_region
          _
        $region35: #{reverse.0} parent=8 // pred_fallthru
          _
      $region9: #{reverse.0} parent=4 // pred_fallthru
        _
      // Predicated region
      $region10: #{reverse.0} parent=4 // pred_check
        _
      $region11: #{reverse.0} parent=4 // pred_check_branch
        %8 = sbr.rel target = $region13
      $region12: #{reverse.0} parent=4 // pred_region
        %s10 = ssub.s32 256, 1
        loop: start=0, step=1, limit=1
        $region14: #{reverse.0} parent=12 // loop_pre_header
          _
        $region15: #{reverse.0} parent=12 // loop_header
          %s12 = sphi 0, %s16
          %p13 = scmp.ge.s32.totalorder %s12, 1
          %s17 = sphi %s0, %s0
          %s18 = sphi %s2, %s2
        $region16: #{reverse.0} parent=12 // loop_header_branch
          %15 = sbr.rel (%p13) target = $region20
        $region17: #{reverse.0} parent=12 // loop_body
          %v19 = vld [vmem:[%s17] sm:%s10]
          %20 = vst [vmem:[%s18] sm:%s10] %v19
          %v21 = vld [vmem:[%s17 + $0x8] sm:%s10]
          %22 = vst [vmem:[%s18 + $0x10] sm:%s10] %v21
          %v23 = vld [vmem:[%s17 + $0x10] sm:%s10]
          %24 = vst [vmem:[%s18 + $0x20] sm:%s10] %v23
          %v25 = vld [vmem:[%s17 + $0x18] sm:%s10]
          %26 = vst [vmem:[%s18 + $0x30] sm:%s10] %v25
          %v27 = vld [vmem:[%s17 + $0x20] sm:%s10]
          %28 = vst [vmem:[%s18 + $0x40] sm:%s10] %v27
          %v29 = vld [vmem:[%s17 + $0x28] sm:%s10]
          %30 = vst [vmem:[%s18 + $0x50] sm:%s10] %v29
          %v31 = vld [vmem:[%s17 + $0x30] sm:%s10]
          %32 = vst [vmem:[%s18 + $0x60] sm:%s10] %v31
          %v33 = vld [vmem:[%s17 + $0x38] sm:%s10]
          %34 = vst [vmem:[%s18 + $0x70] sm:%s10] %v33
          %v35 = vld [vmem:[%s17 + $0x40] sm:%s10]
          %36 = vst [vmem:[%s18 + $0x80] sm:%s10] %v35
          %v37 = vld [vmem:[%s17 + $0x48] sm:%s10]
          %38 = vst [vmem:[%s18 + $0x90] sm:%s10] %v37
          %v39 = vld [vmem:[%s17 + $0x50] sm:%s10]
          %40 = vst [vmem:[%s18 + $0xa0] sm:%s10] %v39
          %v41 = vld [vmem:[%s17 + $0x58] sm:%s10]
          %42 = vst [vmem:[%s18 + $0xb0] sm:%s10] %v41
          %v43 = vld [vmem:[%s17 + $0x60] sm:%s10]
          %44 = vst [vmem:[%s18 + $0xc0] sm:%s10] %v43
          %v45 = vld [vmem:[%s17 + $0x68] sm:%s10]
          %46 = vst [vmem:[%s18 + $0xd0] sm:%s10] %v45
          %v47 = vld [vmem:[%s17 + $0x70] sm:%s10]
          %48 = vst [vmem:[%s18 + $0xe0] sm:%s10] %v47
          %v49 = vld [vmem:[%s17 + $0x78] sm:%s10]
          %50 = vst [vmem:[%s18 + $0xf0] sm:%s10] %v49
        $region18: #{reverse.0} parent=12 // loop_footer
          %s16 = sadd.s32 1, %s12
        $region19: #{reverse.0} parent=12 // loop_footer_branch
          %11 = sbr.rel target = $region15
        $region20: #{reverse.0} parent=12 // loop_exit
          _
      $region13: #{reverse.0} parent=4 // pred_fallthru
        _
    $region5: #{reverse.0} parent=1 // pred_fallthru
      _
    %95 = vnop
    %s96 = scalar_lea.vmem [#allocation0], 7
    %v97 = vld [vmem:[%s96] ss:$-1 sm:$0xff]
    %v98 = vrot.slane %v97, 1
    %99 = vst [vmem:[#allocation1] sm:$0xff] %v98
    %s100 = scalar_lea.vmem [#allocation0], 8
    %s101 = scalar_lea.vmem %s100, 7 [#allocation0]
    %v102 = vld [vmem:[%s101] ss:$-1 sm:$0xff]
    %v103 = vrot.slane %v102, 1
    %v104 = vlaneseq
    %v105 = vshrl.u32 %v104, 7
    %vm106 = vcmp.lt.s32.totalorder %v105, 7
    %107 = vst.msk [vmem:[#allocation1] sm:$0xff] %vm106, %v103
    %s108 = scalar_lea.vmem [#allocation1], 8
    %s109 = scalar_lea.vmem [#allocation0], 16
    %s110 = scalar_lea.vmem %s109, 7 [#allocation0]
    %v111 = vld [vmem:[%s110] ss:$-1 sm:$0xff]
    %v112 = vrot.slane %v111, 1
    %113 = vst [vmem:[%s108] sm:$0xff] %v112
    %s114 = scalar_lea.vmem %s109, 8 [#allocation0]
    %s115 = scalar_lea.vmem %s114, 7 [#allocation0]
    %v116 = vld [vmem:[%s115] ss:$-1 sm:$0xff]
    %v117 = vrot.slane %v116, 1
    %v118 = vlaneseq
    %v119 = vshrl.u32 %v118, 7
    %vm120 = vcmp.lt.s32.totalorder %v119, 7
    %121 = vst.msk [vmem:[%s108] sm:$0xff] %vm120, %v117
    %s122 = scalar_lea.vmem [#allocation1], 16
    %s123 = scalar_lea.vmem [#allocation0], 32
    %s124 = scalar_lea.vmem %s123, 7 [#allocation0]
    %v125 = vld [vmem:[%s124] ss:$-1 sm:$0xff]
    %v126 = vrot.slane %v125, 1
    %127 = vst [vmem:[%s122] sm:$0xff] %v126
    %s128 = scalar_lea.vmem %s123, 8 [#allocation0]
    %s129 = scalar_lea.vmem %s128, 7 [#allocation0]
    %v130 = vld [vmem:[%s129] ss:$-1 sm:$0xff]
    %v131 = vrot.slane %v130, 1
    %v132 = vlaneseq
    %v133 = vshrl.u32 %v132, 7
    %vm134 = vcmp.lt.s32.totalorder %v133, 7
    %135 = vst.msk [vmem:[%s122] sm:$0xff] %vm134, %v131
    %s136 = scalar_lea.vmem [#allocation1], 24
    %s137 = scalar_lea.vmem [#allocation0], 48
    %s138 = scalar_lea.vmem %s137, 7 [#allocation0]
    %v139 = vld [vmem:[%s138] ss:$-1 sm:$0xff]
    %v140 = vrot.slane %v139, 1
    %141 = vst [vmem:[%s136] sm:$0xff] %v140
    %s142 = scalar_lea.vmem %s137, 8 [#allocation0]
    %s143 = scalar_lea.vmem %s142, 7 [#allocation0]
    %v144 = vld [vmem:[%s143] ss:$-1 sm:$0xff]
    %v145 = vrot.slane %v144, 1
    %v146 = vlaneseq
    %v147 = vshrl.u32 %v146, 7
    %vm148 = vcmp.lt.s32.totalorder %v147, 7
    %149 = vst.msk [vmem:[%s136] sm:$0xff] %vm148, %v145
    %s150 = scalar_lea.vmem [#allocation1], 32
    %s151 = scalar_lea.vmem [#allocation0], 64
    %s152 = scalar_lea.vmem %s151, 7 [#allocation0]
    %v153 = vld [vmem:[%s152] ss:$-1 sm:$0xff]
    %v154 = vrot.slane %v153, 1
    %155 = vst [vmem:[%s150] sm:$0xff] %v154
    %s156 = scalar_lea.vmem %s151, 8 [#allocation0]
    %s157 = scalar_lea.vmem %s156, 7 [#allocation0]
    %v158 = vld [vmem:[%s157] ss:$-1 sm:$0xff]
    %v159 = vrot.slane %v158, 1
    %v160 = vlaneseq
    %v161 = vshrl.u32 %v160, 7
    %vm162 = vcmp.lt.s32.totalorder %v161, 7
    %163 = vst.msk [vmem:[%s150] sm:$0xff] %vm162, %v159
    %s164 = scalar_lea.vmem [#allocation1], 40
    %s165 = scalar_lea.vmem [#allocation0], 80
    %s166 = scalar_lea.vmem %s165, 7 [#allocation0]
    %v167 = vld [vmem:[%s166] ss:$-1 sm:$0xff]
    %v168 = vrot.slane %v167, 1
    %169 = vst [vmem:[%s164] sm:$0xff] %v168
    %s170 = scalar_lea.vmem %s165, 8 [#allocation0]
    %s171 = scalar_lea.vmem %s170, 7 [#allocation0]
    %v172 = vld [vmem:[%s171] ss:$-1 sm:$0xff]
    %v173 = vrot.slane %v172, 1
    %v174 = vlaneseq
    %v175 = vshrl.u32 %v174, 7
    %vm176 = vcmp.lt.s32.totalorder %v175, 7
    %177 = vst.msk [vmem:[%s164] sm:$0xff] %vm176, %v173
    %s178 = scalar_lea.vmem [#allocation1], 48
    %s179 = scalar_lea.vmem [#allocation0], 96
    %s180 = scalar_lea.vmem %s179, 7 [#allocation0]
    %v181 = vld [vmem:[%s180] ss:$-1 sm:$0xff]
    %v182 = vrot.slane %v181, 1
    %183 = vst [vmem:[%s178] sm:$0xff] %v182
    %s184 = scalar_lea.vmem %s179, 8 [#allocation0]
    %s185 = scalar_lea.vmem %s184, 7 [#allocation0]
    %v186 = vld [vmem:[%s185] ss:$-1 sm:$0xff]
    %v187 = vrot.slane %v186, 1
    %v188 = vlaneseq
    %v189 = vshrl.u32 %v188, 7
    %vm190 = vcmp.lt.s32.totalorder %v189, 7
    %191 = vst.msk [vmem:[%s178] sm:$0xff] %vm190, %v187
    %s192 = scalar_lea.vmem [#allocation1], 56
    %s193 = scalar_lea.vmem [#allocation0], 112
    %s194 = scalar_lea.vmem %s193, 7 [#allocation0]
    %v195 = vld [vmem:[%s194] ss:$-1 sm:$0xff]
    %v196 = vrot.slane %v195, 1
    %197 = vst [vmem:[%s192] sm:$0xff] %v196
    %s198 = scalar_lea.vmem %s193, 8 [#allocation0]
    %s199 = scalar_lea.vmem %s198, 7 [#allocation0]
    %v200 = vld [vmem:[%s199] ss:$-1 sm:$0xff]
    %v201 = vrot.slane %v200, 1
    %v202 = vlaneseq
    %v203 = vshrl.u32 %v202, 7
    %vm204 = vcmp.lt.s32.totalorder %v203, 7
    %205 = vst.msk [vmem:[%s192] sm:$0xff] %vm204, %v201
    %s206 = scalar_lea.vmem [#allocation1], 64
    %s207 = scalar_lea.vmem [#allocation0], 128
    %s208 = scalar_lea.vmem %s207, 7 [#allocation0]
    %v209 = vld [vmem:[%s208] ss:$-1 sm:$0xff]
    %v210 = vrot.slane %v209, 1
    %211 = vst [vmem:[%s206] sm:$0xff] %v210
    %s212 = scalar_lea.vmem %s207, 8 [#allocation0]
    %s213 = scalar_lea.vmem %s212, 7 [#allocation0]
    %v214 = vld [vmem:[%s213] ss:$-1 sm:$0xff]
    %v215 = vrot.slane %v214, 1
    %v216 = vlaneseq
    %v217 = vshrl.u32 %v216, 7
    %vm218 = vcmp.lt.s32.totalorder %v217, 7
    %219 = vst.msk [vmem:[%s206] sm:$0xff] %vm218, %v215
    %s220 = scalar_lea.vmem [#allocation1], 72
    %s221 = scalar_lea.vmem [#allocation0], 144
    %s222 = scalar_lea.vmem %s221, 7 [#allocation0]
    %v223 = vld [vmem:[%s222] ss:$-1 sm:$0xff]
    %v224 = vrot.slane %v223, 1
    %225 = vst [vmem:[%s220] sm:$0xff] %v224
    %s226 = scalar_lea.vmem %s221, 8 [#allocation0]
    %s227 = scalar_lea.vmem %s226, 7 [#allocation0]
    %v228 = vld [vmem:[%s227] ss:$-1 sm:$0xff]
    %v229 = vrot.slane %v228, 1
    %v230 = vlaneseq
    %v231 = vshrl.u32 %v230, 7
    %vm232 = vcmp.lt.s32.totalorder %v231, 7
    %233 = vst.msk [vmem:[%s220] sm:$0xff] %vm232, %v229
    %s234 = scalar_lea.vmem [#allocation1], 80
    %s235 = scalar_lea.vmem [#allocation0], 160
    %s236 = scalar_lea.vmem %s235, 7 [#allocation0]
    %v237 = vld [vmem:[%s236] ss:$-1 sm:$0xff]
    %v238 = vrot.slane %v237, 1
    %239 = vst [vmem:[%s234] sm:$0xff] %v238
    %s240 = scalar_lea.vmem %s235, 8 [#allocation0]
    %s241 = scalar_lea.vmem %s240, 7 [#allocation0]
    %v242 = vld [vmem:[%s241] ss:$-1 sm:$0xff]
    %v243 = vrot.slane %v242, 1
    %v244 = vlaneseq
    %v245 = vshrl.u32 %v244, 7
    %vm246 = vcmp.lt.s32.totalorder %v245, 7
    %247 = vst.msk [vmem:[%s234] sm:$0xff] %vm246, %v243
    %s248 = scalar_lea.vmem [#allocation1], 88
    %s249 = scalar_lea.vmem [#allocation0], 176
    %s250 = scalar_lea.vmem %s249, 7 [#allocation0]
    %v251 = vld [vmem:[%s250] ss:$-1 sm:$0xff]
    %v252 = vrot.slane %v251, 1
    %253 = vst [vmem:[%s248] sm:$0xff] %v252
    %s254 = scalar_lea.vmem %s249, 8 [#allocation0]
    %s255 = scalar_lea.vmem %s254, 7 [#allocation0]
    %v256 = vld [vmem:[%s255] ss:$-1 sm:$0xff]
    %v257 = vrot.slane %v256, 1
    %v258 = vlaneseq
    %v259 = vshrl.u32 %v258, 7
    %vm260 = vcmp.lt.s32.totalorder %v259, 7
    %261 = vst.msk [vmem:[%s248] sm:$0xff] %vm260, %v257
    %s262 = scalar_lea.vmem [#allocation1], 96
    %s263 = scalar_lea.vmem [#allocation0], 192
    %s264 = scalar_lea.vmem %s263, 7 [#allocation0]
    %v265 = vld [vmem:[%s264] ss:$-1 sm:$0xff]
    %v266 = vrot.slane %v265, 1
    %267 = vst [vmem:[%s262] sm:$0xff] %v266
    %s268 = scalar_lea.vmem %s263, 8 [#allocation0]
    %s269 = scalar_lea.vmem %s268, 7 [#allocation0]
    %v270 = vld [vmem:[%s269] ss:$-1 sm:$0xff]
    %v271 = vrot.slane %v270, 1
    %v272 = vlaneseq
    %v273 = vshrl.u32 %v272, 7
    %vm274 = vcmp.lt.s32.totalorder %v273, 7
    %275 = vst.msk [vmem:[%s262] sm:$0xff] %vm274, %v271
    %s276 = scalar_lea.vmem [#allocation1], 104
    %s277 = scalar_lea.vmem [#allocation0], 208
    %s278 = scalar_lea.vmem %s277, 7 [#allocation0]
    %v279 = vld [vmem:[%s278] ss:$-1 sm:$0xff]
    %v280 = vrot.slane %v279, 1
    %281 = vst [vmem:[%s276] sm:$0xff] %v280
    %s282 = scalar_lea.vmem %s277, 8 [#allocation0]
    %s283 = scalar_lea.vmem %s282, 7 [#allocation0]
    %v284 = vld [vmem:[%s283] ss:$-1 sm:$0xff]
    %v285 = vrot.slane %v284, 1
    %v286 = vlaneseq
    %v287 = vshrl.u32 %v286, 7
    %vm288 = vcmp.lt.s32.totalorder %v287, 7
    %289 = vst.msk [vmem:[%s276] sm:$0xff] %vm288, %v285
    %s290 = scalar_lea.vmem [#allocation1], 112
    %s291 = scalar_lea.vmem [#allocation0], 224
    %s292 = scalar_lea.vmem %s291, 7 [#allocation0]
    %v293 = vld [vmem:[%s292] ss:$-1 sm:$0xff]
    %v294 = vrot.slane %v293, 1
    %295 = vst [vmem:[%s290] sm:$0xff] %v294
    %s296 = scalar_lea.vmem %s291, 8 [#allocation0]
    %s297 = scalar_lea.vmem %s296, 7 [#allocation0]
    %v298 = vld [vmem:[%s297] ss:$-1 sm:$0xff]
    %v299 = vrot.slane %v298, 1
    %v300 = vlaneseq
    %v301 = vshrl.u32 %v300, 7
    %vm302 = vcmp.lt.s32.totalorder %v301, 7
    %303 = vst.msk [vmem:[%s290] sm:$0xff] %vm302, %v299
    %s304 = scalar_lea.vmem [#allocation1], 120
    %s305 = scalar_lea.vmem [#allocation0], 240
    %s306 = scalar_lea.vmem %s305, 7 [#allocation0]
    %v307 = vld [vmem:[%s306] ss:$-1 sm:$0xff]
    %v308 = vrot.slane %v307, 1
    %309 = vst [vmem:[%s304] sm:$0xff] %v308
    %s310 = scalar_lea.vmem %s305, 8 [#allocation0]
    %s311 = scalar_lea.vmem %s310, 7 [#allocation0]
    %v312 = vld [vmem:[%s311] ss:$-1 sm:$0xff]
    %v313 = vrot.slane %v312, 1
    %v314 = vlaneseq
    %v315 = vshrl.u32 %v314, 7
    %vm316 = vcmp.lt.s32.totalorder %v315, 7
    %317 = vst.msk [vmem:[%s304] sm:$0xff] %vm316, %v313
    // Predicated region
    $region36: #{reverse.0} parent=1 // pred_check
      _
    $region37: #{reverse.0} parent=1 // pred_check_branch
      %319 = sbr.rel (0) target = $region39
    $region38: #{reverse.0} parent=1 // pred_region
      // Predicated region
      $region40: #{reverse.0} parent=38 // pred_check
        _
      $region41: #{reverse.0} parent=38 // pred_check_branch
        %321 = sbr.rel (0) target = $region43
      $region42: #{reverse.0} parent=38 // pred_region
        // Predicated region
        $region55: #{reverse.0} parent=42 // pred_check
          _
        $region56: #{reverse.0} parent=42 // pred_check_branch
          %367 = sbr.rel (0) target = $region58
        $region57: #{reverse.0} parent=42 // pred_region
          loop: start=0, step=1, limit=1
          $region59: #{reverse.0} parent=57 // loop_pre_header
            _
          $region60: #{reverse.0} parent=57 // loop_header
            %s369 = sphi 0, %s373
            %p370 = scmp.ge.s32.totalorder %s369, 1
            %s374 = sphi [#allocation1], [#allocation1]
            %s375 = sphi %s1, %s1
          $region61: #{reverse.0} parent=57 // loop_header_branch
            %372 = sbr.rel (%p370) target = $region65
          $region62: #{reverse.0} parent=57 // loop_body
            %v376 = vld [vmem:[%s374] sm:$0xff]
            %377 = vst [vmem:[%s375] sm:$0xff] %v376
            %v378 = vld [vmem:[%s374 + $0x8] sm:$0xff]
            %379 = vst [vmem:[%s375 + $0x8] sm:$0xff] %v378
            %v380 = vld [vmem:[%s374 + $0x10] sm:$0xff]
            %381 = vst [vmem:[%s375 + $0x10] sm:$0xff] %v380
            %v382 = vld [vmem:[%s374 + $0x18] sm:$0xff]
            %383 = vst [vmem:[%s375 + $0x18] sm:$0xff] %v382
            %v384 = vld [vmem:[%s374 + $0x20] sm:$0xff]
            %385 = vst [vmem:[%s375 + $0x20] sm:$0xff] %v384
            %v386 = vld [vmem:[%s374 + $0x28] sm:$0xff]
            %387 = vst [vmem:[%s375 + $0x28] sm:$0xff] %v386
            %v388 = vld [vmem:[%s374 + $0x30] sm:$0xff]
            %389 = vst [vmem:[%s375 + $0x30] sm:$0xff] %v388
            %v390 = vld [vmem:[%s374 + $0x38] sm:$0xff]
            %391 = vst [vmem:[%s375 + $0x38] sm:$0xff] %v390
            %v392 = vld [vmem:[%s374 + $0x40] sm:$0xff]
            %393 = vst [vmem:[%s375 + $0x40] sm:$0xff] %v392
            %v394 = vld [vmem:[%s374 + $0x48] sm:$0xff]
            %395 = vst [vmem:[%s375 + $0x48] sm:$0xff] %v394
            %v396 = vld [vmem:[%s374 + $0x50] sm:$0xff]
            %397 = vst [vmem:[%s375 + $0x50] sm:$0xff] %v396
            %v398 = vld [vmem:[%s374 + $0x58] sm:$0xff]
            %399 = vst [vmem:[%s375 + $0x58] sm:$0xff] %v398
            %v400 = vld [vmem:[%s374 + $0x60] sm:$0xff]
            %401 = vst [vmem:[%s375 + $0x60] sm:$0xff] %v400
            %v402 = vld [vmem:[%s374 + $0x68] sm:$0xff]
            %403 = vst [vmem:[%s375 + $0x68] sm:$0xff] %v402
            %v404 = vld [vmem:[%s374 + $0x70] sm:$0xff]
            %405 = vst [vmem:[%s375 + $0x70] sm:$0xff] %v404
            %v406 = vld [vmem:[%s374 + $0x78] sm:$0xff]
            %407 = vst [vmem:[%s375 + $0x78] sm:$0xff] %v406
          $region63: #{reverse.0} parent=57 // loop_footer
            %s373 = sadd.s32 1, %s369
          $region64: #{reverse.0} parent=57 // loop_footer_branch
            %368 = sbr.rel target = $region60
          $region65: #{reverse.0} parent=57 // loop_exit
            _
        $region58: #{reverse.0} parent=42 // pred_fallthru
          _
        // Predicated region
        $region66: #{reverse.0} parent=42 // pred_check
          _
        $region67: #{reverse.0} parent=42 // pred_check_branch
          %409 = sbr.rel target = $region69
        $region68: #{reverse.0} parent=42 // pred_region
          _
        $region69: #{reverse.0} parent=42 // pred_fallthru
          _
      $region43: #{reverse.0} parent=38 // pred_fallthru
        _
      // Predicated region
      $region44: #{reverse.0} parent=38 // pred_check
        _
      $region45: #{reverse.0} parent=38 // pred_check_branch
        %323 = sbr.rel target = $region47
      $region46: #{reverse.0} parent=38 // pred_region
        %s325 = ssub.s32 256, 1
        loop: start=0, step=1, limit=1
        $region48: #{reverse.0} parent=46 // loop_pre_header
          _
        $region49: #{reverse.0} parent=46 // loop_header
          %s327 = sphi 0, %s331
          %p328 = scmp.ge.s32.totalorder %s327, 1
          %s332 = sphi [#allocation1], [#allocation1]
          %s333 = sphi %s1, %s1
        $region50: #{reverse.0} parent=46 // loop_header_branch
          %330 = sbr.rel (%p328) target = $region54
        $region51: #{reverse.0} parent=46 // loop_body
          %v334 = vld [vmem:[%s332] sm:%s325]
          %335 = vst [vmem:[%s333] sm:%s325] %v334
          %v336 = vld [vmem:[%s332 + $0x8] sm:%s325]
          %337 = vst [vmem:[%s333 + $0x8] sm:%s325] %v336
          %v338 = vld [vmem:[%s332 + $0x10] sm:%s325]
          %339 = vst [vmem:[%s333 + $0x10] sm:%s325] %v338
          %v340 = vld [vmem:[%s332 + $0x18] sm:%s325]
          %341 = vst [vmem:[%s333 + $0x18] sm:%s325] %v340
          %v342 = vld [vmem:[%s332 + $0x20] sm:%s325]
          %343 = vst [vmem:[%s333 + $0x20] sm:%s325] %v342
          %v344 = vld [vmem:[%s332 + $0x28] sm:%s325]
          %345 = vst [vmem:[%s333 + $0x28] sm:%s325] %v344
          %v346 = vld [vmem:[%s332 + $0x30] sm:%s325]
          %347 = vst [vmem:[%s333 + $0x30] sm:%s325] %v346
          %v348 = vld [vmem:[%s332 + $0x38] sm:%s325]
          %349 = vst [vmem:[%s333 + $0x38] sm:%s325] %v348
          %v350 = vld [vmem:[%s332 + $0x40] sm:%s325]
          %351 = vst [vmem:[%s333 + $0x40] sm:%s325] %v350
          %v352 = vld [vmem:[%s332 + $0x48] sm:%s325]
          %353 = vst [vmem:[%s333 + $0x48] sm:%s325] %v352
          %v354 = vld [vmem:[%s332 + $0x50] sm:%s325]
          %355 = vst [vmem:[%s333 + $0x50] sm:%s325] %v354
          %v356 = vld [vmem:[%s332 + $0x58] sm:%s325]
          %357 = vst [vmem:[%s333 + $0x58] sm:%s325] %v356
          %v358 = vld [vmem:[%s332 + $0x60] sm:%s325]
          %359 = vst [vmem:[%s333 + $0x60] sm:%s325] %v358
          %v360 = vld [vmem:[%s332 + $0x68] sm:%s325]
          %361 = vst [vmem:[%s333 + $0x68] sm:%s325] %v360
          %v362 = vld [vmem:[%s332 + $0x70] sm:%s325]
          %363 = vst [vmem:[%s333 + $0x70] sm:%s325] %v362
          %v364 = vld [vmem:[%s332 + $0x78] sm:%s325]
          %365 = vst [vmem:[%s333 + $0x78] sm:%s325] %v364
        $region52: #{reverse.0} parent=46 // loop_footer
          %s331 = sadd.s32 1, %s327
        $region53: #{reverse.0} parent=46 // loop_footer_branch
          %326 = sbr.rel target = $region49
        $region54: #{reverse.0} parent=46 // loop_exit
          _
      $region47: #{reverse.0} parent=38 // pred_fallthru
        _
    $region39: #{reverse.0} parent=1 // pred_fallthru
      _
    %410 = vnop

// kernel: fourier_block2d_forward.2
$region0: #{fourier_block2d_forward.2}
  #allocation0 [shape = 'u32[]', space=smem, size = 0x4, offset = 0x4, fixed_abs, tag = 'smem constant byte address 0x4 - core index']
  #allocation1 [shape = 'u32[72,128]{1,0:T(1,128)}', space=vmem, size = 0x9000, scoped, tag = 'internal scratch']
  %s0 = inlined_call_operand.vmem [shape: f32[32,2,8], index: 0, kind: input, shape index: {}]
  %s1 = inlined_call_operand.vmem [shape: f32[32,2,8], index: 1, kind: input, shape index: {}]
  %s2 = inlined_call_operand.vmem [shape: f32[32,8,8], index: 2, kind: input, shape index: {}]
  %s3 = inlined_call_operand.vmem [shape: f32[32,8,8], index: 3, kind: input, shape index: {}]
  %s4 = inlined_call_operand.vmem [shape: f32[32,2,16], index: 4, kind: output, shape index: {}]
  %s5 = sld [smem:[#allocation0]]
  $region26: #{fourier_block2d_forward.2} parent=0
    _
  %s7 = ssub.s32 1, %s5
  %s8 = scalar_select 0, %s7, %s5
  // Predicated region
  $region2: #{fourier_block2d_forward.2} parent=0 // pred_check
    _
  $region3: #{fourier_block2d_forward.2} parent=0 // pred_check_branch
    %10 = sbr.rel (0) target = $region5
  $region4: #{fourier_block2d_forward.2} parent=0 // pred_region
    _
  $region5: #{fourier_block2d_forward.2} parent=0 // pred_fallthru
    _
  // Predicated region
  $region6: #{fourier_block2d_forward.2} parent=0 // pred_check
    _
  $region7: #{fourier_block2d_forward.2} parent=0 // pred_check_branch
    %12 = sbr.rel (0) target = $region9
  $region8: #{fourier_block2d_forward.2} parent=0 // pred_region
    _
  $region9: #{fourier_block2d_forward.2} parent=0 // pred_fallthru
    _
  // Predicated region
  $region10: #{fourier_block2d_forward.2} parent=0 // pred_check
    _
  $region11: #{fourier_block2d_forward.2} parent=0 // pred_check_branch
    %14 = sbr.rel (0) target = $region13
  $region12: #{fourier_block2d_forward.2} parent=0 // pred_region
    _
  $region13: #{fourier_block2d_forward.2} parent=0 // pred_fallthru
    _
  // Predicated region
  $region14: #{fourier_block2d_forward.2} parent=0 // pred_check
    _
  $region15: #{fourier_block2d_forward.2} parent=0 // pred_check_branch
    %16 = sbr.rel (0) target = $region17
  $region16: #{fourier_block2d_forward.2} parent=0 // pred_region
    _
  $region17: #{fourier_block2d_forward.2} parent=0 // pred_fallthru
    _
  %v17 = vld [vmem:[%s0] sm:$0x3]
  %v18 = vld [vmem:[%s0 + $0x2] sm:$0x3]
  %v19 = vld [vmem:[%s0 + $0x4] sm:$0x3]
  %v20 = vld [vmem:[%s0 + $0x6] sm:$0x3]
  %v21 = vld [vmem:[%s0 + $0x8] sm:$0x3]
  %v22 = vld [vmem:[%s0 + $0xa] sm:$0x3]
  %v23 = vld [vmem:[%s0 + $0xc] sm:$0x3]
  %v24 = vld [vmem:[%s0 + $0xe] sm:$0x3]
  %v25 = vld [vmem:[%s0 + $0x10] sm:$0x3]
  %v26 = vld [vmem:[%s0 + $0x12] sm:$0x3]
  %v27 = vld [vmem:[%s0 + $0x14] sm:$0x3]
  %v28 = vld [vmem:[%s0 + $0x16] sm:$0x3]
  %v29 = vld [vmem:[%s0 + $0x18] sm:$0x3]
  %v30 = vld [vmem:[%s0 + $0x1a] sm:$0x3]
  %v31 = vld [vmem:[%s0 + $0x1c] sm:$0x3]
  %v32 = vld [vmem:[%s0 + $0x1e] sm:$0x3]
  %v33 = vld [vmem:[%s0 + $0x20] sm:$0x3]
  %v34 = vld [vmem:[%s0 + $0x22] sm:$0x3]
  %v35 = vld [vmem:[%s0 + $0x24] sm:$0x3]
  %v36 = vld [vmem:[%s0 + $0x26] sm:$0x3]
  %v37 = vld [vmem:[%s0 + $0x28] sm:$0x3]
  %v38 = vld [vmem:[%s0 + $0x2a] sm:$0x3]
  %v39 = vld [vmem:[%s0 + $0x2c] sm:$0x3]
  %v40 = vld [vmem:[%s0 + $0x2e] sm:$0x3]
  %v41 = vld [vmem:[%s0 + $0x30] sm:$0x3]
  %v42 = vld [vmem:[%s0 + $0x32] sm:$0x3]
  %v43 = vld [vmem:[%s0 + $0x34] sm:$0x3]
  %v44 = vld [vmem:[%s0 + $0x36] sm:$0x3]
  %v45 = vld [vmem:[%s0 + $0x38] sm:$0x3]
  %v46 = vld [vmem:[%s0 + $0x3a] sm:$0x3]
  %v47 = vld [vmem:[%s0 + $0x3c] sm:$0x3]
  %v48 = vld [vmem:[%s0 + $0x3e] sm:$0x3]
  %v49 = vld [vmem:[%s1] sm:$0x3]
  %v50 = vld [vmem:[%s1 + $0x2] sm:$0x3]
  %v51 = vld [vmem:[%s1 + $0x4] sm:$0x3]
  %v52 = vld [vmem:[%s1 + $0x6] sm:$0x3]
  %v53 = vld [vmem:[%s1 + $0x8] sm:$0x3]
  %v54 = vld [vmem:[%s1 + $0xa] sm:$0x3]
  %v55 = vld [vmem:[%s1 + $0xc] sm:$0x3]
  %v56 = vld [vmem:[%s1 + $0xe] sm:$0x3]
  %v57 = vld [vmem:[%s1 + $0x10] sm:$0x3]
  %v58 = vld [vmem:[%s1 + $0x12] sm:$0x3]
  %v59 = vld [vmem:[%s1 + $0x14] sm:$0x3]
  %v60 = vld [vmem:[%s1 + $0x16] sm:$0x3]
  %v61 = vld [vmem:[%s1 + $0x18] sm:$0x3]
  %v62 = vld [vmem:[%s1 + $0x1a] sm:$0x3]
  %v63 = vld [vmem:[%s1 + $0x1c] sm:$0x3]
  %v64 = vld [vmem:[%s1 + $0x1e] sm:$0x3]
  %v65 = vld [vmem:[%s1 + $0x20] sm:$0x3]
  %v66 = vld [vmem:[%s1 + $0x22] sm:$0x3]
  %v67 = vld [vmem:[%s1 + $0x24] sm:$0x3]
  %v68 = vld [vmem:[%s1 + $0x26] sm:$0x3]
  %v69 = vld [vmem:[%s1 + $0x28] sm:$0x3]
  %v70 = vld [vmem:[%s1 + $0x2a] sm:$0x3]
  %v71 = vld [vmem:[%s1 + $0x2c] sm:$0x3]
  %v72 = vld [vmem:[%s1 + $0x2e] sm:$0x3]
  %v73 = vld [vmem:[%s1 + $0x30] sm:$0x3]
  %v74 = vld [vmem:[%s1 + $0x32] sm:$0x3]
  %v75 = vld [vmem:[%s1 + $0x34] sm:$0x3]
  %v76 = vld [vmem:[%s1 + $0x36] sm:$0x3]
  %v77 = vld [vmem:[%s1 + $0x38] sm:$0x3]
  %v78 = vld [vmem:[%s1 + $0x3a] sm:$0x3]
  %v79 = vld [vmem:[%s1 + $0x3c] sm:$0x3]
  %v80 = vld [vmem:[%s1 + $0x3e] sm:$0x3]
  %v81 = vld [vmem:[%s2] sm:$0xff]
  %v82 = vld [vmem:[%s2 + $0x8] sm:$0xff]
  %v83 = vld [vmem:[%s2 + $0x10] sm:$0xff]
  %v84 = vld [vmem:[%s2 + $0x18] sm:$0xff]
  %v85 = vld [vmem:[%s2 + $0x20] sm:$0xff]
  %v86 = vld [vmem:[%s2 + $0x28] sm:$0xff]
  %v87 = vld [vmem:[%s2 + $0x30] sm:$0xff]
  %v88 = vld [vmem:[%s2 + $0x38] sm:$0xff]
  %v89 = vld [vmem:[%s2 + $0x40] sm:$0xff]
  %v90 = vld [vmem:[%s2 + $0x48] sm:$0xff]
  %v91 = vld [vmem:[%s2 + $0x50] sm:$0xff]
  %v92 = vld [vmem:[%s2 + $0x58] sm:$0xff]
  %v93 = vld [vmem:[%s2 + $0x60] sm:$0xff]
  %v94 = vld [vmem:[%s2 + $0x68] sm:$0xff]
  %v95 = vld [vmem:[%s2 + $0x70] sm:$0xff]
  %v96 = vld [vmem:[%s2 + $0x78] sm:$0xff]
  %v97 = vld [vmem:[%s2 + $0x80] sm:$0xff]
  %v98 = vld [vmem:[%s2 + $0x88] sm:$0xff]
  %v99 = vld [vmem:[%s2 + $0x90] sm:$0xff]
  %v100 = vld [vmem:[%s2 + $0x98] sm:$0xff]
  %v101 = vld [vmem:[%s2 + $0xa0] sm:$0xff]
  %v102 = vld [vmem:[%s2 + $0xa8] sm:$0xff]
  %v103 = vld [vmem:[%s2 + $0xb0] sm:$0xff]
  %v104 = vld [vmem:[%s2 + $0xb8] sm:$0xff]
  %v105 = vld [vmem:[%s2 + $0xc0] sm:$0xff]
  %v106 = vld [vmem:[%s2 + $0xc8] sm:$0xff]
  %v107 = vld [vmem:[%s2 + $0xd0] sm:$0xff]
  %v108 = vld [vmem:[%s2 + $0xd8] sm:$0xff]
  %v109 = vld [vmem:[%s2 + $0xe0] sm:$0xff]
  %v110 = vld [vmem:[%s2 + $0xe8] sm:$0xff]
  %v111 = vld [vmem:[%s2 + $0xf0] sm:$0xff]
  %v112 = vld [vmem:[%s2 + $0xf8] sm:$0xff]
  %v113 = vld [vmem:[%s3] sm:$0xff]
  %v114 = vld [vmem:[%s3 + $0x8] sm:$0xff]
  %v115 = vld [vmem:[%s3 + $0x10] sm:$0xff]
  %v116 = vld [vmem:[%s3 + $0x18] sm:$0xff]
  %v117 = vld [vmem:[%s3 + $0x20] sm:$0xff]
  %v118 = vld [vmem:[%s3 + $0x28] sm:$0xff]
  %v119 = vld [vmem:[%s3 + $0x30] sm:$0xff]
  %v120 = vld [vmem:[%s3 + $0x38] sm:$0xff]
  %v121 = vld [vmem:[%s3 + $0x40] sm:$0xff]
  %v122 = vld [vmem:[%s3 + $0x48] sm:$0xff]
  %v123 = vld [vmem:[%s3 + $0x50] sm:$0xff]
  %v124 = vld [vmem:[%s3 + $0x58] sm:$0xff]
  %v125 = vld [vmem:[%s3 + $0x60] sm:$0xff]
  %v126 = vld [vmem:[%s3 + $0x68] sm:$0xff]
  %v127 = vld [vmem:[%s3 + $0x70] sm:$0xff]
  %v128 = vld [vmem:[%s3 + $0x78] sm:$0xff]
  %v129 = vld [vmem:[%s3 + $0x80] sm:$0xff]
  %v130 = vld [vmem:[%s3 + $0x88] sm:$0xff]
  %v131 = vld [vmem:[%s3 + $0x90] sm:$0xff]
  %v132 = vld [vmem:[%s3 + $0x98] sm:$0xff]
  %v133 = vld [vmem:[%s3 + $0xa0] sm:$0xff]
  %v134 = vld [vmem:[%s3 + $0xa8] sm:$0xff]
  %v135 = vld [vmem:[%s3 + $0xb0] sm:$0xff]
  %v136 = vld [vmem:[%s3 + $0xb8] sm:$0xff]
  %v137 = vld [vmem:[%s3 + $0xc0] sm:$0xff]
  %v138 = vld [vmem:[%s3 + $0xc8] sm:$0xff]
  %v139 = vld [vmem:[%s3 + $0xd0] sm:$0xff]
  %v140 = vld [vmem:[%s3 + $0xd8] sm:$0xff]
  %v141 = vld [vmem:[%s3 + $0xe0] sm:$0xff]
  %v142 = vld [vmem:[%s3 + $0xe8] sm:$0xff]
  %v143 = vld [vmem:[%s3 + $0xf0] sm:$0xff]
  %v144 = vld [vmem:[%s3 + $0xf8] sm:$0xff]
  %vm145 = vcmask 64512
  %v147 = vsel %vm145, %v17, 0
  %149 = vmatpush.msra.mxu0 0.0
  %150 = vmatpush.msra.mxu0 0.0
  %151 = vmatpush.msra.mxu0 0.0
  %152 = vmatpush.msra.mxu0 0.0
  %153 = vmatpush.msra.mxu0 0.0
  %154 = vmatpush.msra.mxu0 0.0
  %155 = vmatpush.msra.mxu0 0.0
  %156 = vmatpush.msra.mxu0 0.0
  %157 = vmatpush.msra.mxu0 0.0
  %158 = vmatpush.msra.mxu0 0.0
  %159 = vmatpush.msra.mxu0 0.0
  %160 = vmatpush.msra.mxu0 0.0
  %161 = vmatpush.msra.mxu0 0.0
  %162 = vmatpush.msra.mxu0 0.0
  %163 = vmatpush.msra.mxu0 0.0
  %164 = vmatpush.msra.mxu0 %v81
  %165 = vmatmul.f32.gmra.mxu0 %v147
  %v166 = vpop.f32.mrf.mxu0
  %v167 = vadd.f32 0.0, %v166
  %168 = vdwg.mxu0
  %v170 = vsel %vm145, %v18, 0
  %172 = vmatpush.msra.mxu0 0.0
  %173 = vmatpush.msra.mxu0 0.0
  %174 = vmatpush.msra.mxu0 0.0
  %175 = vmatpush.msra.mxu0 0.0
  %176 = vmatpush.msra.mxu0 0.0
  %177 = vmatpush.msra.mxu0 0.0
  %178 = vmatpush.msra.mxu0 0.0
  %179 = vmatpush.msra.mxu0 0.0
  %180 = vmatpush.msra.mxu0 0.0
  %181 = vmatpush.msra.mxu0 0.0
  %182 = vmatpush.msra.mxu0 0.0
  %183 = vmatpush.msra.mxu0 0.0
  %184 = vmatpush.msra.mxu0 0.0
  %185 = vmatpush.msra.mxu0 0.0
  %186 = vmatpush.msra.mxu0 0.0
  %187 = vmatpush.msra.mxu0 %v82
  %188 = vmatmul.f32.gmra.mxu0 %v170
  %v189 = vpop.f32.mrf.mxu0
  %v190 = vadd.f32 0.0, %v189
  %191 = vdwg.mxu0
  %v193 = vsel %vm145, %v19, 0
  %195 = vmatpush.msra.mxu0 0.0
  %196 = vmatpush.msra.mxu0 0.0
  %197 = vmatpush.msra.mxu0 0.0
  %198 = vmatpush.msra.mxu0 0.0
  %199 = vmatpush.msra.mxu0 0.0
  %200 = vmatpush.msra.mxu0 0.0
  %201 = vmatpush.msra.mxu0 0.0
  %202 = vmatpush.msra.mxu0 0.0
  %203 = vmatpush.msra.mxu0 0.0
  %204 = vmatpush.msra.mxu0 0.0
  %205 = vmatpush.msra.mxu0 0.0
  %206 = vmatpush.msra.mxu0 0.0
  %207 = vmatpush.msra.mxu0 0.0
  %208 = vmatpush.msra.mxu0 0.0
  %209 = vmatpush.msra.mxu0 0.0
  %210 = vmatpush.msra.mxu0 %v83
  %211 = vmatmul.f32.gmra.mxu0 %v193
  %v212 = vpop.f32.mrf.mxu0
  %v213 = vadd.f32 0.0, %v212
  %214 = vdwg.mxu0
  %v216 = vsel %vm145, %v20, 0
  %218 = vmatpush.msra.mxu0 0.0
  %219 = vmatpush.msra.mxu0 0.0
  %220 = vmatpush.msra.mxu0 0.0
  %221 = vmatpush.msra.mxu0 0.0
  %222 = vmatpush.msra.mxu0 0.0
  %223 = vmatpush.msra.mxu0 0.0
  %224 = vmatpush.msra.mxu0 0.0
  %225 = vmatpush.msra.mxu0 0.0
  %226 = vmatpush.msra.mxu0 0.0
  %227 = vmatpush.msra.mxu0 0.0
  %228 = vmatpush.msra.mxu0 0.0
  %229 = vmatpush.msra.mxu0 0.0
  %230 = vmatpush.msra.mxu0 0.0
  %231 = vmatpush.msra.mxu0 0.0
  %232 = vmatpush.msra.mxu0 0.0
  %233 = vmatpush.msra.mxu0 %v84
  %234 = vmatmul.f32.gmra.mxu0 %v216
  %v235 = vpop.f32.mrf.mxu0
  %v236 = vadd.f32 0.0, %v235
  %237 = vdwg.mxu0
  %v239 = vsel %vm145, %v21, 0
  %241 = vmatpush.msra.mxu0 0.0
  %242 = vmatpush.msra.mxu0 0.0
  %243 = vmatpush.msra.mxu0 0.0
  %244 = vmatpush.msra.mxu0 0.0
  %245 = vmatpush.msra.mxu0 0.0
  %246 = vmatpush.msra.mxu0 0.0
  %247 = vmatpush.msra.mxu0 0.0
  %248 = vmatpush.msra.mxu0 0.0
  %249 = vmatpush.msra.mxu0 0.0
  %250 = vmatpush.msra.mxu0 0.0
  %251 = vmatpush.msra.mxu0 0.0
  %252 = vmatpush.msra.mxu0 0.0
  %253 = vmatpush.msra.mxu0 0.0
  %254 = vmatpush.msra.mxu0 0.0
  %255 = vmatpush.msra.mxu0 0.0
  %256 = vmatpush.msra.mxu0 %v85
  %257 = vmatmul.f32.gmra.mxu0 %v239
  %v258 = vpop.f32.mrf.mxu0
  %v259 = vadd.f32 0.0, %v258
  %260 = vdwg.mxu0
  %v262 = vsel %vm145, %v22, 0
  %264 = vmatpush.msra.mxu0 0.0
  %265 = vmatpush.msra.mxu0 0.0
  %266 = vmatpush.msra.mxu0 0.0
  %267 = vmatpush.msra.mxu0 0.0
  %268 = vmatpush.msra.mxu0 0.0
  %269 = vmatpush.msra.mxu0 0.0
  %270 = vmatpush.msra.mxu0 0.0
  %271 = vmatpush.msra.mxu0 0.0
  %272 = vmatpush.msra.mxu0 0.0
  %273 = vmatpush.msra.mxu0 0.0
  %274 = vmatpush.msra.mxu0 0.0
  %275 = vmatpush.msra.mxu0 0.0
  %276 = vmatpush.msra.mxu0 0.0
  %277 = vmatpush.msra.mxu0 0.0
  %278 = vmatpush.msra.mxu0 0.0
  %279 = vmatpush.msra.mxu0 %v86
  %280 = vmatmul.f32.gmra.mxu0 %v262
  %v281 = vpop.f32.mrf.mxu0
  %v282 = vadd.f32 0.0, %v281
  %283 = vdwg.mxu0
  %v285 = vsel %vm145, %v23, 0
  %287 = vmatpush.msra.mxu0 0.0
  %288 = vmatpush.msra.mxu0 0.0
  %289 = vmatpush.msra.mxu0 0.0
  %290 = vmatpush.msra.mxu0 0.0
  %291 = vmatpush.msra.mxu0 0.0
  %292 = vmatpush.msra.mxu0 0.0
  %293 = vmatpush.msra.mxu0 0.0
  %294 = vmatpush.msra.mxu0 0.0
  %295 = vmatpush.msra.mxu0 0.0
  %296 = vmatpush.msra.mxu0 0.0
  %297 = vmatpush.msra.mxu0 0.0
  %298 = vmatpush.msra.mxu0 0.0
  %299 = vmatpush.msra.mxu0 0.0
  %300 = vmatpush.msra.mxu0 0.0
  %301 = vmatpush.msra.mxu0 0.0
  %302 = vmatpush.msra.mxu0 %v87
  %303 = vmatmul.f32.gmra.mxu0 %v285
  %v304 = vpop.f32.mrf.mxu0
  %v305 = vadd.f32 0.0, %v304
  %306 = vdwg.mxu0
  %v308 = vsel %vm145, %v24, 0
  %310 = vmatpush.msra.mxu0 0.0
  %311 = vmatpush.msra.mxu0 0.0
  %312 = vmatpush.msra.mxu0 0.0
  %313 = vmatpush.msra.mxu0 0.0
  %314 = vmatpush.msra.mxu0 0.0
  %315 = vmatpush.msra.mxu0 0.0
  %316 = vmatpush.msra.mxu0 0.0
  %317 = vmatpush.msra.mxu0 0.0
  %318 = vmatpush.msra.mxu0 0.0
  %319 = vmatpush.msra.mxu0 0.0
  %320 = vmatpush.msra.mxu0 0.0
  %321 = vmatpush.msra.mxu0 0.0
  %322 = vmatpush.msra.mxu0 0.0
  %323 = vmatpush.msra.mxu0 0.0
  %324 = vmatpush.msra.mxu0 0.0
  %325 = vmatpush.msra.mxu0 %v88
  %326 = vmatmul.f32.gmra.mxu0 %v308
  %v327 = vpop.f32.mrf.mxu0
  %v328 = vadd.f32 0.0, %v327
  %329 = vdwg.mxu0
  %v331 = vsel %vm145, %v25, 0
  %333 = vmatpush.msra.mxu0 0.0
  %334 = vmatpush.msra.mxu0 0.0
  %335 = vmatpush.msra.mxu0 0.0
  %336 = vmatpush.msra.mxu0 0.0
  %337 = vmatpush.msra.mxu0 0.0
  %338 = vmatpush.msra.mxu0 0.0
  %339 = vmatpush.msra.mxu0 0.0
  %340 = vmatpush.msra.mxu0 0.0
  %341 = vmatpush.msra.mxu0 0.0
  %342 = vmatpush.msra.mxu0 0.0
  %343 = vmatpush.msra.mxu0 0.0
  %344 = vmatpush.msra.mxu0 0.0
  %345 = vmatpush.msra.mxu0 0.0
  %346 = vmatpush.msra.mxu0 0.0
  %347 = vmatpush.msra.mxu0 0.0
  %348 = vmatpush.msra.mxu0 %v89
  %349 = vmatmul.f32.gmra.mxu0 %v331
  %v350 = vpop.f32.mrf.mxu0
  %v351 = vadd.f32 0.0, %v350
  %352 = vdwg.mxu0
  %v354 = vsel %vm145, %v26, 0
  %356 = vmatpush.msra.mxu0 0.0
  %357 = vmatpush.msra.mxu0 0.0
  %358 = vmatpush.msra.mxu0 0.0
  %359 = vmatpush.msra.mxu0 0.0
  %360 = vmatpush.msra.mxu0 0.0
  %361 = vmatpush.msra.mxu0 0.0
  %362 = vmatpush.msra.mxu0 0.0
  %363 = vmatpush.msra.mxu0 0.0
  %364 = vmatpush.msra.mxu0 0.0
  %365 = vmatpush.msra.mxu0 0.0
  %366 = vmatpush.msra.mxu0 0.0
  %367 = vmatpush.msra.mxu0 0.0
  %368 = vmatpush.msra.mxu0 0.0
  %369 = vmatpush.msra.mxu0 0.0
  %370 = vmatpush.msra.mxu0 0.0
  %371 = vmatpush.msra.mxu0 %v90
  %372 = vmatmul.f32.gmra.mxu0 %v354
  %v373 = vpop.f32.mrf.mxu0
  %v374 = vadd.f32 0.0, %v373
  %375 = vdwg.mxu0
  %v377 = vsel %vm145, %v27, 0
  %379 = vmatpush.msra.mxu0 0.0
  %380 = vmatpush.msra.mxu0 0.0
  %381 = vmatpush.msra.mxu0 0.0
  %382 = vmatpush.msra.mxu0 0.0
  %383 = vmatpush.msra.mxu0 0.0
  %384 = vmatpush.msra.mxu0 0.0
  %385 = vmatpush.msra.mxu0 0.0
  %386 = vmatpush.msra.mxu0 0.0
  %387 = vmatpush.msra.mxu0 0.0
  %388 = vmatpush.msra.mxu0 0.0
  %389 = vmatpush.msra.mxu0 0.0
  %390 = vmatpush.msra.mxu0 0.0
  %391 = vmatpush.msra.mxu0 0.0
  %392 = vmatpush.msra.mxu0 0.0
  %393 = vmatpush.msra.mxu0 0.0
  %394 = vmatpush.msra.mxu0 %v91
  %395 = vmatmul.f32.gmra.mxu0 %v377
  %v396 = vpop.f32.mrf.mxu0
  %v397 = vadd.f32 0.0, %v396
  %398 = vdwg.mxu0
  %v400 = vsel %vm145, %v28, 0
  %402 = vmatpush.msra.mxu0 0.0
  %403 = vmatpush.msra.mxu0 0.0
  %404 = vmatpush.msra.mxu0 0.0
  %405 = vmatpush.msra.mxu0 0.0
  %406 = vmatpush.msra.mxu0 0.0
  %407 = vmatpush.msra.mxu0 0.0
  %408 = vmatpush.msra.mxu0 0.0
  %409 = vmatpush.msra.mxu0 0.0
  %410 = vmatpush.msra.mxu0 0.0
  %411 = vmatpush.msra.mxu0 0.0
  %412 = vmatpush.msra.mxu0 0.0
  %413 = vmatpush.msra.mxu0 0.0
  %414 = vmatpush.msra.mxu0 0.0
  %415 = vmatpush.msra.mxu0 0.0
  %416 = vmatpush.msra.mxu0 0.0
  %417 = vmatpush.msra.mxu0 %v92
  %418 = vmatmul.f32.gmra.mxu0 %v400
  %v419 = vpop.f32.mrf.mxu0
  %v420 = vadd.f32 0.0, %v419
  %421 = vdwg.mxu0
  %v423 = vsel %vm145, %v29, 0
  %425 = vmatpush.msra.mxu0 0.0
  %426 = vmatpush.msra.mxu0 0.0
  %427 = vmatpush.msra.mxu0 0.0
  %428 = vmatpush.msra.mxu0 0.0
  %429 = vmatpush.msra.mxu0 0.0
  %430 = vmatpush.msra.mxu0 0.0
  %431 = vmatpush.msra.mxu0 0.0
  %432 = vmatpush.msra.mxu0 0.0
  %433 = vmatpush.msra.mxu0 0.0
  %434 = vmatpush.msra.mxu0 0.0
  %435 = vmatpush.msra.mxu0 0.0
  %436 = vmatpush.msra.mxu0 0.0
  %437 = vmatpush.msra.mxu0 0.0
  %438 = vmatpush.msra.mxu0 0.0
  %439 = vmatpush.msra.mxu0 0.0
  %440 = vmatpush.msra.mxu0 %v93
  %441 = vmatmul.f32.gmra.mxu0 %v423
  %v442 = vpop.f32.mrf.mxu0
  %v443 = vadd.f32 0.0, %v442
  %444 = vdwg.mxu0
  %v446 = vsel %vm145, %v30, 0
  %448 = vmatpush.msra.mxu0 0.0
  %449 = vmatpush.msra.mxu0 0.0
  %450 = vmatpush.msra.mxu0 0.0
  %451 = vmatpush.msra.mxu0 0.0
  %452 = vmatpush.msra.mxu0 0.0
  %453 = vmatpush.msra.mxu0 0.0
  %454 = vmatpush.msra.mxu0 0.0
  %455 = vmatpush.msra.mxu0 0.0
  %456 = vmatpush.msra.mxu0 0.0
  %457 = vmatpush.msra.mxu0 0.0
  %458 = vmatpush.msra.mxu0 0.0
  %459 = vmatpush.msra.mxu0 0.0
  %460 = vmatpush.msra.mxu0 0.0
  %461 = vmatpush.msra.mxu0 0.0
  %462 = vmatpush.msra.mxu0 0.0
  %463 = vmatpush.msra.mxu0 %v94
  %464 = vmatmul.f32.gmra.mxu0 %v446
  %v465 = vpop.f32.mrf.mxu0
  %v466 = vadd.f32 0.0, %v465
  %467 = vdwg.mxu0
  %v469 = vsel %vm145, %v31, 0
  %471 = vmatpush.msra.mxu0 0.0
  %472 = vmatpush.msra.mxu0 0.0
  %473 = vmatpush.msra.mxu0 0.0
  %474 = vmatpush.msra.mxu0 0.0
  %475 = vmatpush.msra.mxu0 0.0
  %476 = vmatpush.msra.mxu0 0.0
  %477 = vmatpush.msra.mxu0 0.0
  %478 = vmatpush.msra.mxu0 0.0
  %479 = vmatpush.msra.mxu0 0.0
  %480 = vmatpush.msra.mxu0 0.0
  %481 = vmatpush.msra.mxu0 0.0
  %482 = vmatpush.msra.mxu0 0.0
  %483 = vmatpush.msra.mxu0 0.0
  %484 = vmatpush.msra.mxu0 0.0
  %485 = vmatpush.msra.mxu0 0.0
  %486 = vmatpush.msra.mxu0 %v95
  %487 = vmatmul.f32.gmra.mxu0 %v469
  %v488 = vpop.f32.mrf.mxu0
  %v489 = vadd.f32 0.0, %v488
  %490 = vdwg.mxu0
  %v492 = vsel %vm145, %v32, 0
  %494 = vmatpush.msra.mxu0 0.0
  %495 = vmatpush.msra.mxu0 0.0
  %496 = vmatpush.msra.mxu0 0.0
  %497 = vmatpush.msra.mxu0 0.0
  %498 = vmatpush.msra.mxu0 0.0
  %499 = vmatpush.msra.mxu0 0.0
  %500 = vmatpush.msra.mxu0 0.0
  %501 = vmatpush.msra.mxu0 0.0
  %502 = vmatpush.msra.mxu0 0.0
  %503 = vmatpush.msra.mxu0 0.0
  %504 = vmatpush.msra.mxu0 0.0
  %505 = vmatpush.msra.mxu0 0.0
  %506 = vmatpush.msra.mxu0 0.0
  %507 = vmatpush.msra.mxu0 0.0
  %508 = vmatpush.msra.mxu0 0.0
  %509 = vmatpush.msra.mxu0 %v96
  %510 = vmatmul.f32.gmra.mxu0 %v492
  %v511 = vpop.f32.mrf.mxu0
  %v512 = vadd.f32 0.0, %v511
  %513 = vdwg.mxu0
  %v515 = vsel %vm145, %v33, 0
  %517 = vmatpush.msra.mxu0 0.0
  %518 = vmatpush.msra.mxu0 0.0
  %519 = vmatpush.msra.mxu0 0.0
  %520 = vmatpush.msra.mxu0 0.0
  %521 = vmatpush.msra.mxu0 0.0
  %522 = vmatpush.msra.mxu0 0.0
  %523 = vmatpush.msra.mxu0 0.0
  %524 = vmatpush.msra.mxu0 0.0
  %525 = vmatpush.msra.mxu0 0.0
  %526 = vmatpush.msra.mxu0 0.0
  %527 = vmatpush.msra.mxu0 0.0
  %528 = vmatpush.msra.mxu0 0.0
  %529 = vmatpush.msra.mxu0 0.0
  %530 = vmatpush.msra.mxu0 0.0
  %531 = vmatpush.msra.mxu0 0.0
  %532 = vmatpush.msra.mxu0 %v97
  %533 = vmatmul.f32.gmra.mxu0 %v515
  %v534 = vpop.f32.mrf.mxu0
  %v535 = vadd.f32 0.0, %v534
  %536 = vdwg.mxu0
  %v538 = vsel %vm145, %v34, 0
  %540 = vmatpush.msra.mxu0 0.0
  %541 = vmatpush.msra.mxu0 0.0
  %542 = vmatpush.msra.mxu0 0.0
  %543 = vmatpush.msra.mxu0 0.0
  %544 = vmatpush.msra.mxu0 0.0
  %545 = vmatpush.msra.mxu0 0.0
  %546 = vmatpush.msra.mxu0 0.0
  %547 = vmatpush.msra.mxu0 0.0
  %548 = vmatpush.msra.mxu0 0.0
  %549 = vmatpush.msra.mxu0 0.0
  %550 = vmatpush.msra.mxu0 0.0
  %551 = vmatpush.msra.mxu0 0.0
  %552 = vmatpush.msra.mxu0 0.0
  %553 = vmatpush.msra.mxu0 0.0
  %554 = vmatpush.msra.mxu0 0.0
  %555 = vmatpush.msra.mxu0 %v98
  %556 = vmatmul.f32.gmra.mxu0 %v538
  %v557 = vpop.f32.mrf.mxu0
  %v558 = vadd.f32 0.0, %v557
  %559 = vdwg.mxu0
  %v561 = vsel %vm145, %v35, 0
  %563 = vmatpush.msra.mxu0 0.0
  %564 = vmatpush.msra.mxu0 0.0
  %565 = vmatpush.msra.mxu0 0.0
  %566 = vmatpush.msra.mxu0 0.0
  %567 = vmatpush.msra.mxu0 0.0
  %568 = vmatpush.msra.mxu0 0.0
  %569 = vmatpush.msra.mxu0 0.0
  %570 = vmatpush.msra.mxu0 0.0
  %571 = vmatpush.msra.mxu0 0.0
  %572 = vmatpush.msra.mxu0 0.0
  %573 = vmatpush.msra.mxu0 0.0
  %574 = vmatpush.msra.mxu0 0.0
  %575 = vmatpush.msra.mxu0 0.0
  %576 = vmatpush.msra.mxu0 0.0
  %577 = vmatpush.msra.mxu0 0.0
  %578 = vmatpush.msra.mxu0 %v99
  %579 = vmatmul.f32.gmra.mxu0 %v561
  %v580 = vpop.f32.mrf.mxu0
  %v581 = vadd.f32 0.0, %v580
  %582 = vdwg.mxu0
  %v584 = vsel %vm145, %v36, 0
  %586 = vmatpush.msra.mxu0 0.0
  %587 = vmatpush.msra.mxu0 0.0
  %588 = vmatpush.msra.mxu0 0.0
  %589 = vmatpush.msra.mxu0 0.0
  %590 = vmatpush.msra.mxu0 0.0
  %591 = vmatpush.msra.mxu0 0.0
  %592 = vmatpush.msra.mxu0 0.0
  %593 = vmatpush.msra.mxu0 0.0
  %594 = vmatpush.msra.mxu0 0.0
  %595 = vmatpush.msra.mxu0 0.0
  %596 = vmatpush.msra.mxu0 0.0
  %597 = vmatpush.msra.mxu0 0.0
  %598 = vmatpush.msra.mxu0 0.0
  %599 = vmatpush.msra.mxu0 0.0
  %600 = vmatpush.msra.mxu0 0.0
  %601 = vmatpush.msra.mxu0 %v100
  %602 = vmatmul.f32.gmra.mxu0 %v584
  %v603 = vpop.f32.mrf.mxu0
  %v604 = vadd.f32 0.0, %v603
  %605 = vdwg.mxu0
  %v607 = vsel %vm145, %v37, 0
  %609 = vmatpush.msra.mxu0 0.0
  %610 = vmatpush.msra.mxu0 0.0
  %611 = vmatpush.msra.mxu0 0.0
  %612 = vmatpush.msra.mxu0 0.0
  %613 = vmatpush.msra.mxu0 0.0
  %614 = vmatpush.msra.mxu0 0.0
  %615 = vmatpush.msra.mxu0 0.0
  %616 = vmatpush.msra.mxu0 0.0
  %617 = vmatpush.msra.mxu0 0.0
  %618 = vmatpush.msra.mxu0 0.0
  %619 = vmatpush.msra.mxu0 0.0
  %620 = vmatpush.msra.mxu0 0.0
  %621 = vmatpush.msra.mxu0 0.0
  %622 = vmatpush.msra.mxu0 0.0
  %623 = vmatpush.msra.mxu0 0.0
  %624 = vmatpush.msra.mxu0 %v101
  %625 = vmatmul.f32.gmra.mxu0 %v607
  %v626 = vpop.f32.mrf.mxu0
  %v627 = vadd.f32 0.0, %v626
  %628 = vdwg.mxu0
  %v630 = vsel %vm145, %v38, 0
  %632 = vmatpush.msra.mxu0 0.0
  %633 = vmatpush.msra.mxu0 0.0
  %634 = vmatpush.msra.mxu0 0.0
  %635 = vmatpush.msra.mxu0 0.0
  %636 = vmatpush.msra.mxu0 0.0
  %637 = vmatpush.msra.mxu0 0.0
  %638 = vmatpush.msra.mxu0 0.0
  %639 = vmatpush.msra.mxu0 0.0
  %640 = vmatpush.msra.mxu0 0.0
  %641 = vmatpush.msra.mxu0 0.0
  %642 = vmatpush.msra.mxu0 0.0
  %643 = vmatpush.msra.mxu0 0.0
  %644 = vmatpush.msra.mxu0 0.0
  %645 = vmatpush.msra.mxu0 0.0
  %646 = vmatpush.msra.mxu0 0.0
  %647 = vmatpush.msra.mxu0 %v102
  %648 = vmatmul.f32.gmra.mxu0 %v630
  %v649 = vpop.f32.mrf.mxu0
  %v650 = vadd.f32 0.0, %v649
  %651 = vdwg.mxu0
  %v653 = vsel %vm145, %v39, 0
  %655 = vmatpush.msra.mxu0 0.0
  %656 = vmatpush.msra.mxu0 0.0
  %657 = vmatpush.msra.mxu0 0.0
  %658 = vmatpush.msra.mxu0 0.0
  %659 = vmatpush.msra.mxu0 0.0
  %660 = vmatpush.msra.mxu0 0.0
  %661 = vmatpush.msra.mxu0 0.0
  %662 = vmatpush.msra.mxu0 0.0
  %663 = vmatpush.msra.mxu0 0.0
  %664 = vmatpush.msra.mxu0 0.0
  %665 = vmatpush.msra.mxu0 0.0
  %666 = vmatpush.msra.mxu0 0.0
  %667 = vmatpush.msra.mxu0 0.0
  %668 = vmatpush.msra.mxu0 0.0
  %669 = vmatpush.msra.mxu0 0.0
  %670 = vmatpush.msra.mxu0 %v103
  %671 = vmatmul.f32.gmra.mxu0 %v653
  %v672 = vpop.f32.mrf.mxu0
  %v673 = vadd.f32 0.0, %v672
  %674 = vdwg.mxu0
  %v676 = vsel %vm145, %v40, 0
  %678 = vmatpush.msra.mxu0 0.0
  %679 = vmatpush.msra.mxu0 0.0
  %680 = vmatpush.msra.mxu0 0.0
  %681 = vmatpush.msra.mxu0 0.0
  %682 = vmatpush.msra.mxu0 0.0
  %683 = vmatpush.msra.mxu0 0.0
  %684 = vmatpush.msra.mxu0 0.0
  %685 = vmatpush.msra.mxu0 0.0
  %686 = vmatpush.msra.mxu0 0.0
  %687 = vmatpush.msra.mxu0 0.0
  %688 = vmatpush.msra.mxu0 0.0
  %689 = vmatpush.msra.mxu0 0.0
  %690 = vmatpush.msra.mxu0 0.0
  %691 = vmatpush.msra.mxu0 0.0
  %692 = vmatpush.msra.mxu0 0.0
  %693 = vmatpush.msra.mxu0 %v104
  %694 = vmatmul.f32.gmra.mxu0 %v676
  %v695 = vpop.f32.mrf.mxu0
  %v696 = vadd.f32 0.0, %v695
  %697 = vdwg.mxu0
  %v699 = vsel %vm145, %v41, 0
  %701 = vmatpush.msra.mxu0 0.0
  %702 = vmatpush.msra.mxu0 0.0
  %703 = vmatpush.msra.mxu0 0.0
  %704 = vmatpush.msra.mxu0 0.0
  %705 = vmatpush.msra.mxu0 0.0
  %706 = vmatpush.msra.mxu0 0.0
  %707 = vmatpush.msra.mxu0 0.0
  %708 = vmatpush.msra.mxu0 0.0
  %709 = vmatpush.msra.mxu0 0.0
  %710 = vmatpush.msra.mxu0 0.0
  %711 = vmatpush.msra.mxu0 0.0
  %712 = vmatpush.msra.mxu0 0.0
  %713 = vmatpush.msra.mxu0 0.0
  %714 = vmatpush.msra.mxu0 0.0
  %715 = vmatpush.msra.mxu0 0.0
  %716 = vmatpush.msra.mxu0 %v105
  %717 = vmatmul.f32.gmra.mxu0 %v699
  %v718 = vpop.f32.mrf.mxu0
  %v719 = vadd.f32 0.0, %v718
  %720 = vdwg.mxu0
  %v722 = vsel %vm145, %v42, 0
  %724 = vmatpush.msra.mxu0 0.0
  %725 = vmatpush.msra.mxu0 0.0
  %726 = vmatpush.msra.mxu0 0.0
  %727 = vmatpush.msra.mxu0 0.0
  %728 = vmatpush.msra.mxu0 0.0
  %729 = vmatpush.msra.mxu0 0.0
  %730 = vmatpush.msra.mxu0 0.0
  %731 = vmatpush.msra.mxu0 0.0
  %732 = vmatpush.msra.mxu0 0.0
  %733 = vmatpush.msra.mxu0 0.0
  %734 = vmatpush.msra.mxu0 0.0
  %735 = vmatpush.msra.mxu0 0.0
  %736 = vmatpush.msra.mxu0 0.0
  %737 = vmatpush.msra.mxu0 0.0
  %738 = vmatpush.msra.mxu0 0.0
  %739 = vmatpush.msra.mxu0 %v106
  %740 = vmatmul.f32.gmra.mxu0 %v722
  %v741 = vpop.f32.mrf.mxu0
  %v742 = vadd.f32 0.0, %v741
  %743 = vdwg.mxu0
  %v745 = vsel %vm145, %v43, 0
  %747 = vmatpush.msra.mxu0 0.0
  %748 = vmatpush.msra.mxu0 0.0
  %749 = vmatpush.msra.mxu0 0.0
  %750 = vmatpush.msra.mxu0 0.0
  %751 = vmatpush.msra.mxu0 0.0
  %752 = vmatpush.msra.mxu0 0.0
  %753 = vmatpush.msra.mxu0 0.0
  %754 = vmatpush.msra.mxu0 0.0
  %755 = vmatpush.msra.mxu0 0.0
  %756 = vmatpush.msra.mxu0 0.0
  %757 = vmatpush.msra.mxu0 0.0
  %758 = vmatpush.msra.mxu0 0.0
  %759 = vmatpush.msra.mxu0 0.0
  %760 = vmatpush.msra.mxu0 0.0
  %761 = vmatpush.msra.mxu0 0.0
  %762 = vmatpush.msra.mxu0 %v107
  %763 = vmatmul.f32.gmra.mxu0 %v745
  %v764 = vpop.f32.mrf.mxu0
  %v765 = vadd.f32 0.0, %v764
  %766 = vdwg.mxu0
  %v768 = vsel %vm145, %v44, 0
  %770 = vmatpush.msra.mxu0 0.0
  %771 = vmatpush.msra.mxu0 0.0
  %772 = vmatpush.msra.mxu0 0.0
  %773 = vmatpush.msra.mxu0 0.0
  %774 = vmatpush.msra.mxu0 0.0
  %775 = vmatpush.msra.mxu0 0.0
  %776 = vmatpush.msra.mxu0 0.0
  %777 = vmatpush.msra.mxu0 0.0
  %778 = vmatpush.msra.mxu0 0.0
  %779 = vmatpush.msra.mxu0 0.0
  %780 = vmatpush.msra.mxu0 0.0
  %781 = vmatpush.msra.mxu0 0.0
  %782 = vmatpush.msra.mxu0 0.0
  %783 = vmatpush.msra.mxu0 0.0
  %784 = vmatpush.msra.mxu0 0.0
  %785 = vmatpush.msra.mxu0 %v108
  %786 = vmatmul.f32.gmra.mxu0 %v768
  %v787 = vpop.f32.mrf.mxu0
  %v788 = vadd.f32 0.0, %v787
  %789 = vdwg.mxu0
  %v791 = vsel %vm145, %v45, 0
  %793 = vmatpush.msra.mxu0 0.0
  %794 = vmatpush.msra.mxu0 0.0
  %795 = vmatpush.msra.mxu0 0.0
  %796 = vmatpush.msra.mxu0 0.0
  %797 = vmatpush.msra.mxu0 0.0
  %798 = vmatpush.msra.mxu0 0.0
  %799 = vmatpush.msra.mxu0 0.0
  %800 = vmatpush.msra.mxu0 0.0
  %801 = vmatpush.msra.mxu0 0.0
  %802 = vmatpush.msra.mxu0 0.0
  %803 = vmatpush.msra.mxu0 0.0
  %804 = vmatpush.msra.mxu0 0.0
  %805 = vmatpush.msra.mxu0 0.0
  %806 = vmatpush.msra.mxu0 0.0
  %807 = vmatpush.msra.mxu0 0.0
  %808 = vmatpush.msra.mxu0 %v109
  %809 = vmatmul.f32.gmra.mxu0 %v791
  %v810 = vpop.f32.mrf.mxu0
  %v811 = vadd.f32 0.0, %v810
  %812 = vdwg.mxu0
  %v814 = vsel %vm145, %v46, 0
  %816 = vmatpush.msra.mxu0 0.0
  %817 = vmatpush.msra.mxu0 0.0
  %818 = vmatpush.msra.mxu0 0.0
  %819 = vmatpush.msra.mxu0 0.0
  %820 = vmatpush.msra.mxu0 0.0
  %821 = vmatpush.msra.mxu0 0.0
  %822 = vmatpush.msra.mxu0 0.0
  %823 = vmatpush.msra.mxu0 0.0
  %824 = vmatpush.msra.mxu0 0.0
  %825 = vmatpush.msra.mxu0 0.0
  %826 = vmatpush.msra.mxu0 0.0
  %827 = vmatpush.msra.mxu0 0.0
  %828 = vmatpush.msra.mxu0 0.0
  %829 = vmatpush.msra.mxu0 0.0
  %830 = vmatpush.msra.mxu0 0.0
  %831 = vmatpush.msra.mxu0 %v110
  %832 = vmatmul.f32.gmra.mxu0 %v814
  %v833 = vpop.f32.mrf.mxu0
  %v834 = vadd.f32 0.0, %v833
  %835 = vdwg.mxu0
  %v837 = vsel %vm145, %v47, 0
  %839 = vmatpush.msra.mxu0 0.0
  %840 = vmatpush.msra.mxu0 0.0
  %841 = vmatpush.msra.mxu0 0.0
  %842 = vmatpush.msra.mxu0 0.0
  %843 = vmatpush.msra.mxu0 0.0
  %844 = vmatpush.msra.mxu0 0.0
  %845 = vmatpush.msra.mxu0 0.0
  %846 = vmatpush.msra.mxu0 0.0
  %847 = vmatpush.msra.mxu0 0.0
  %848 = vmatpush.msra.mxu0 0.0
  %849 = vmatpush.msra.mxu0 0.0
  %850 = vmatpush.msra.mxu0 0.0
  %851 = vmatpush.msra.mxu0 0.0
  %852 = vmatpush.msra.mxu0 0.0
  %853 = vmatpush.msra.mxu0 0.0
  %854 = vmatpush.msra.mxu0 %v111
  %855 = vmatmul.f32.gmra.mxu0 %v837
  %v856 = vpop.f32.mrf.mxu0
  %v857 = vadd.f32 0.0, %v856
  %858 = vdwg.mxu0
  %v860 = vsel %vm145, %v48, 0
  %862 = vmatpush.msra.mxu0 0.0
  %863 = vmatpush.msra.mxu0 0.0
  %864 = vmatpush.msra.mxu0 0.0
  %865 = vmatpush.msra.mxu0 0.0
  %866 = vmatpush.msra.mxu0 0.0
  %867 = vmatpush.msra.mxu0 0.0
  %868 = vmatpush.msra.mxu0 0.0
  %869 = vmatpush.msra.mxu0 0.0
  %870 = vmatpush.msra.mxu0 0.0
  %871 = vmatpush.msra.mxu0 0.0
  %872 = vmatpush.msra.mxu0 0.0
  %873 = vmatpush.msra.mxu0 0.0
  %874 = vmatpush.msra.mxu0 0.0
  %875 = vmatpush.msra.mxu0 0.0
  %876 = vmatpush.msra.mxu0 0.0
  %877 = vmatpush.msra.mxu0 %v112
  %878 = vmatmul.f32.gmra.mxu0 %v860
  %v879 = vpop.f32.mrf.mxu0
  %v880 = vadd.f32 0.0, %v879
  %881 = vdwg.mxu0
  %v883 = vsel %vm145, %v49, 0
  %885 = vmatpush.msra.mxu0 0.0
  %886 = vmatpush.msra.mxu0 0.0
  %887 = vmatpush.msra.mxu0 0.0
  %888 = vmatpush.msra.mxu0 0.0
  %889 = vmatpush.msra.mxu0 0.0
  %890 = vmatpush.msra.mxu0 0.0
  %891 = vmatpush.msra.mxu0 0.0
  %892 = vmatpush.msra.mxu0 0.0
  %893 = vmatpush.msra.mxu0 0.0
  %894 = vmatpush.msra.mxu0 0.0
  %895 = vmatpush.msra.mxu0 0.0
  %896 = vmatpush.msra.mxu0 0.0
  %897 = vmatpush.msra.mxu0 0.0
  %898 = vmatpush.msra.mxu0 0.0
  %899 = vmatpush.msra.mxu0 0.0
  %900 = vmatpush.msra.mxu0 %v113
  %901 = vmatmul.f32.gmra.mxu0 %v883
  %v902 = vpop.f32.mrf.mxu0
  %v903 = vadd.f32 0.0, %v902
  %904 = vdwg.mxu0
  %v906 = vsel %vm145, %v50, 0
  %908 = vmatpush.msra.mxu0 0.0
  %909 = vmatpush.msra.mxu0 0.0
  %910 = vmatpush.msra.mxu0 0.0
  %911 = vmatpush.msra.mxu0 0.0
  %912 = vmatpush.msra.mxu0 0.0
  %913 = vmatpush.msra.mxu0 0.0
  %914 = vmatpush.msra.mxu0 0.0
  %915 = vmatpush.msra.mxu0 0.0
  %916 = vmatpush.msra.mxu0 0.0
  %917 = vmatpush.msra.mxu0 0.0
  %918 = vmatpush.msra.mxu0 0.0
  %919 = vmatpush.msra.mxu0 0.0
  %920 = vmatpush.msra.mxu0 0.0
  %921 = vmatpush.msra.mxu0 0.0
  %922 = vmatpush.msra.mxu0 0.0
  %923 = vmatpush.msra.mxu0 %v114
  %924 = vmatmul.f32.gmra.mxu0 %v906
  %v925 = vpop.f32.mrf.mxu0
  %v926 = vadd.f32 0.0, %v925
  %927 = vdwg.mxu0
  %v929 = vsel %vm145, %v51, 0
  %931 = vmatpush.msra.mxu0 0.0
  %932 = vmatpush.msra.mxu0 0.0
  %933 = vmatpush.msra.mxu0 0.0
  %934 = vmatpush.msra.mxu0 0.0
  %935 = vmatpush.msra.mxu0 0.0
  %936 = vmatpush.msra.mxu0 0.0
  %937 = vmatpush.msra.mxu0 0.0
  %938 = vmatpush.msra.mxu0 0.0
  %939 = vmatpush.msra.mxu0 0.0
  %940 = vmatpush.msra.mxu0 0.0
  %941 = vmatpush.msra.mxu0 0.0
  %942 = vmatpush.msra.mxu0 0.0
  %943 = vmatpush.msra.mxu0 0.0
  %944 = vmatpush.msra.mxu0 0.0
  %945 = vmatpush.msra.mxu0 0.0
  %946 = vmatpush.msra.mxu0 %v115
  %947 = vmatmul.f32.gmra.mxu0 %v929
  %v948 = vpop.f32.mrf.mxu0
  %v949 = vadd.f32 0.0, %v948
  %950 = vdwg.mxu0
  %v952 = vsel %vm145, %v52, 0
  %954 = vmatpush.msra.mxu0 0.0
  %955 = vmatpush.msra.mxu0 0.0
  %956 = vmatpush.msra.mxu0 0.0
  %957 = vmatpush.msra.mxu0 0.0
  %958 = vmatpush.msra.mxu0 0.0
  %959 = vmatpush.msra.mxu0 0.0
  %960 = vmatpush.msra.mxu0 0.0
  %961 = vmatpush.msra.mxu0 0.0
  %962 = vmatpush.msra.mxu0 0.0
  %963 = vmatpush.msra.mxu0 0.0
  %964 = vmatpush.msra.mxu0 0.0
  %965 = vmatpush.msra.mxu0 0.0
  %966 = vmatpush.msra.mxu0 0.0
  %967 = vmatpush.msra.mxu0 0.0
  %968 = vmatpush.msra.mxu0 0.0
  %969 = vmatpush.msra.mxu0 %v116
  %970 = vmatmul.f32.gmra.mxu0 %v952
  %v971 = vpop.f32.mrf.mxu0
  %v972 = vadd.f32 0.0, %v971
  %973 = vdwg.mxu0
  %v975 = vsel %vm145, %v53, 0
  %977 = vmatpush.msra.mxu0 0.0
  %978 = vmatpush.msra.mxu0 0.0
  %979 = vmatpush.msra.mxu0 0.0
  %980 = vmatpush.msra.mxu0 0.0
  %981 = vmatpush.msra.mxu0 0.0
  %982 = vmatpush.msra.mxu0 0.0
  %983 = vmatpush.msra.mxu0 0.0
  %984 = vmatpush.msra.mxu0 0.0
  %985 = vmatpush.msra.mxu0 0.0
  %986 = vmatpush.msra.mxu0 0.0
  %987 = vmatpush.msra.mxu0 0.0
  %988 = vmatpush.msra.mxu0 0.0
  %989 = vmatpush.msra.mxu0 0.0
  %990 = vmatpush.msra.mxu0 0.0
  %991 = vmatpush.msra.mxu0 0.0
  %992 = vmatpush.msra.mxu0 %v117
  %993 = vmatmul.f32.gmra.mxu0 %v975
  %v994 = vpop.f32.mrf.mxu0
  %v995 = vadd.f32 0.0, %v994
  %996 = vdwg.mxu0
  %v998 = vsel %vm145, %v54, 0
  %1000 = vmatpush.msra.mxu0 0.0
  %1001 = vmatpush.msra.mxu0 0.0
  %1002 = vmatpush.msra.mxu0 0.0
  %1003 = vmatpush.msra.mxu0 0.0
  %1004 = vmatpush.msra.mxu0 0.0
  %1005 = vmatpush.msra.mxu0 0.0
  %1006 = vmatpush.msra.mxu0 0.0
  %1007 = vmatpush.msra.mxu0 0.0
  %1008 = vmatpush.msra.mxu0 0.0
  %1009 = vmatpush.msra.mxu0 0.0
  %1010 = vmatpush.msra.mxu0 0.0
  %1011 = vmatpush.msra.mxu0 0.0
  %1012 = vmatpush.msra.mxu0 0.0
  %1013 = vmatpush.msra.mxu0 0.0
  %1014 = vmatpush.msra.mxu0 0.0
  %1015 = vmatpush.msra.mxu0 %v118
  %1016 = vmatmul.f32.gmra.mxu0 %v998
  %v1017 = vpop.f32.mrf.mxu0
  %v1018 = vadd.f32 0.0, %v1017
  %1019 = vdwg.mxu0
  %v1021 = vsel %vm145, %v55, 0
  %1023 = vmatpush.msra.mxu0 0.0
  %1024 = vmatpush.msra.mxu0 0.0
  %1025 = vmatpush.msra.mxu0 0.0
  %1026 = vmatpush.msra.mxu0 0.0
  %1027 = vmatpush.msra.mxu0 0.0
  %1028 = vmatpush.msra.mxu0 0.0
  %1029 = vmatpush.msra.mxu0 0.0
  %1030 = vmatpush.msra.mxu0 0.0
  %1031 = vmatpush.msra.mxu0 0.0
  %1032 = vmatpush.msra.mxu0 0.0
  %1033 = vmatpush.msra.mxu0 0.0
  %1034 = vmatpush.msra.mxu0 0.0
  %1035 = vmatpush.msra.mxu0 0.0
  %1036 = vmatpush.msra.mxu0 0.0
  %1037 = vmatpush.msra.mxu0 0.0
  %1038 = vmatpush.msra.mxu0 %v119
  %1039 = vmatmul.f32.gmra.mxu0 %v1021
  %v1040 = vpop.f32.mrf.mxu0
  %v1041 = vadd.f32 0.0, %v1040
  %1042 = vdwg.mxu0
  %v1044 = vsel %vm145, %v56, 0
  %1046 = vmatpush.msra.mxu0 0.0
  %1047 = vmatpush.msra.mxu0 0.0
  %1048 = vmatpush.msra.mxu0 0.0
  %1049 = vmatpush.msra.mxu0 0.0
  %1050 = vmatpush.msra.mxu0 0.0
  %1051 = vmatpush.msra.mxu0 0.0
  %1052 = vmatpush.msra.mxu0 0.0
  %1053 = vmatpush.msra.mxu0 0.0
  %1054 = vmatpush.msra.mxu0 0.0
  %1055 = vmatpush.msra.mxu0 0.0
  %1056 = vmatpush.msra.mxu0 0.0
  %1057 = vmatpush.msra.mxu0 0.0
  %1058 = vmatpush.msra.mxu0 0.0
  %1059 = vmatpush.msra.mxu0 0.0
  %1060 = vmatpush.msra.mxu0 0.0
  %1061 = vmatpush.msra.mxu0 %v120
  %1062 = vmatmul.f32.gmra.mxu0 %v1044
  %v1063 = vpop.f32.mrf.mxu0
  %v1064 = vadd.f32 0.0, %v1063
  %1065 = vdwg.mxu0
  %v1067 = vsel %vm145, %v57, 0
  %1069 = vmatpush.msra.mxu0 0.0
  %1070 = vmatpush.msra.mxu0 0.0
  %1071 = vmatpush.msra.mxu0 0.0
  %1072 = vmatpush.msra.mxu0 0.0
  %1073 = vmatpush.msra.mxu0 0.0
  %1074 = vmatpush.msra.mxu0 0.0
  %1075 = vmatpush.msra.mxu0 0.0
  %1076 = vmatpush.msra.mxu0 0.0
  %1077 = vmatpush.msra.mxu0 0.0
  %1078 = vmatpush.msra.mxu0 0.0
  %1079 = vmatpush.msra.mxu0 0.0
  %1080 = vmatpush.msra.mxu0 0.0
  %1081 = vmatpush.msra.mxu0 0.0
  %1082 = vmatpush.msra.mxu0 0.0
  %1083 = vmatpush.msra.mxu0 0.0
  %1084 = vmatpush.msra.mxu0 %v121
  %1085 = vmatmul.f32.gmra.mxu0 %v1067
  %v1086 = vpop.f32.mrf.mxu0
  %v1087 = vadd.f32 0.0, %v1086
  %1088 = vdwg.mxu0
  %v1090 = vsel %vm145, %v58, 0
  %1092 = vmatpush.msra.mxu0 0.0
  %1093 = vmatpush.msra.mxu0 0.0
  %1094 = vmatpush.msra.mxu0 0.0
  %1095 = vmatpush.msra.mxu0 0.0
  %1096 = vmatpush.msra.mxu0 0.0
  %1097 = vmatpush.msra.mxu0 0.0
  %1098 = vmatpush.msra.mxu0 0.0
  %1099 = vmatpush.msra.mxu0 0.0
  %1100 = vmatpush.msra.mxu0 0.0
  %1101 = vmatpush.msra.mxu0 0.0
  %1102 = vmatpush.msra.mxu0 0.0
  %1103 = vmatpush.msra.mxu0 0.0
  %1104 = vmatpush.msra.mxu0 0.0
  %1105 = vmatpush.msra.mxu0 0.0
  %1106 = vmatpush.msra.mxu0 0.0
  %1107 = vmatpush.msra.mxu0 %v122
  %1108 = vmatmul.f32.gmra.mxu0 %v1090
  %v1109 = vpop.f32.mrf.mxu0
  %v1110 = vadd.f32 0.0, %v1109
  %1111 = vdwg.mxu0
  %v1113 = vsel %vm145, %v59, 0
  %1115 = vmatpush.msra.mxu0 0.0
  %1116 = vmatpush.msra.mxu0 0.0
  %1117 = vmatpush.msra.mxu0 0.0
  %1118 = vmatpush.msra.mxu0 0.0
  %1119 = vmatpush.msra.mxu0 0.0
  %1120 = vmatpush.msra.mxu0 0.0
  %1121 = vmatpush.msra.mxu0 0.0
  %1122 = vmatpush.msra.mxu0 0.0
  %1123 = vmatpush.msra.mxu0 0.0
  %1124 = vmatpush.msra.mxu0 0.0
  %1125 = vmatpush.msra.mxu0 0.0
  %1126 = vmatpush.msra.mxu0 0.0
  %1127 = vmatpush.msra.mxu0 0.0
  %1128 = vmatpush.msra.mxu0 0.0
  %1129 = vmatpush.msra.mxu0 0.0
  %1130 = vmatpush.msra.mxu0 %v123
  %1131 = vmatmul.f32.gmra.mxu0 %v1113
  %v1132 = vpop.f32.mrf.mxu0
  %v1133 = vadd.f32 0.0, %v1132
  %1134 = vdwg.mxu0
  %v1136 = vsel %vm145, %v60, 0
  %1138 = vmatpush.msra.mxu0 0.0
  %1139 = vmatpush.msra.mxu0 0.0
  %1140 = vmatpush.msra.mxu0 0.0
  %1141 = vmatpush.msra.mxu0 0.0
  %1142 = vmatpush.msra.mxu0 0.0
  %1143 = vmatpush.msra.mxu0 0.0
  %1144 = vmatpush.msra.mxu0 0.0
  %1145 = vmatpush.msra.mxu0 0.0
  %1146 = vmatpush.msra.mxu0 0.0
  %1147 = vmatpush.msra.mxu0 0.0
  %1148 = vmatpush.msra.mxu0 0.0
  %1149 = vmatpush.msra.mxu0 0.0
  %1150 = vmatpush.msra.mxu0 0.0
  %1151 = vmatpush.msra.mxu0 0.0
  %1152 = vmatpush.msra.mxu0 0.0
  %1153 = vmatpush.msra.mxu0 %v124
  %1154 = vmatmul.f32.gmra.mxu0 %v1136
  %v1155 = vpop.f32.mrf.mxu0
  %v1156 = vadd.f32 0.0, %v1155
  %1157 = vdwg.mxu0
  %v1159 = vsel %vm145, %v61, 0
  %1161 = vmatpush.msra.mxu0 0.0
  %1162 = vmatpush.msra.mxu0 0.0
  %1163 = vmatpush.msra.mxu0 0.0
  %1164 = vmatpush.msra.mxu0 0.0
  %1165 = vmatpush.msra.mxu0 0.0
  %1166 = vmatpush.msra.mxu0 0.0
  %1167 = vmatpush.msra.mxu0 0.0
  %1168 = vmatpush.msra.mxu0 0.0
  %1169 = vmatpush.msra.mxu0 0.0
  %1170 = vmatpush.msra.mxu0 0.0
  %1171 = vmatpush.msra.mxu0 0.0
  %1172 = vmatpush.msra.mxu0 0.0
  %1173 = vmatpush.msra.mxu0 0.0
  %1174 = vmatpush.msra.mxu0 0.0
  %1175 = vmatpush.msra.mxu0 0.0
  %1176 = vmatpush.msra.mxu0 %v125
  %1177 = vmatmul.f32.gmra.mxu0 %v1159
  %v1178 = vpop.f32.mrf.mxu0
  %v1179 = vadd.f32 0.0, %v1178
  %1180 = vdwg.mxu0
  %v1182 = vsel %vm145, %v62, 0
  %1184 = vmatpush.msra.mxu0 0.0
  %1185 = vmatpush.msra.mxu0 0.0
  %1186 = vmatpush.msra.mxu0 0.0
  %1187 = vmatpush.msra.mxu0 0.0
  %1188 = vmatpush.msra.mxu0 0.0
  %1189 = vmatpush.msra.mxu0 0.0
  %1190 = vmatpush.msra.mxu0 0.0
  %1191 = vmatpush.msra.mxu0 0.0
  %1192 = vmatpush.msra.mxu0 0.0
  %1193 = vmatpush.msra.mxu0 0.0
  %1194 = vmatpush.msra.mxu0 0.0
  %1195 = vmatpush.msra.mxu0 0.0
  %1196 = vmatpush.msra.mxu0 0.0
  %1197 = vmatpush.msra.mxu0 0.0
  %1198 = vmatpush.msra.mxu0 0.0
  %1199 = vmatpush.msra.mxu0 %v126
  %1200 = vmatmul.f32.gmra.mxu0 %v1182
  %v1201 = vpop.f32.mrf.mxu0
  %v1202 = vadd.f32 0.0, %v1201
  %1203 = vdwg.mxu0
  %v1205 = vsel %vm145, %v63, 0
  %1207 = vmatpush.msra.mxu0 0.0
  %1208 = vmatpush.msra.mxu0 0.0
  %1209 = vmatpush.msra.mxu0 0.0
  %1210 = vmatpush.msra.mxu0 0.0
  %1211 = vmatpush.msra.mxu0 0.0
  %1212 = vmatpush.msra.mxu0 0.0
  %1213 = vmatpush.msra.mxu0 0.0
  %1214 = vmatpush.msra.mxu0 0.0
  %1215 = vmatpush.msra.mxu0 0.0
  %1216 = vmatpush.msra.mxu0 0.0
  %1217 = vmatpush.msra.mxu0 0.0
  %1218 = vmatpush.msra.mxu0 0.0
  %1219 = vmatpush.msra.mxu0 0.0
  %1220 = vmatpush.msra.mxu0 0.0
  %1221 = vmatpush.msra.mxu0 0.0
  %1222 = vmatpush.msra.mxu0 %v127
  %1223 = vmatmul.f32.gmra.mxu0 %v1205
  %v1224 = vpop.f32.mrf.mxu0
  %v1225 = vadd.f32 0.0, %v1224
  %1226 = vdwg.mxu0
  %v1228 = vsel %vm145, %v64, 0
  %1230 = vmatpush.msra.mxu0 0.0
  %1231 = vmatpush.msra.mxu0 0.0
  %1232 = vmatpush.msra.mxu0 0.0
  %1233 = vmatpush.msra.mxu0 0.0
  %1234 = vmatpush.msra.mxu0 0.0
  %1235 = vmatpush.msra.mxu0 0.0
  %1236 = vmatpush.msra.mxu0 0.0
  %1237 = vmatpush.msra.mxu0 0.0
  %1238 = vmatpush.msra.mxu0 0.0
  %1239 = vmatpush.msra.mxu0 0.0
  %1240 = vmatpush.msra.mxu0 0.0
  %1241 = vmatpush.msra.mxu0 0.0
  %1242 = vmatpush.msra.mxu0 0.0
  %1243 = vmatpush.msra.mxu0 0.0
  %1244 = vmatpush.msra.mxu0 0.0
  %1245 = vmatpush.msra.mxu0 %v128
  %1246 = vmatmul.f32.gmra.mxu0 %v1228
  %v1247 = vpop.f32.mrf.mxu0
  %v1248 = vadd.f32 0.0, %v1247
  %1249 = vdwg.mxu0
  %v1251 = vsel %vm145, %v65, 0
  %1253 = vmatpush.msra.mxu0 0.0
  %1254 = vmatpush.msra.mxu0 0.0
  %1255 = vmatpush.msra.mxu0 0.0
  %1256 = vmatpush.msra.mxu0 0.0
  %1257 = vmatpush.msra.mxu0 0.0
  %1258 = vmatpush.msra.mxu0 0.0
  %1259 = vmatpush.msra.mxu0 0.0
  %1260 = vmatpush.msra.mxu0 0.0
  %1261 = vmatpush.msra.mxu0 0.0
  %1262 = vmatpush.msra.mxu0 0.0
  %1263 = vmatpush.msra.mxu0 0.0
  %1264 = vmatpush.msra.mxu0 0.0
  %1265 = vmatpush.msra.mxu0 0.0
  %1266 = vmatpush.msra.mxu0 0.0
  %1267 = vmatpush.msra.mxu0 0.0
  %1268 = vmatpush.msra.mxu0 %v129
  %1269 = vmatmul.f32.gmra.mxu0 %v1251
  %v1270 = vpop.f32.mrf.mxu0
  %v1271 = vadd.f32 0.0, %v1270
  %1272 = vdwg.mxu0
  %v1274 = vsel %vm145, %v66, 0
  %1276 = vmatpush.msra.mxu0 0.0
  %1277 = vmatpush.msra.mxu0 0.0
  %1278 = vmatpush.msra.mxu0 0.0
  %1279 = vmatpush.msra.mxu0 0.0
  %1280 = vmatpush.msra.mxu0 0.0
  %1281 = vmatpush.msra.mxu0 0.0
  %1282 = vmatpush.msra.mxu0 0.0
  %1283 = vmatpush.msra.mxu0 0.0
  %1284 = vmatpush.msra.mxu0 0.0
  %1285 = vmatpush.msra.mxu0 0.0
  %1286 = vmatpush.msra.mxu0 0.0
  %1287 = vmatpush.msra.mxu0 0.0
  %1288 = vmatpush.msra.mxu0 0.0
  %1289 = vmatpush.msra.mxu0 0.0
  %1290 = vmatpush.msra.mxu0 0.0
  %1291 = vmatpush.msra.mxu0 %v130
  %1292 = vmatmul.f32.gmra.mxu0 %v1274
  %v1293 = vpop.f32.mrf.mxu0
  %v1294 = vadd.f32 0.0, %v1293
  %1295 = vdwg.mxu0
  %v1297 = vsel %vm145, %v67, 0
  %1299 = vmatpush.msra.mxu0 0.0
  %1300 = vmatpush.msra.mxu0 0.0
  %1301 = vmatpush.msra.mxu0 0.0
  %1302 = vmatpush.msra.mxu0 0.0
  %1303 = vmatpush.msra.mxu0 0.0
  %1304 = vmatpush.msra.mxu0 0.0
  %1305 = vmatpush.msra.mxu0 0.0
  %1306 = vmatpush.msra.mxu0 0.0
  %1307 = vmatpush.msra.mxu0 0.0
  %1308 = vmatpush.msra.mxu0 0.0
  %1309 = vmatpush.msra.mxu0 0.0
  %1310 = vmatpush.msra.mxu0 0.0
  %1311 = vmatpush.msra.mxu0 0.0
  %1312 = vmatpush.msra.mxu0 0.0
  %1313 = vmatpush.msra.mxu0 0.0
  %1314 = vmatpush.msra.mxu0 %v131
  %1315 = vmatmul.f32.gmra.mxu0 %v1297
  %v1316 = vpop.f32.mrf.mxu0
  %v1317 = vadd.f32 0.0, %v1316
  %1318 = vdwg.mxu0
  %v1320 = vsel %vm145, %v68, 0
  %1322 = vmatpush.msra.mxu0 0.0
  %1323 = vmatpush.msra.mxu0 0.0
  %1324 = vmatpush.msra.mxu0 0.0
  %1325 = vmatpush.msra.mxu0 0.0
  %1326 = vmatpush.msra.mxu0 0.0
  %1327 = vmatpush.msra.mxu0 0.0
  %1328 = vmatpush.msra.mxu0 0.0
  %1329 = vmatpush.msra.mxu0 0.0
  %1330 = vmatpush.msra.mxu0 0.0
  %1331 = vmatpush.msra.mxu0 0.0
  %1332 = vmatpush.msra.mxu0 0.0
  %1333 = vmatpush.msra.mxu0 0.0
  %1334 = vmatpush.msra.mxu0 0.0
  %1335 = vmatpush.msra.mxu0 0.0
  %1336 = vmatpush.msra.mxu0 0.0
  %1337 = vmatpush.msra.mxu0 %v132
  %1338 = vmatmul.f32.gmra.mxu0 %v1320
  %v1339 = vpop.f32.mrf.mxu0
  %v1340 = vadd.f32 0.0, %v1339
  %1341 = vdwg.mxu0
  %v1343 = vsel %vm145, %v69, 0
  %1345 = vmatpush.msra.mxu0 0.0
  %1346 = vmatpush.msra.mxu0 0.0
  %1347 = vmatpush.msra.mxu0 0.0
  %1348 = vmatpush.msra.mxu0 0.0
  %1349 = vmatpush.msra.mxu0 0.0
  %1350 = vmatpush.msra.mxu0 0.0
  %1351 = vmatpush.msra.mxu0 0.0
  %1352 = vmatpush.msra.mxu0 0.0
  %1353 = vmatpush.msra.mxu0 0.0
  %1354 = vmatpush.msra.mxu0 0.0
  %1355 = vmatpush.msra.mxu0 0.0
  %1356 = vmatpush.msra.mxu0 0.0
  %1357 = vmatpush.msra.mxu0 0.0
  %1358 = vmatpush.msra.mxu0 0.0
  %1359 = vmatpush.msra.mxu0 0.0
  %1360 = vmatpush.msra.mxu0 %v133
  %1361 = vmatmul.f32.gmra.mxu0 %v1343
  %v1362 = vpop.f32.mrf.mxu0
  %v1363 = vadd.f32 0.0, %v1362
  %1364 = vdwg.mxu0
  %v1366 = vsel %vm145, %v70, 0
  %1368 = vmatpush.msra.mxu0 0.0
  %1369 = vmatpush.msra.mxu0 0.0
  %1370 = vmatpush.msra.mxu0 0.0
  %1371 = vmatpush.msra.mxu0 0.0
  %1372 = vmatpush.msra.mxu0 0.0
  %1373 = vmatpush.msra.mxu0 0.0
  %1374 = vmatpush.msra.mxu0 0.0
  %1375 = vmatpush.msra.mxu0 0.0
  %1376 = vmatpush.msra.mxu0 0.0
  %1377 = vmatpush.msra.mxu0 0.0
  %1378 = vmatpush.msra.mxu0 0.0
  %1379 = vmatpush.msra.mxu0 0.0
  %1380 = vmatpush.msra.mxu0 0.0
  %1381 = vmatpush.msra.mxu0 0.0
  %1382 = vmatpush.msra.mxu0 0.0
  %1383 = vmatpush.msra.mxu0 %v134
  %1384 = vmatmul.f32.gmra.mxu0 %v1366
  %v1385 = vpop.f32.mrf.mxu0
  %v1386 = vadd.f32 0.0, %v1385
  %1387 = vdwg.mxu0
  %v1389 = vsel %vm145, %v71, 0
  %1391 = vmatpush.msra.mxu0 0.0
  %1392 = vmatpush.msra.mxu0 0.0
  %1393 = vmatpush.msra.mxu0 0.0
  %1394 = vmatpush.msra.mxu0 0.0
  %1395 = vmatpush.msra.mxu0 0.0
  %1396 = vmatpush.msra.mxu0 0.0
  %1397 = vmatpush.msra.mxu0 0.0
  %1398 = vmatpush.msra.mxu0 0.0
  %1399 = vmatpush.msra.mxu0 0.0
  %1400 = vmatpush.msra.mxu0 0.0
  %1401 = vmatpush.msra.mxu0 0.0
  %1402 = vmatpush.msra.mxu0 0.0
  %1403 = vmatpush.msra.mxu0 0.0
  %1404 = vmatpush.msra.mxu0 0.0
  %1405 = vmatpush.msra.mxu0 0.0
  %1406 = vmatpush.msra.mxu0 %v135
  %1407 = vmatmul.f32.gmra.mxu0 %v1389
  %v1408 = vpop.f32.mrf.mxu0
  %v1409 = vadd.f32 0.0, %v1408
  %1410 = vdwg.mxu0
  %v1412 = vsel %vm145, %v72, 0
  %1414 = vmatpush.msra.mxu0 0.0
  %1415 = vmatpush.msra.mxu0 0.0
  %1416 = vmatpush.msra.mxu0 0.0
  %1417 = vmatpush.msra.mxu0 0.0
  %1418 = vmatpush.msra.mxu0 0.0
  %1419 = vmatpush.msra.mxu0 0.0
  %1420 = vmatpush.msra.mxu0 0.0
  %1421 = vmatpush.msra.mxu0 0.0
  %1422 = vmatpush.msra.mxu0 0.0
  %1423 = vmatpush.msra.mxu0 0.0
  %1424 = vmatpush.msra.mxu0 0.0
  %1425 = vmatpush.msra.mxu0 0.0
  %1426 = vmatpush.msra.mxu0 0.0
  %1427 = vmatpush.msra.mxu0 0.0
  %1428 = vmatpush.msra.mxu0 0.0
  %1429 = vmatpush.msra.mxu0 %v136
  %1430 = vmatmul.f32.gmra.mxu0 %v1412
  %v1431 = vpop.f32.mrf.mxu0
  %v1432 = vadd.f32 0.0, %v1431
  %1433 = vdwg.mxu0
  %v1435 = vsel %vm145, %v73, 0
  %1437 = vmatpush.msra.mxu0 0.0
  %1438 = vmatpush.msra.mxu0 0.0
  %1439 = vmatpush.msra.mxu0 0.0
  %1440 = vmatpush.msra.mxu0 0.0
  %1441 = vmatpush.msra.mxu0 0.0
  %1442 = vmatpush.msra.mxu0 0.0
  %1443 = vmatpush.msra.mxu0 0.0
  %1444 = vmatpush.msra.mxu0 0.0
  %1445 = vmatpush.msra.mxu0 0.0
  %1446 = vmatpush.msra.mxu0 0.0
  %1447 = vmatpush.msra.mxu0 0.0
  %1448 = vmatpush.msra.mxu0 0.0
  %1449 = vmatpush.msra.mxu0 0.0
  %1450 = vmatpush.msra.mxu0 0.0
  %1451 = vmatpush.msra.mxu0 0.0
  %1452 = vmatpush.msra.mxu0 %v137
  %1453 = vmatmul.f32.gmra.mxu0 %v1435
  %v1454 = vpop.f32.mrf.mxu0
  %v1455 = vadd.f32 0.0, %v1454
  %1456 = vdwg.mxu0
  %v1458 = vsel %vm145, %v74, 0
  %1460 = vmatpush.msra.mxu0 0.0
  %1461 = vmatpush.msra.mxu0 0.0
  %1462 = vmatpush.msra.mxu0 0.0
  %1463 = vmatpush.msra.mxu0 0.0
  %1464 = vmatpush.msra.mxu0 0.0
  %1465 = vmatpush.msra.mxu0 0.0
  %1466 = vmatpush.msra.mxu0 0.0
  %1467 = vmatpush.msra.mxu0 0.0
  %1468 = vmatpush.msra.mxu0 0.0
  %1469 = vmatpush.msra.mxu0 0.0
  %1470 = vmatpush.msra.mxu0 0.0
  %1471 = vmatpush.msra.mxu0 0.0
  %1472 = vmatpush.msra.mxu0 0.0
  %1473 = vmatpush.msra.mxu0 0.0
  %1474 = vmatpush.msra.mxu0 0.0
  %1475 = vmatpush.msra.mxu0 %v138
  %1476 = vmatmul.f32.gmra.mxu0 %v1458
  %v1477 = vpop.f32.mrf.mxu0
  %v1478 = vadd.f32 0.0, %v1477
  %1479 = vdwg.mxu0
  %v1481 = vsel %vm145, %v75, 0
  %1483 = vmatpush.msra.mxu0 0.0
  %1484 = vmatpush.msra.mxu0 0.0
  %1485 = vmatpush.msra.mxu0 0.0
  %1486 = vmatpush.msra.mxu0 0.0
  %1487 = vmatpush.msra.mxu0 0.0
  %1488 = vmatpush.msra.mxu0 0.0
  %1489 = vmatpush.msra.mxu0 0.0
  %1490 = vmatpush.msra.mxu0 0.0
  %1491 = vmatpush.msra.mxu0 0.0
  %1492 = vmatpush.msra.mxu0 0.0
  %1493 = vmatpush.msra.mxu0 0.0
  %1494 = vmatpush.msra.mxu0 0.0
  %1495 = vmatpush.msra.mxu0 0.0
  %1496 = vmatpush.msra.mxu0 0.0
  %1497 = vmatpush.msra.mxu0 0.0
  %1498 = vmatpush.msra.mxu0 %v139
  %1499 = vmatmul.f32.gmra.mxu0 %v1481
  %v1500 = vpop.f32.mrf.mxu0
  %v1501 = vadd.f32 0.0, %v1500
  %1502 = vdwg.mxu0
  %v1504 = vsel %vm145, %v76, 0
  %1506 = vmatpush.msra.mxu0 0.0
  %1507 = vmatpush.msra.mxu0 0.0
  %1508 = vmatpush.msra.mxu0 0.0
  %1509 = vmatpush.msra.mxu0 0.0
  %1510 = vmatpush.msra.mxu0 0.0
  %1511 = vmatpush.msra.mxu0 0.0
  %1512 = vmatpush.msra.mxu0 0.0
  %1513 = vmatpush.msra.mxu0 0.0
  %1514 = vmatpush.msra.mxu0 0.0
  %1515 = vmatpush.msra.mxu0 0.0
  %1516 = vmatpush.msra.mxu0 0.0
  %1517 = vmatpush.msra.mxu0 0.0
  %1518 = vmatpush.msra.mxu0 0.0
  %1519 = vmatpush.msra.mxu0 0.0
  %1520 = vmatpush.msra.mxu0 0.0
  %1521 = vmatpush.msra.mxu0 %v140
  %1522 = vmatmul.f32.gmra.mxu0 %v1504
  %v1523 = vpop.f32.mrf.mxu0
  %v1524 = vadd.f32 0.0, %v1523
  %1525 = vdwg.mxu0
  %v1527 = vsel %vm145, %v77, 0
  %1529 = vmatpush.msra.mxu0 0.0
  %1530 = vmatpush.msra.mxu0 0.0
  %1531 = vmatpush.msra.mxu0 0.0
  %1532 = vmatpush.msra.mxu0 0.0
  %1533 = vmatpush.msra.mxu0 0.0
  %1534 = vmatpush.msra.mxu0 0.0
  %1535 = vmatpush.msra.mxu0 0.0
  %1536 = vmatpush.msra.mxu0 0.0
  %1537 = vmatpush.msra.mxu0 0.0
  %1538 = vmatpush.msra.mxu0 0.0
  %1539 = vmatpush.msra.mxu0 0.0
  %1540 = vmatpush.msra.mxu0 0.0
  %1541 = vmatpush.msra.mxu0 0.0
  %1542 = vmatpush.msra.mxu0 0.0
  %1543 = vmatpush.msra.mxu0 0.0
  %1544 = vmatpush.msra.mxu0 %v141
  %1545 = vmatmul.f32.gmra.mxu0 %v1527
  %v1546 = vpop.f32.mrf.mxu0
  %v1547 = vadd.f32 0.0, %v1546
  %1548 = vdwg.mxu0
  %v1550 = vsel %vm145, %v78, 0
  %1552 = vmatpush.msra.mxu0 0.0
  %1553 = vmatpush.msra.mxu0 0.0
  %1554 = vmatpush.msra.mxu0 0.0
  %1555 = vmatpush.msra.mxu0 0.0
  %1556 = vmatpush.msra.mxu0 0.0
  %1557 = vmatpush.msra.mxu0 0.0
  %1558 = vmatpush.msra.mxu0 0.0
  %1559 = vmatpush.msra.mxu0 0.0
  %1560 = vmatpush.msra.mxu0 0.0
  %1561 = vmatpush.msra.mxu0 0.0
  %1562 = vmatpush.msra.mxu0 0.0
  %1563 = vmatpush.msra.mxu0 0.0
  %1564 = vmatpush.msra.mxu0 0.0
  %1565 = vmatpush.msra.mxu0 0.0
  %1566 = vmatpush.msra.mxu0 0.0
  %1567 = vmatpush.msra.mxu0 %v142
  %1568 = vmatmul.f32.gmra.mxu0 %v1550
  %v1569 = vpop.f32.mrf.mxu0
  %v1570 = vadd.f32 0.0, %v1569
  %1571 = vdwg.mxu0
  %v1573 = vsel %vm145, %v79, 0
  %1575 = vmatpush.msra.mxu0 0.0
  %1576 = vmatpush.msra.mxu0 0.0
  %1577 = vmatpush.msra.mxu0 0.0
  %1578 = vmatpush.msra.mxu0 0.0
  %1579 = vmatpush.msra.mxu0 0.0
  %1580 = vmatpush.msra.mxu0 0.0
  %1581 = vmatpush.msra.mxu0 0.0
  %1582 = vmatpush.msra.mxu0 0.0
  %1583 = vmatpush.msra.mxu0 0.0
  %1584 = vmatpush.msra.mxu0 0.0
  %1585 = vmatpush.msra.mxu0 0.0
  %1586 = vmatpush.msra.mxu0 0.0
  %1587 = vmatpush.msra.mxu0 0.0
  %1588 = vmatpush.msra.mxu0 0.0
  %1589 = vmatpush.msra.mxu0 0.0
  %1590 = vmatpush.msra.mxu0 %v143
  %1591 = vmatmul.f32.gmra.mxu0 %v1573
  %v1592 = vpop.f32.mrf.mxu0
  %v1593 = vadd.f32 0.0, %v1592
  %1594 = vdwg.mxu0
  %v1596 = vsel %vm145, %v80, 0
  %1598 = vmatpush.msra.mxu0 0.0
  %1599 = vmatpush.msra.mxu0 0.0
  %1600 = vmatpush.msra.mxu0 0.0
  %1601 = vmatpush.msra.mxu0 0.0
  %1602 = vmatpush.msra.mxu0 0.0
  %1603 = vmatpush.msra.mxu0 0.0
  %1604 = vmatpush.msra.mxu0 0.0
  %1605 = vmatpush.msra.mxu0 0.0
  %1606 = vmatpush.msra.mxu0 0.0
  %1607 = vmatpush.msra.mxu0 0.0
  %1608 = vmatpush.msra.mxu0 0.0
  %1609 = vmatpush.msra.mxu0 0.0
  %1610 = vmatpush.msra.mxu0 0.0
  %1611 = vmatpush.msra.mxu0 0.0
  %1612 = vmatpush.msra.mxu0 0.0
  %1613 = vmatpush.msra.mxu0 %v144
  %1614 = vmatmul.f32.gmra.mxu0 %v1596
  %v1615 = vpop.f32.mrf.mxu0
  %v1616 = vadd.f32 0.0, %v1615
  %1617 = vdwg.mxu0
  %1618 = vmatpush.msra.mxu0 0.0
  %1619 = vmatpush.msra.mxu0 0.0
  %1620 = vmatpush.msra.mxu0 0.0
  %1621 = vmatpush.msra.mxu0 0.0
  %1622 = vmatpush.msra.mxu0 0.0
  %1623 = vmatpush.msra.mxu0 0.0
  %1624 = vmatpush.msra.mxu0 0.0
  %1625 = vmatpush.msra.mxu0 0.0
  %1626 = vmatpush.msra.mxu0 0.0
  %1627 = vmatpush.msra.mxu0 0.0
  %1628 = vmatpush.msra.mxu0 0.0
  %1629 = vmatpush.msra.mxu0 0.0
  %1630 = vmatpush.msra.mxu0 0.0
  %1631 = vmatpush.msra.mxu0 0.0
  %1632 = vmatpush.msra.mxu0 0.0
  %1633 = vmatpush.msra.mxu0 %v81
  %1634 = vmatmul.f32.gmra.mxu0 %v883
  %v1635 = vpop.f32.mrf.mxu0
  %v1636 = vadd.f32 0.0, %v1635
  %1637 = vdwg.mxu0
  %1638 = vmatpush.msra.mxu0 0.0
  %1639 = vmatpush.msra.mxu0 0.0
  %1640 = vmatpush.msra.mxu0 0.0
  %1641 = vmatpush.msra.mxu0 0.0
  %1642 = vmatpush.msra.mxu0 0.0
  %1643 = vmatpush.msra.mxu0 0.0
  %1644 = vmatpush.msra.mxu0 0.0
  %1645 = vmatpush.msra.mxu0 0.0
  %1646 = vmatpush.msra.mxu0 0.0
  %1647 = vmatpush.msra.mxu0 0.0
  %1648 = vmatpush.msra.mxu0 0.0
  %1649 = vmatpush.msra.mxu0 0.0
  %1650 = vmatpush.msra.mxu0 0.0
  %1651 = vmatpush.msra.mxu0 0.0
  %1652 = vmatpush.msra.mxu0 0.0
  %1653 = vmatpush.msra.mxu0 %v82
  %1654 = vmatmul.f32.gmra.mxu0 %v906
  %v1655 = vpop.f32.mrf.mxu0
  %v1656 = vadd.f32 0.0, %v1655
  %1657 = vdwg.mxu0
  %1658 = vmatpush.msra.mxu0 0.0
  %1659 = vmatpush.msra.mxu0 0.0
  %1660 = vmatpush.msra.mxu0 0.0
  %1661 = vmatpush.msra.mxu0 0.0
  %1662 = vmatpush.msra.mxu0 0.0
  %1663 = vmatpush.msra.mxu0 0.0
  %1664 = vmatpush.msra.mxu0 0.0
  %1665 = vmatpush.msra.mxu0 0.0
  %1666 = vmatpush.msra.mxu0 0.0
  %1667 = vmatpush.msra.mxu0 0.0
  %1668 = vmatpush.msra.mxu0 0.0
  %1669 = vmatpush.msra.mxu0 0.0
  %1670 = vmatpush.msra.mxu0 0.0
  %1671 = vmatpush.msra.mxu0 0.0
  %1672 = vmatpush.msra.mxu0 0.0
  %1673 = vmatpush.msra.mxu0 %v83
  %1674 = vmatmul.f32.gmra.mxu0 %v929
  %v1675 = vpop.f32.mrf.mxu0
  %v1676 = vadd.f32 0.0, %v1675
  %1677 = vdwg.mxu0
  %1678 = vmatpush.msra.mxu0 0.0
  %1679 = vmatpush.msra.mxu0 0.0
  %1680 = vmatpush.msra.mxu0 0.0
  %1681 = vmatpush.msra.mxu0 0.0
  %1682 = vmatpush.msra.mxu0 0.0
  %1683 = vmatpush.msra.mxu0 0.0
  %1684 = vmatpush.msra.mxu0 0.0
  %1685 = vmatpush.msra.mxu0 0.0
  %1686 = vmatpush.msra.mxu0 0.0
  %1687 = vmatpush.msra.mxu0 0.0
  %1688 = vmatpush.msra.mxu0 0.0
  %1689 = vmatpush.msra.mxu0 0.0
  %1690 = vmatpush.msra.mxu0 0.0
  %1691 = vmatpush.msra.mxu0 0.0
  %1692 = vmatpush.msra.mxu0 0.0
  %1693 = vmatpush.msra.mxu0 %v84
  %1694 = vmatmul.f32.gmra.mxu0 %v952
  %v1695 = vpop.f32.mrf.mxu0
  %v1696 = vadd.f32 0.0, %v1695
  %1697 = vdwg.mxu0
  %1698 = vmatpush.msra.mxu0 0.0
  %1699 = vmatpush.msra.mxu0 0.0
  %1700 = vmatpush.msra.mxu0 0.0
  %1701 = vmatpush.msra.mxu0 0.0
  %1702 = vmatpush.msra.mxu0 0.0
  %1703 = vmatpush.msra.mxu0 0.0
  %1704 = vmatpush.msra.mxu0 0.0
  %1705 = vmatpush.msra.mxu0 0.0
  %1706 = vmatpush.msra.mxu0 0.0
  %1707 = vmatpush.msra.mxu0 0.0
  %1708 = vmatpush.msra.mxu0 0.0
  %1709 = vmatpush.msra.mxu0 0.0
  %1710 = vmatpush.msra.mxu0 0.0
  %1711 = vmatpush.msra.mxu0 0.0
  %1712 = vmatpush.msra.mxu0 0.0
  %1713 = vmatpush.msra.mxu0 %v85
  %1714 = vmatmul.f32.gmra.mxu0 %v975
  %v1715 = vpop.f32.mrf.mxu0
  %v1716 = vadd.f32 0.0, %v1715
  %1717 = vdwg.mxu0
  %1718 = vmatpush.msra.mxu0 0.0
  %1719 = vmatpush.msra.mxu0 0.0
  %1720 = vmatpush.msra.mxu0 0.0
  %1721 = vmatpush.msra.mxu0 0.0
  %1722 = vmatpush.msra.mxu0 0.0
  %1723 = vmatpush.msra.mxu0 0.0
  %1724 = vmatpush.msra.mxu0 0.0
  %1725 = vmatpush.msra.mxu0 0.0
  %1726 = vmatpush.msra.mxu0 0.0
  %1727 = vmatpush.msra.mxu0 0.0
  %1728 = vmatpush.msra.mxu0 0.0
  %1729 = vmatpush.msra.mxu0 0.0
  %1730 = vmatpush.msra.mxu0 0.0
  %1731 = vmatpush.msra.mxu0 0.0
  %1732 = vmatpush.msra.mxu0 0.0
  %1733 = vmatpush.msra.mxu0 %v86
  %1734 = vmatmul.f32.gmra.mxu0 %v998
  %v1735 = vpop.f32.mrf.mxu0
  %v1736 = vadd.f32 0.0, %v1735
  %1737 = vdwg.mxu0
  %1738 = vmatpush.msra.mxu0 0.0
  %1739 = vmatpush.msra.mxu0 0.0
  %1740 = vmatpush.msra.mxu0 0.0
  %1741 = vmatpush.msra.mxu0 0.0
  %1742 = vmatpush.msra.mxu0 0.0
  %1743 = vmatpush.msra.mxu0 0.0
  %1744 = vmatpush.msra.mxu0 0.0
  %1745 = vmatpush.msra.mxu0 0.0
  %1746 = vmatpush.msra.mxu0 0.0
  %1747 = vmatpush.msra.mxu0 0.0
  %1748 = vmatpush.msra.mxu0 0.0
  %1749 = vmatpush.msra.mxu0 0.0
  %1750 = vmatpush.msra.mxu0 0.0
  %1751 = vmatpush.msra.mxu0 0.0
  %1752 = vmatpush.msra.mxu0 0.0
  %1753 = vmatpush.msra.mxu0 %v87
  %1754 = vmatmul.f32.gmra.mxu0 %v1021
  %v1755 = vpop.f32.mrf.mxu0
  %v1756 = vadd.f32 0.0, %v1755
  %1757 = vdwg.mxu0
  %1758 = vmatpush.msra.mxu0 0.0
  %1759 = vmatpush.msra.mxu0 0.0
  %1760 = vmatpush.msra.mxu0 0.0
  %1761 = vmatpush.msra.mxu0 0.0
  %1762 = vmatpush.msra.mxu0 0.0
  %1763 = vmatpush.msra.mxu0 0.0
  %1764 = vmatpush.msra.mxu0 0.0
  %1765 = vmatpush.msra.mxu0 0.0
  %1766 = vmatpush.msra.mxu0 0.0
  %1767 = vmatpush.msra.mxu0 0.0
  %1768 = vmatpush.msra.mxu0 0.0
  %1769 = vmatpush.msra.mxu0 0.0
  %1770 = vmatpush.msra.mxu0 0.0
  %1771 = vmatpush.msra.mxu0 0.0
  %1772 = vmatpush.msra.mxu0 0.0
  %1773 = vmatpush.msra.mxu0 %v88
  %1774 = vmatmul.f32.gmra.mxu0 %v1044
  %v1775 = vpop.f32.mrf.mxu0
  %v1776 = vadd.f32 0.0, %v1775
  %1777 = vdwg.mxu0
  %1778 = vmatpush.msra.mxu0 0.0
  %1779 = vmatpush.msra.mxu0 0.0
  %1780 = vmatpush.msra.mxu0 0.0
  %1781 = vmatpush.msra.mxu0 0.0
  %1782 = vmatpush.msra.mxu0 0.0
  %1783 = vmatpush.msra.mxu0 0.0
  %1784 = vmatpush.msra.mxu0 0.0
  %1785 = vmatpush.msra.mxu0 0.0
  %1786 = vmatpush.msra.mxu0 0.0
  %1787 = vmatpush.msra.mxu0 0.0
  %1788 = vmatpush.msra.mxu0 0.0
  %1789 = vmatpush.msra.mxu0 0.0
  %1790 = vmatpush.msra.mxu0 0.0
  %1791 = vmatpush.msra.mxu0 0.0
  %1792 = vmatpush.msra.mxu0 0.0
  %1793 = vmatpush.msra.mxu0 %v89
  %1794 = vmatmul.f32.gmra.mxu0 %v1067
  %v1795 = vpop.f32.mrf.mxu0
  %v1796 = vadd.f32 0.0, %v1795
  %1797 = vdwg.mxu0
  %1798 = vmatpush.msra.mxu0 0.0
  %1799 = vmatpush.msra.mxu0 0.0
  %1800 = vmatpush.msra.mxu0 0.0
  %1801 = vmatpush.msra.mxu0 0.0
  %1802 = vmatpush.msra.mxu0 0.0
  %1803 = vmatpush.msra.mxu0 0.0
  %1804 = vmatpush.msra.mxu0 0.0
  %1805 = vmatpush.msra.mxu0 0.0
  %1806 = vmatpush.msra.mxu0 0.0
  %1807 = vmatpush.msra.mxu0 0.0
  %1808 = vmatpush.msra.mxu0 0.0
  %1809 = vmatpush.msra.mxu0 0.0
  %1810 = vmatpush.msra.mxu0 0.0
  %1811 = vmatpush.msra.mxu0 0.0
  %1812 = vmatpush.msra.mxu0 0.0
  %1813 = vmatpush.msra.mxu0 %v90
  %1814 = vmatmul.f32.gmra.mxu0 %v1090
  %v1815 = vpop.f32.mrf.mxu0
  %v1816 = vadd.f32 0.0, %v1815
  %1817 = vdwg.mxu0
  %1818 = vmatpush.msra.mxu0 0.0
  %1819 = vmatpush.msra.mxu0 0.0
  %1820 = vmatpush.msra.mxu0 0.0
  %1821 = vmatpush.msra.mxu0 0.0
  %1822 = vmatpush.msra.mxu0 0.0
  %1823 = vmatpush.msra.mxu0 0.0
  %1824 = vmatpush.msra.mxu0 0.0
  %1825 = vmatpush.msra.mxu0 0.0
  %1826 = vmatpush.msra.mxu0 0.0
  %1827 = vmatpush.msra.mxu0 0.0
  %1828 = vmatpush.msra.mxu0 0.0
  %1829 = vmatpush.msra.mxu0 0.0
  %1830 = vmatpush.msra.mxu0 0.0
  %1831 = vmatpush.msra.mxu0 0.0
  %1832 = vmatpush.msra.mxu0 0.0
  %1833 = vmatpush.msra.mxu0 %v91
  %1834 = vmatmul.f32.gmra.mxu0 %v1113
  %v1835 = vpop.f32.mrf.mxu0
  %v1836 = vadd.f32 0.0, %v1835
  %1837 = vdwg.mxu0
  %1838 = vmatpush.msra.mxu0 0.0
  %1839 = vmatpush.msra.mxu0 0.0
  %1840 = vmatpush.msra.mxu0 0.0
  %1841 = vmatpush.msra.mxu0 0.0
  %1842 = vmatpush.msra.mxu0 0.0
  %1843 = vmatpush.msra.mxu0 0.0
  %1844 = vmatpush.msra.mxu0 0.0
  %1845 = vmatpush.msra.mxu0 0.0
  %1846 = vmatpush.msra.mxu0 0.0
  %1847 = vmatpush.msra.mxu0 0.0
  %1848 = vmatpush.msra.mxu0 0.0
  %1849 = vmatpush.msra.mxu0 0.0
  %1850 = vmatpush.msra.mxu0 0.0
  %1851 = vmatpush.msra.mxu0 0.0
  %1852 = vmatpush.msra.mxu0 0.0
  %1853 = vmatpush.msra.mxu0 %v92
  %1854 = vmatmul.f32.gmra.mxu0 %v1136
  %v1855 = vpop.f32.mrf.mxu0
  %v1856 = vadd.f32 0.0, %v1855
  %1857 = vdwg.mxu0
  %1858 = vmatpush.msra.mxu0 0.0
  %1859 = vmatpush.msra.mxu0 0.0
  %1860 = vmatpush.msra.mxu0 0.0
  %1861 = vmatpush.msra.mxu0 0.0
  %1862 = vmatpush.msra.mxu0 0.0
  %1863 = vmatpush.msra.mxu0 0.0
  %1864 = vmatpush.msra.mxu0 0.0
  %1865 = vmatpush.msra.mxu0 0.0
  %1866 = vmatpush.msra.mxu0 0.0
  %1867 = vmatpush.msra.mxu0 0.0
  %1868 = vmatpush.msra.mxu0 0.0
  %1869 = vmatpush.msra.mxu0 0.0
  %1870 = vmatpush.msra.mxu0 0.0
  %1871 = vmatpush.msra.mxu0 0.0
  %1872 = vmatpush.msra.mxu0 0.0
  %1873 = vmatpush.msra.mxu0 %v93
  %1874 = vmatmul.f32.gmra.mxu0 %v1159
  %v1875 = vpop.f32.mrf.mxu0
  %v1876 = vadd.f32 0.0, %v1875
  %1877 = vdwg.mxu0
  %1878 = vmatpush.msra.mxu0 0.0
  %1879 = vmatpush.msra.mxu0 0.0
  %1880 = vmatpush.msra.mxu0 0.0
  %1881 = vmatpush.msra.mxu0 0.0
  %1882 = vmatpush.msra.mxu0 0.0
  %1883 = vmatpush.msra.mxu0 0.0
  %1884 = vmatpush.msra.mxu0 0.0
  %1885 = vmatpush.msra.mxu0 0.0
  %1886 = vmatpush.msra.mxu0 0.0
  %1887 = vmatpush.msra.mxu0 0.0
  %1888 = vmatpush.msra.mxu0 0.0
  %1889 = vmatpush.msra.mxu0 0.0
  %1890 = vmatpush.msra.mxu0 0.0
  %1891 = vmatpush.msra.mxu0 0.0
  %1892 = vmatpush.msra.mxu0 0.0
  %1893 = vmatpush.msra.mxu0 %v94
  %1894 = vmatmul.f32.gmra.mxu0 %v1182
  %v1895 = vpop.f32.mrf.mxu0
  %v1896 = vadd.f32 0.0, %v1895
  %1897 = vdwg.mxu0
  %1898 = vmatpush.msra.mxu0 0.0
  %1899 = vmatpush.msra.mxu0 0.0
  %1900 = vmatpush.msra.mxu0 0.0
  %1901 = vmatpush.msra.mxu0 0.0
  %1902 = vmatpush.msra.mxu0 0.0
  %1903 = vmatpush.msra.mxu0 0.0
  %1904 = vmatpush.msra.mxu0 0.0
  %1905 = vmatpush.msra.mxu0 0.0
  %1906 = vmatpush.msra.mxu0 0.0
  %1907 = vmatpush.msra.mxu0 0.0
  %1908 = vmatpush.msra.mxu0 0.0
  %1909 = vmatpush.msra.mxu0 0.0
  %1910 = vmatpush.msra.mxu0 0.0
  %1911 = vmatpush.msra.mxu0 0.0
  %1912 = vmatpush.msra.mxu0 0.0
  %1913 = vmatpush.msra.mxu0 %v95
  %1914 = vmatmul.f32.gmra.mxu0 %v1205
  %v1915 = vpop.f32.mrf.mxu0
  %v1916 = vadd.f32 0.0, %v1915
  %1917 = vdwg.mxu0
  %1918 = vmatpush.msra.mxu0 0.0
  %1919 = vmatpush.msra.mxu0 0.0
  %1920 = vmatpush.msra.mxu0 0.0
  %1921 = vmatpush.msra.mxu0 0.0
  %1922 = vmatpush.msra.mxu0 0.0
  %1923 = vmatpush.msra.mxu0 0.0
  %1924 = vmatpush.msra.mxu0 0.0
  %1925 = vmatpush.msra.mxu0 0.0
  %1926 = vmatpush.msra.mxu0 0.0
  %1927 = vmatpush.msra.mxu0 0.0
  %1928 = vmatpush.msra.mxu0 0.0
  %1929 = vmatpush.msra.mxu0 0.0
  %1930 = vmatpush.msra.mxu0 0.0
  %1931 = vmatpush.msra.mxu0 0.0
  %1932 = vmatpush.msra.mxu0 0.0
  %1933 = vmatpush.msra.mxu0 %v96
  %1934 = vmatmul.f32.gmra.mxu0 %v1228
  %v1935 = vpop.f32.mrf.mxu0
  %v1936 = vadd.f32 0.0, %v1935
  %1937 = vdwg.mxu0
  %1938 = vmatpush.msra.mxu0 0.0
  %1939 = vmatpush.msra.mxu0 0.0
  %1940 = vmatpush.msra.mxu0 0.0
  %1941 = vmatpush.msra.mxu0 0.0
  %1942 = vmatpush.msra.mxu0 0.0
  %1943 = vmatpush.msra.mxu0 0.0
  %1944 = vmatpush.msra.mxu0 0.0
  %1945 = vmatpush.msra.mxu0 0.0
  %1946 = vmatpush.msra.mxu0 0.0
  %1947 = vmatpush.msra.mxu0 0.0
  %1948 = vmatpush.msra.mxu0 0.0
  %1949 = vmatpush.msra.mxu0 0.0
  %1950 = vmatpush.msra.mxu0 0.0
  %1951 = vmatpush.msra.mxu0 0.0
  %1952 = vmatpush.msra.mxu0 0.0
  %1953 = vmatpush.msra.mxu0 %v97
  %1954 = vmatmul.f32.gmra.mxu0 %v1251
  %v1955 = vpop.f32.mrf.mxu0
  %v1956 = vadd.f32 0.0, %v1955
  %1957 = vdwg.mxu0
  %1958 = vmatpush.msra.mxu0 0.0
  %1959 = vmatpush.msra.mxu0 0.0
  %1960 = vmatpush.msra.mxu0 0.0
  %1961 = vmatpush.msra.mxu0 0.0
  %1962 = vmatpush.msra.mxu0 0.0
  %1963 = vmatpush.msra.mxu0 0.0
  %1964 = vmatpush.msra.mxu0 0.0
  %1965 = vmatpush.msra.mxu0 0.0
  %1966 = vmatpush.msra.mxu0 0.0
  %1967 = vmatpush.msra.mxu0 0.0
  %1968 = vmatpush.msra.mxu0 0.0
  %1969 = vmatpush.msra.mxu0 0.0
  %1970 = vmatpush.msra.mxu0 0.0
  %1971 = vmatpush.msra.mxu0 0.0
  %1972 = vmatpush.msra.mxu0 0.0
  %1973 = vmatpush.msra.mxu0 %v98
  %1974 = vmatmul.f32.gmra.mxu0 %v1274
  %v1975 = vpop.f32.mrf.mxu0
  %v1976 = vadd.f32 0.0, %v1975
  %1977 = vdwg.mxu0
  %1978 = vmatpush.msra.mxu0 0.0
  %1979 = vmatpush.msra.mxu0 0.0
  %1980 = vmatpush.msra.mxu0 0.0
  %1981 = vmatpush.msra.mxu0 0.0
  %1982 = vmatpush.msra.mxu0 0.0
  %1983 = vmatpush.msra.mxu0 0.0
  %1984 = vmatpush.msra.mxu0 0.0
  %1985 = vmatpush.msra.mxu0 0.0
  %1986 = vmatpush.msra.mxu0 0.0
  %1987 = vmatpush.msra.mxu0 0.0
  %1988 = vmatpush.msra.mxu0 0.0
  %1989 = vmatpush.msra.mxu0 0.0
  %1990 = vmatpush.msra.mxu0 0.0
  %1991 = vmatpush.msra.mxu0 0.0
  %1992 = vmatpush.msra.mxu0 0.0
  %1993 = vmatpush.msra.mxu0 %v99
  %1994 = vmatmul.f32.gmra.mxu0 %v1297
  %v1995 = vpop.f32.mrf.mxu0
  %v1996 = vadd.f32 0.0, %v1995
  %1997 = vdwg.mxu0
  %1998 = vmatpush.msra.mxu0 0.0
  %1999 = vmatpush.msra.mxu0 0.0
  %2000 = vmatpush.msra.mxu0 0.0
  %2001 = vmatpush.msra.mxu0 0.0
  %2002 = vmatpush.msra.mxu0 0.0
  %2003 = vmatpush.msra.mxu0 0.0
  %2004 = vmatpush.msra.mxu0 0.0
  %2005 = vmatpush.msra.mxu0 0.0
  %2006 = vmatpush.msra.mxu0 0.0
  %2007 = vmatpush.msra.mxu0 0.0
  %2008 = vmatpush.msra.mxu0 0.0
  %2009 = vmatpush.msra.mxu0 0.0
  %2010 = vmatpush.msra.mxu0 0.0
  %2011 = vmatpush.msra.mxu0 0.0
  %2012 = vmatpush.msra.mxu0 0.0
  %2013 = vmatpush.msra.mxu0 %v100
  %2014 = vmatmul.f32.gmra.mxu0 %v1320
  %v2015 = vpop.f32.mrf.mxu0
  %v2016 = vadd.f32 0.0, %v2015
  %2017 = vdwg.mxu0
  %2018 = vmatpush.msra.mxu0 0.0
  %2019 = vmatpush.msra.mxu0 0.0
  %2020 = vmatpush.msra.mxu0 0.0
  %2021 = vmatpush.msra.mxu0 0.0
  %2022 = vmatpush.msra.mxu0 0.0
  %2023 = vmatpush.msra.mxu0 0.0
  %2024 = vmatpush.msra.mxu0 0.0
  %2025 = vmatpush.msra.mxu0 0.0
  %2026 = vmatpush.msra.mxu0 0.0
  %2027 = vmatpush.msra.mxu0 0.0
  %2028 = vmatpush.msra.mxu0 0.0
  %2029 = vmatpush.msra.mxu0 0.0
  %2030 = vmatpush.msra.mxu0 0.0
  %2031 = vmatpush.msra.mxu0 0.0
  %2032 = vmatpush.msra.mxu0 0.0
  %2033 = vmatpush.msra.mxu0 %v101
  %2034 = vmatmul.f32.gmra.mxu0 %v1343
  %v2035 = vpop.f32.mrf.mxu0
  %v2036 = vadd.f32 0.0, %v2035
  %2037 = vdwg.mxu0
  %2038 = vmatpush.msra.mxu0 0.0
  %2039 = vmatpush.msra.mxu0 0.0
  %2040 = vmatpush.msra.mxu0 0.0
  %2041 = vmatpush.msra.mxu0 0.0
  %2042 = vmatpush.msra.mxu0 0.0
  %2043 = vmatpush.msra.mxu0 0.0
  %2044 = vmatpush.msra.mxu0 0.0
  %2045 = vmatpush.msra.mxu0 0.0
  %2046 = vmatpush.msra.mxu0 0.0
  %2047 = vmatpush.msra.mxu0 0.0
  %2048 = vmatpush.msra.mxu0 0.0
  %2049 = vmatpush.msra.mxu0 0.0
  %2050 = vmatpush.msra.mxu0 0.0
  %2051 = vmatpush.msra.mxu0 0.0
  %2052 = vmatpush.msra.mxu0 0.0
  %2053 = vmatpush.msra.mxu0 %v102
  %2054 = vmatmul.f32.gmra.mxu0 %v1366
  %v2055 = vpop.f32.mrf.mxu0
  %v2056 = vadd.f32 0.0, %v2055
  %2057 = vdwg.mxu0
  %2058 = vmatpush.msra.mxu0 0.0
  %2059 = vmatpush.msra.mxu0 0.0
  %2060 = vmatpush.msra.mxu0 0.0
  %2061 = vmatpush.msra.mxu0 0.0
  %2062 = vmatpush.msra.mxu0 0.0
  %2063 = vmatpush.msra.mxu0 0.0
  %2064 = vmatpush.msra.mxu0 0.0
  %2065 = vmatpush.msra.mxu0 0.0
  %2066 = vmatpush.msra.mxu0 0.0
  %2067 = vmatpush.msra.mxu0 0.0
  %2068 = vmatpush.msra.mxu0 0.0
  %2069 = vmatpush.msra.mxu0 0.0
  %2070 = vmatpush.msra.mxu0 0.0
  %2071 = vmatpush.msra.mxu0 0.0
  %2072 = vmatpush.msra.mxu0 0.0
  %2073 = vmatpush.msra.mxu0 %v103
  %2074 = vmatmul.f32.gmra.mxu0 %v1389
  %v2075 = vpop.f32.mrf.mxu0
  %v2076 = vadd.f32 0.0, %v2075
  %2077 = vdwg.mxu0
  %2078 = vmatpush.msra.mxu0 0.0
  %2079 = vmatpush.msra.mxu0 0.0
  %2080 = vmatpush.msra.mxu0 0.0
  %2081 = vmatpush.msra.mxu0 0.0
  %2082 = vmatpush.msra.mxu0 0.0
  %2083 = vmatpush.msra.mxu0 0.0
  %2084 = vmatpush.msra.mxu0 0.0
  %2085 = vmatpush.msra.mxu0 0.0
  %2086 = vmatpush.msra.mxu0 0.0
  %2087 = vmatpush.msra.mxu0 0.0
  %2088 = vmatpush.msra.mxu0 0.0
  %2089 = vmatpush.msra.mxu0 0.0
  %2090 = vmatpush.msra.mxu0 0.0
  %2091 = vmatpush.msra.mxu0 0.0
  %2092 = vmatpush.msra.mxu0 0.0
  %2093 = vmatpush.msra.mxu0 %v104
  %2094 = vmatmul.f32.gmra.mxu0 %v1412
  %v2095 = vpop.f32.mrf.mxu0
  %v2096 = vadd.f32 0.0, %v2095
  %2097 = vdwg.mxu0
  %2098 = vmatpush.msra.mxu0 0.0
  %2099 = vmatpush.msra.mxu0 0.0
  %2100 = vmatpush.msra.mxu0 0.0
  %2101 = vmatpush.msra.mxu0 0.0
  %2102 = vmatpush.msra.mxu0 0.0
  %2103 = vmatpush.msra.mxu0 0.0
  %2104 = vmatpush.msra.mxu0 0.0
  %2105 = vmatpush.msra.mxu0 0.0
  %2106 = vmatpush.msra.mxu0 0.0
  %2107 = vmatpush.msra.mxu0 0.0
  %2108 = vmatpush.msra.mxu0 0.0
  %2109 = vmatpush.msra.mxu0 0.0
  %2110 = vmatpush.msra.mxu0 0.0
  %2111 = vmatpush.msra.mxu0 0.0
  %2112 = vmatpush.msra.mxu0 0.0
  %2113 = vmatpush.msra.mxu0 %v105
  %2114 = vmatmul.f32.gmra.mxu0 %v1435
  %v2115 = vpop.f32.mrf.mxu0
  %v2116 = vadd.f32 0.0, %v2115
  %2117 = vdwg.mxu0
  %2118 = vmatpush.msra.mxu0 0.0
  %2119 = vmatpush.msra.mxu0 0.0
  %2120 = vmatpush.msra.mxu0 0.0
  %2121 = vmatpush.msra.mxu0 0.0
  %2122 = vmatpush.msra.mxu0 0.0
  %2123 = vmatpush.msra.mxu0 0.0
  %2124 = vmatpush.msra.mxu0 0.0
  %2125 = vmatpush.msra.mxu0 0.0
  %2126 = vmatpush.msra.mxu0 0.0
  %2127 = vmatpush.msra.mxu0 0.0
  %2128 = vmatpush.msra.mxu0 0.0
  %2129 = vmatpush.msra.mxu0 0.0
  %2130 = vmatpush.msra.mxu0 0.0
  %2131 = vmatpush.msra.mxu0 0.0
  %2132 = vmatpush.msra.mxu0 0.0
  %2133 = vmatpush.msra.mxu0 %v106
  %2134 = vmatmul.f32.gmra.mxu0 %v1458
  %v2135 = vpop.f32.mrf.mxu0
  %v2136 = vadd.f32 0.0, %v2135
  %2137 = vdwg.mxu0
  %2138 = vmatpush.msra.mxu0 0.0
  %2139 = vmatpush.msra.mxu0 0.0
  %2140 = vmatpush.msra.mxu0 0.0
  %2141 = vmatpush.msra.mxu0 0.0
  %2142 = vmatpush.msra.mxu0 0.0
  %2143 = vmatpush.msra.mxu0 0.0
  %2144 = vmatpush.msra.mxu0 0.0
  %2145 = vmatpush.msra.mxu0 0.0
  %2146 = vmatpush.msra.mxu0 0.0
  %2147 = vmatpush.msra.mxu0 0.0
  %2148 = vmatpush.msra.mxu0 0.0
  %2149 = vmatpush.msra.mxu0 0.0
  %2150 = vmatpush.msra.mxu0 0.0
  %2151 = vmatpush.msra.mxu0 0.0
  %2152 = vmatpush.msra.mxu0 0.0
  %2153 = vmatpush.msra.mxu0 %v107
  %2154 = vmatmul.f32.gmra.mxu0 %v1481
  %v2155 = vpop.f32.mrf.mxu0
  %v2156 = vadd.f32 0.0, %v2155
  %2157 = vdwg.mxu0
  %2158 = vmatpush.msra.mxu0 0.0
  %2159 = vmatpush.msra.mxu0 0.0
  %2160 = vmatpush.msra.mxu0 0.0
  %2161 = vmatpush.msra.mxu0 0.0
  %2162 = vmatpush.msra.mxu0 0.0
  %2163 = vmatpush.msra.mxu0 0.0
  %2164 = vmatpush.msra.mxu0 0.0
  %2165 = vmatpush.msra.mxu0 0.0
  %2166 = vmatpush.msra.mxu0 0.0
  %2167 = vmatpush.msra.mxu0 0.0
  %2168 = vmatpush.msra.mxu0 0.0
  %2169 = vmatpush.msra.mxu0 0.0
  %2170 = vmatpush.msra.mxu0 0.0
  %2171 = vmatpush.msra.mxu0 0.0
  %2172 = vmatpush.msra.mxu0 0.0
  %2173 = vmatpush.msra.mxu0 %v108
  %2174 = vmatmul.f32.gmra.mxu0 %v1504
  %v2175 = vpop.f32.mrf.mxu0
  %v2176 = vadd.f32 0.0, %v2175
  %2177 = vdwg.mxu0
  %2178 = vmatpush.msra.mxu0 0.0
  %2179 = vmatpush.msra.mxu0 0.0
  %2180 = vmatpush.msra.mxu0 0.0
  %2181 = vmatpush.msra.mxu0 0.0
  %2182 = vmatpush.msra.mxu0 0.0
  %2183 = vmatpush.msra.mxu0 0.0
  %2184 = vmatpush.msra.mxu0 0.0
  %2185 = vmatpush.msra.mxu0 0.0
  %2186 = vmatpush.msra.mxu0 0.0
  %2187 = vmatpush.msra.mxu0 0.0
  %2188 = vmatpush.msra.mxu0 0.0
  %2189 = vmatpush.msra.mxu0 0.0
  %2190 = vmatpush.msra.mxu0 0.0
  %2191 = vmatpush.msra.mxu0 0.0
  %2192 = vmatpush.msra.mxu0 0.0
  %2193 = vmatpush.msra.mxu0 %v109
  %2194 = vmatmul.f32.gmra.mxu0 %v1527
  %v2195 = vpop.f32.mrf.mxu0
  %v2196 = vadd.f32 0.0, %v2195
  %2197 = vdwg.mxu0
  %2198 = vmatpush.msra.mxu0 0.0
  %2199 = vmatpush.msra.mxu0 0.0
  %2200 = vmatpush.msra.mxu0 0.0
  %2201 = vmatpush.msra.mxu0 0.0
  %2202 = vmatpush.msra.mxu0 0.0
  %2203 = vmatpush.msra.mxu0 0.0
  %2204 = vmatpush.msra.mxu0 0.0
  %2205 = vmatpush.msra.mxu0 0.0
  %2206 = vmatpush.msra.mxu0 0.0
  %2207 = vmatpush.msra.mxu0 0.0
  %2208 = vmatpush.msra.mxu0 0.0
  %2209 = vmatpush.msra.mxu0 0.0
  %2210 = vmatpush.msra.mxu0 0.0
  %2211 = vmatpush.msra.mxu0 0.0
  %2212 = vmatpush.msra.mxu0 0.0
  %2213 = vmatpush.msra.mxu0 %v110
  %2214 = vmatmul.f32.gmra.mxu0 %v1550
  %v2215 = vpop.f32.mrf.mxu0
  %v2216 = vadd.f32 0.0, %v2215
  %2217 = vdwg.mxu0
  %2218 = vmatpush.msra.mxu0 0.0
  %2219 = vmatpush.msra.mxu0 0.0
  %2220 = vmatpush.msra.mxu0 0.0
  %2221 = vmatpush.msra.mxu0 0.0
  %2222 = vmatpush.msra.mxu0 0.0
  %2223 = vmatpush.msra.mxu0 0.0
  %2224 = vmatpush.msra.mxu0 0.0
  %2225 = vmatpush.msra.mxu0 0.0
  %2226 = vmatpush.msra.mxu0 0.0
  %2227 = vmatpush.msra.mxu0 0.0
  %2228 = vmatpush.msra.mxu0 0.0
  %2229 = vmatpush.msra.mxu0 0.0
  %2230 = vmatpush.msra.mxu0 0.0
  %2231 = vmatpush.msra.mxu0 0.0
  %2232 = vmatpush.msra.mxu0 0.0
  %2233 = vmatpush.msra.mxu0 %v111
  %2234 = vmatmul.f32.gmra.mxu0 %v1573
  %v2235 = vpop.f32.mrf.mxu0
  %v2236 = vadd.f32 0.0, %v2235
  %2237 = vdwg.mxu0
  %2238 = vmatpush.msra.mxu0 0.0
  %2239 = vmatpush.msra.mxu0 0.0
  %2240 = vmatpush.msra.mxu0 0.0
  %2241 = vmatpush.msra.mxu0 0.0
  %2242 = vmatpush.msra.mxu0 0.0
  %2243 = vmatpush.msra.mxu0 0.0
  %2244 = vmatpush.msra.mxu0 0.0
  %2245 = vmatpush.msra.mxu0 0.0
  %2246 = vmatpush.msra.mxu0 0.0
  %2247 = vmatpush.msra.mxu0 0.0
  %2248 = vmatpush.msra.mxu0 0.0
  %2249 = vmatpush.msra.mxu0 0.0
  %2250 = vmatpush.msra.mxu0 0.0
  %2251 = vmatpush.msra.mxu0 0.0
  %2252 = vmatpush.msra.mxu0 0.0
  %2253 = vmatpush.msra.mxu0 %v112
  %2254 = vmatmul.f32.gmra.mxu0 %v1596
  %v2255 = vpop.f32.mrf.mxu0
  %v2256 = vadd.f32 0.0, %v2255
  %2257 = vdwg.mxu0
  %v2258 = vsub.f32 %v167, %v903
  %v2259 = vsub.f32 %v190, %v926
  %v2260 = vsub.f32 %v213, %v949
  %v2261 = vsub.f32 %v236, %v972
  %v2262 = vsub.f32 %v259, %v995
  %v2263 = vsub.f32 %v282, %v1018
  %v2264 = vsub.f32 %v305, %v1041
  %v2265 = vsub.f32 %v328, %v1064
  %v2266 = vsub.f32 %v351, %v1087
  %v2267 = vsub.f32 %v374, %v1110
  %v2268 = vsub.f32 %v397, %v1133
  %v2269 = vsub.f32 %v420, %v1156
  %v2270 = vsub.f32 %v443, %v1179
  %v2271 = vsub.f32 %v466, %v1202
  %v2272 = vsub.f32 %v489, %v1225
  %v2273 = vsub.f32 %v512, %v1248
  %v2274 = vsub.f32 %v535, %v1271
  %v2275 = vsub.f32 %v558, %v1294
  %v2276 = vsub.f32 %v581, %v1317
  %v2277 = vsub.f32 %v604, %v1340
  %v2278 = vsub.f32 %v627, %v1363
  %v2279 = vsub.f32 %v650, %v1386
  %v2280 = vsub.f32 %v673, %v1409
  %v2281 = vsub.f32 %v696, %v1432
  %v2282 = vsub.f32 %v719, %v1455
  %v2283 = vsub.f32 %v742, %v1478
  %v2284 = vsub.f32 %v765, %v1501
  %v2285 = vsub.f32 %v788, %v1524
  %v2286 = vsub.f32 %v811, %v1547
  %v2287 = vsub.f32 %v834, %v1570
  %v2288 = vsub.f32 %v857, %v1593
  %v2289 = vsub.f32 %v880, %v1616
  %2290 = vmatpush.msra.mxu0 0.0
  %2291 = vmatpush.msra.mxu0 0.0
  %2292 = vmatpush.msra.mxu0 0.0
  %2293 = vmatpush.msra.mxu0 0.0
  %2294 = vmatpush.msra.mxu0 0.0
  %2295 = vmatpush.msra.mxu0 0.0
  %2296 = vmatpush.msra.mxu0 0.0
  %2297 = vmatpush.msra.mxu0 0.0
  %2298 = vmatpush.msra.mxu0 0.0
  %2299 = vmatpush.msra.mxu0 0.0
  %2300 = vmatpush.msra.mxu0 0.0
  %2301 = vmatpush.msra.mxu0 0.0
  %2302 = vmatpush.msra.mxu0 0.0
  %2303 = vmatpush.msra.mxu0 0.0
  %2304 = vmatpush.msra.mxu0 0.0
  %2305 = vmatpush.msra.mxu0 %v113
  %2306 = vmatmul.f32.gmra.mxu0 %v147
  %v2307 = vpop.f32.mrf.mxu0
  %v2308 = vadd.f32 %v1636, %v2307
  %2309 = vdwg.mxu0
  %2310 = vmatpush.msra.mxu0 0.0
  %2311 = vmatpush.msra.mxu0 0.0
  %2312 = vmatpush.msra.mxu0 0.0
  %2313 = vmatpush.msra.mxu0 0.0
  %2314 = vmatpush.msra.mxu0 0.0
  %2315 = vmatpush.msra.mxu0 0.0
  %2316 = vmatpush.msra.mxu0 0.0
  %2317 = vmatpush.msra.mxu0 0.0
  %2318 = vmatpush.msra.mxu0 0.0
  %2319 = vmatpush.msra.mxu0 0.0
  %2320 = vmatpush.msra.mxu0 0.0
  %2321 = vmatpush.msra.mxu0 0.0
  %2322 = vmatpush.msra.mxu0 0.0
  %2323 = vmatpush.msra.mxu0 0.0
  %2324 = vmatpush.msra.mxu0 0.0
  %2325 = vmatpush.msra.mxu0 %v114
  %2326 = vmatmul.f32.gmra.mxu0 %v170
  %v2327 = vpop.f32.mrf.mxu0
  %v2328 = vadd.f32 %v1656, %v2327
  %2329 = vdwg.mxu0
  %2330 = vmatpush.msra.mxu0 0.0
  %2331 = vmatpush.msra.mxu0 0.0
  %2332 = vmatpush.msra.mxu0 0.0
  %2333 = vmatpush.msra.mxu0 0.0
  %2334 = vmatpush.msra.mxu0 0.0
  %2335 = vmatpush.msra.mxu0 0.0
  %2336 = vmatpush.msra.mxu0 0.0
  %2337 = vmatpush.msra.mxu0 0.0
  %2338 = vmatpush.msra.mxu0 0.0
  %2339 = vmatpush.msra.mxu0 0.0
  %2340 = vmatpush.msra.mxu0 0.0
  %2341 = vmatpush.msra.mxu0 0.0
  %2342 = vmatpush.msra.mxu0 0.0
  %2343 = vmatpush.msra.mxu0 0.0
  %2344 = vmatpush.msra.mxu0 0.0
  %2345 = vmatpush.msra.mxu0 %v115
  %2346 = vmatmul.f32.gmra.mxu0 %v193
  %v2347 = vpop.f32.mrf.mxu0
  %v2348 = vadd.f32 %v1676, %v2347
  %2349 = vdwg.mxu0
  %2350 = vmatpush.msra.mxu0 0.0
  %2351 = vmatpush.msra.mxu0 0.0
  %2352 = vmatpush.msra.mxu0 0.0
  %2353 = vmatpush.msra.mxu0 0.0
  %2354 = vmatpush.msra.mxu0 0.0
  %2355 = vmatpush.msra.mxu0 0.0
  %2356 = vmatpush.msra.mxu0 0.0
  %2357 = vmatpush.msra.mxu0 0.0
  %2358 = vmatpush.msra.mxu0 0.0
  %2359 = vmatpush.msra.mxu0 0.0
  %2360 = vmatpush.msra.mxu0 0.0
  %2361 = vmatpush.msra.mxu0 0.0
  %2362 = vmatpush.msra.mxu0 0.0
  %2363 = vmatpush.msra.mxu0 0.0
  %2364 = vmatpush.msra.mxu0 0.0
  %2365 = vmatpush.msra.mxu0 %v116
  %2366 = vmatmul.f32.gmra.mxu0 %v216
  %v2367 = vpop.f32.mrf.mxu0
  %v2368 = vadd.f32 %v1696, %v2367
  %2369 = vdwg.mxu0
  %2370 = vmatpush.msra.mxu0 0.0
  %2371 = vmatpush.msra.mxu0 0.0
  %2372 = vmatpush.msra.mxu0 0.0
  %2373 = vmatpush.msra.mxu0 0.0
  %2374 = vmatpush.msra.mxu0 0.0
  %2375 = vmatpush.msra.mxu0 0.0
  %2376 = vmatpush.msra.mxu0 0.0
  %2377 = vmatpush.msra.mxu0 0.0
  %2378 = vmatpush.msra.mxu0 0.0
  %2379 = vmatpush.msra.mxu0 0.0
  %2380 = vmatpush.msra.mxu0 0.0
  %2381 = vmatpush.msra.mxu0 0.0
  %2382 = vmatpush.msra.mxu0 0.0
  %2383 = vmatpush.msra.mxu0 0.0
  %2384 = vmatpush.msra.mxu0 0.0
  %2385 = vmatpush.msra.mxu0 %v117
  %2386 = vmatmul.f32.gmra.mxu0 %v239
  %v2387 = vpop.f32.mrf.mxu0
  %v2388 = vadd.f32 %v1716, %v2387
  %2389 = vdwg.mxu0
  %2390 = vmatpush.msra.mxu0 0.0
  %2391 = vmatpush.msra.mxu0 0.0
  %2392 = vmatpush.msra.mxu0 0.0
  %2393 = vmatpush.msra.mxu0 0.0
  %2394 = vmatpush.msra.mxu0 0.0
  %2395 = vmatpush.msra.mxu0 0.0
  %2396 = vmatpush.msra.mxu0 0.0
  %2397 = vmatpush.msra.mxu0 0.0
  %2398 = vmatpush.msra.mxu0 0.0
  %2399 = vmatpush.msra.mxu0 0.0
  %2400 = vmatpush.msra.mxu0 0.0
  %2401 = vmatpush.msra.mxu0 0.0
  %2402 = vmatpush.msra.mxu0 0.0
  %2403 = vmatpush.msra.mxu0 0.0
  %2404 = vmatpush.msra.mxu0 0.0
  %2405 = vmatpush.msra.mxu0 %v118
  %2406 = vmatmul.f32.gmra.mxu0 %v262
  %v2407 = vpop.f32.mrf.mxu0
  %v2408 = vadd.f32 %v1736, %v2407
  %2409 = vdwg.mxu0
  %2410 = vmatpush.msra.mxu0 0.0
  %2411 = vmatpush.msra.mxu0 0.0
  %2412 = vmatpush.msra.mxu0 0.0
  %2413 = vmatpush.msra.mxu0 0.0
  %2414 = vmatpush.msra.mxu0 0.0
  %2415 = vmatpush.msra.mxu0 0.0
  %2416 = vmatpush.msra.mxu0 0.0
  %2417 = vmatpush.msra.mxu0 0.0
  %2418 = vmatpush.msra.mxu0 0.0
  %2419 = vmatpush.msra.mxu0 0.0
  %2420 = vmatpush.msra.mxu0 0.0
  %2421 = vmatpush.msra.mxu0 0.0
  %2422 = vmatpush.msra.mxu0 0.0
  %2423 = vmatpush.msra.mxu0 0.0
  %2424 = vmatpush.msra.mxu0 0.0
  %2425 = vmatpush.msra.mxu0 %v119
  %2426 = vmatmul.f32.gmra.mxu0 %v285
  %v2427 = vpop.f32.mrf.mxu0
  %v2428 = vadd.f32 %v1756, %v2427
  %2429 = vdwg.mxu0
  %2430 = vmatpush.msra.mxu0 0.0
  %2431 = vmatpush.msra.mxu0 0.0
  %2432 = vmatpush.msra.mxu0 0.0
  %2433 = vmatpush.msra.mxu0 0.0
  %2434 = vmatpush.msra.mxu0 0.0
  %2435 = vmatpush.msra.mxu0 0.0
  %2436 = vmatpush.msra.mxu0 0.0
  %2437 = vmatpush.msra.mxu0 0.0
  %2438 = vmatpush.msra.mxu0 0.0
  %2439 = vmatpush.msra.mxu0 0.0
  %2440 = vmatpush.msra.mxu0 0.0
  %2441 = vmatpush.msra.mxu0 0.0
  %2442 = vmatpush.msra.mxu0 0.0
  %2443 = vmatpush.msra.mxu0 0.0
  %2444 = vmatpush.msra.mxu0 0.0
  %2445 = vmatpush.msra.mxu0 %v120
  %2446 = vmatmul.f32.gmra.mxu0 %v308
  %v2447 = vpop.f32.mrf.mxu0
  %v2448 = vadd.f32 %v1776, %v2447
  %2449 = vdwg.mxu0
  %2450 = vmatpush.msra.mxu0 0.0
  %2451 = vmatpush.msra.mxu0 0.0
  %2452 = vmatpush.msra.mxu0 0.0
  %2453 = vmatpush.msra.mxu0 0.0
  %2454 = vmatpush.msra.mxu0 0.0
  %2455 = vmatpush.msra.mxu0 0.0
  %2456 = vmatpush.msra.mxu0 0.0
  %2457 = vmatpush.msra.mxu0 0.0
  %2458 = vmatpush.msra.mxu0 0.0
  %2459 = vmatpush.msra.mxu0 0.0
  %2460 = vmatpush.msra.mxu0 0.0
  %2461 = vmatpush.msra.mxu0 0.0
  %2462 = vmatpush.msra.mxu0 0.0
  %2463 = vmatpush.msra.mxu0 0.0
  %2464 = vmatpush.msra.mxu0 0.0
  %2465 = vmatpush.msra.mxu0 %v121
  %2466 = vmatmul.f32.gmra.mxu0 %v331
  %v2467 = vpop.f32.mrf.mxu0
  %v2468 = vadd.f32 %v1796, %v2467
  %2469 = vdwg.mxu0
  %2470 = vmatpush.msra.mxu0 0.0
  %2471 = vmatpush.msra.mxu0 0.0
  %2472 = vmatpush.msra.mxu0 0.0
  %2473 = vmatpush.msra.mxu0 0.0
  %2474 = vmatpush.msra.mxu0 0.0
  %2475 = vmatpush.msra.mxu0 0.0
  %2476 = vmatpush.msra.mxu0 0.0
  %2477 = vmatpush.msra.mxu0 0.0
  %2478 = vmatpush.msra.mxu0 0.0
  %2479 = vmatpush.msra.mxu0 0.0
  %2480 = vmatpush.msra.mxu0 0.0
  %2481 = vmatpush.msra.mxu0 0.0
  %2482 = vmatpush.msra.mxu0 0.0
  %2483 = vmatpush.msra.mxu0 0.0
  %2484 = vmatpush.msra.mxu0 0.0
  %2485 = vmatpush.msra.mxu0 %v122
  %2486 = vmatmul.f32.gmra.mxu0 %v354
  %v2487 = vpop.f32.mrf.mxu0
  %v2488 = vadd.f32 %v1816, %v2487
  %2489 = vdwg.mxu0
  %2490 = vmatpush.msra.mxu0 0.0
  %2491 = vmatpush.msra.mxu0 0.0
  %2492 = vmatpush.msra.mxu0 0.0
  %2493 = vmatpush.msra.mxu0 0.0
  %2494 = vmatpush.msra.mxu0 0.0
  %2495 = vmatpush.msra.mxu0 0.0
  %2496 = vmatpush.msra.mxu0 0.0
  %2497 = vmatpush.msra.mxu0 0.0
  %2498 = vmatpush.msra.mxu0 0.0
  %2499 = vmatpush.msra.mxu0 0.0
  %2500 = vmatpush.msra.mxu0 0.0
  %2501 = vmatpush.msra.mxu0 0.0
  %2502 = vmatpush.msra.mxu0 0.0
  %2503 = vmatpush.msra.mxu0 0.0
  %2504 = vmatpush.msra.mxu0 0.0
  %2505 = vmatpush.msra.mxu0 %v123
  %2506 = vmatmul.f32.gmra.mxu0 %v377
  %v2507 = vpop.f32.mrf.mxu0
  %v2508 = vadd.f32 %v1836, %v2507
  %2509 = vdwg.mxu0
  %2510 = vmatpush.msra.mxu0 0.0
  %2511 = vmatpush.msra.mxu0 0.0
  %2512 = vmatpush.msra.mxu0 0.0
  %2513 = vmatpush.msra.mxu0 0.0
  %2514 = vmatpush.msra.mxu0 0.0
  %2515 = vmatpush.msra.mxu0 0.0
  %2516 = vmatpush.msra.mxu0 0.0
  %2517 = vmatpush.msra.mxu0 0.0
  %2518 = vmatpush.msra.mxu0 0.0
  %2519 = vmatpush.msra.mxu0 0.0
  %2520 = vmatpush.msra.mxu0 0.0
  %2521 = vmatpush.msra.mxu0 0.0
  %2522 = vmatpush.msra.mxu0 0.0
  %2523 = vmatpush.msra.mxu0 0.0
  %2524 = vmatpush.msra.mxu0 0.0
  %2525 = vmatpush.msra.mxu0 %v124
  %2526 = vmatmul.f32.gmra.mxu0 %v400
  %v2527 = vpop.f32.mrf.mxu0
  %v2528 = vadd.f32 %v1856, %v2527
  %2529 = vdwg.mxu0
  %2530 = vmatpush.msra.mxu0 0.0
  %2531 = vmatpush.msra.mxu0 0.0
  %2532 = vmatpush.msra.mxu0 0.0
  %2533 = vmatpush.msra.mxu0 0.0
  %2534 = vmatpush.msra.mxu0 0.0
  %2535 = vmatpush.msra.mxu0 0.0
  %2536 = vmatpush.msra.mxu0 0.0
  %2537 = vmatpush.msra.mxu0 0.0
  %2538 = vmatpush.msra.mxu0 0.0
  %2539 = vmatpush.msra.mxu0 0.0
  %2540 = vmatpush.msra.mxu0 0.0
  %2541 = vmatpush.msra.mxu0 0.0
  %2542 = vmatpush.msra.mxu0 0.0
  %2543 = vmatpush.msra.mxu0 0.0
  %2544 = vmatpush.msra.mxu0 0.0
  %2545 = vmatpush.msra.mxu0 %v125
  %2546 = vmatmul.f32.gmra.mxu0 %v423
  %v2547 = vpop.f32.mrf.mxu0
  %v2548 = vadd.f32 %v1876, %v2547
  %2549 = vdwg.mxu0
  %2550 = vmatpush.msra.mxu0 0.0
  %2551 = vmatpush.msra.mxu0 0.0
  %2552 = vmatpush.msra.mxu0 0.0
  %2553 = vmatpush.msra.mxu0 0.0
  %2554 = vmatpush.msra.mxu0 0.0
  %2555 = vmatpush.msra.mxu0 0.0
  %2556 = vmatpush.msra.mxu0 0.0
  %2557 = vmatpush.msra.mxu0 0.0
  %2558 = vmatpush.msra.mxu0 0.0
  %2559 = vmatpush.msra.mxu0 0.0
  %2560 = vmatpush.msra.mxu0 0.0
  %2561 = vmatpush.msra.mxu0 0.0
  %2562 = vmatpush.msra.mxu0 0.0
  %2563 = vmatpush.msra.mxu0 0.0
  %2564 = vmatpush.msra.mxu0 0.0
  %2565 = vmatpush.msra.mxu0 %v126
  %2566 = vmatmul.f32.gmra.mxu0 %v446
  %v2567 = vpop.f32.mrf.mxu0
  %v2568 = vadd.f32 %v1896, %v2567
  %2569 = vdwg.mxu0
  %2570 = vmatpush.msra.mxu0 0.0
  %2571 = vmatpush.msra.mxu0 0.0
  %2572 = vmatpush.msra.mxu0 0.0
  %2573 = vmatpush.msra.mxu0 0.0
  %2574 = vmatpush.msra.mxu0 0.0
  %2575 = vmatpush.msra.mxu0 0.0
  %2576 = vmatpush.msra.mxu0 0.0
  %2577 = vmatpush.msra.mxu0 0.0
  %2578 = vmatpush.msra.mxu0 0.0
  %2579 = vmatpush.msra.mxu0 0.0
  %2580 = vmatpush.msra.mxu0 0.0
  %2581 = vmatpush.msra.mxu0 0.0
  %2582 = vmatpush.msra.mxu0 0.0
  %2583 = vmatpush.msra.mxu0 0.0
  %2584 = vmatpush.msra.mxu0 0.0
  %2585 = vmatpush.msra.mxu0 %v127
  %2586 = vmatmul.f32.gmra.mxu0 %v469
  %v2587 = vpop.f32.mrf.mxu0
  %v2588 = vadd.f32 %v1916, %v2587
  %2589 = vdwg.mxu0
  %2590 = vmatpush.msra.mxu0 0.0
  %2591 = vmatpush.msra.mxu0 0.0
  %2592 = vmatpush.msra.mxu0 0.0
  %2593 = vmatpush.msra.mxu0 0.0
  %2594 = vmatpush.msra.mxu0 0.0
  %2595 = vmatpush.msra.mxu0 0.0
  %2596 = vmatpush.msra.mxu0 0.0
  %2597 = vmatpush.msra.mxu0 0.0
  %2598 = vmatpush.msra.mxu0 0.0
  %2599 = vmatpush.msra.mxu0 0.0
  %2600 = vmatpush.msra.mxu0 0.0
  %2601 = vmatpush.msra.mxu0 0.0
  %2602 = vmatpush.msra.mxu0 0.0
  %2603 = vmatpush.msra.mxu0 0.0
  %2604 = vmatpush.msra.mxu0 0.0
  %2605 = vmatpush.msra.mxu0 %v128
  %2606 = vmatmul.f32.gmra.mxu0 %v492
  %v2607 = vpop.f32.mrf.mxu0
  %v2608 = vadd.f32 %v1936, %v2607
  %2609 = vdwg.mxu0
  %2610 = vmatpush.msra.mxu0 0.0
  %2611 = vmatpush.msra.mxu0 0.0
  %2612 = vmatpush.msra.mxu0 0.0
  %2613 = vmatpush.msra.mxu0 0.0
  %2614 = vmatpush.msra.mxu0 0.0
  %2615 = vmatpush.msra.mxu0 0.0
  %2616 = vmatpush.msra.mxu0 0.0
  %2617 = vmatpush.msra.mxu0 0.0
  %2618 = vmatpush.msra.mxu0 0.0
  %2619 = vmatpush.msra.mxu0 0.0
  %2620 = vmatpush.msra.mxu0 0.0
  %2621 = vmatpush.msra.mxu0 0.0
  %2622 = vmatpush.msra.mxu0 0.0
  %2623 = vmatpush.msra.mxu0 0.0
  %2624 = vmatpush.msra.mxu0 0.0
  %2625 = vmatpush.msra.mxu0 %v129
  %2626 = vmatmul.f32.gmra.mxu0 %v515
  %v2627 = vpop.f32.mrf.mxu0
  %v2628 = vadd.f32 %v1956, %v2627
  %2629 = vdwg.mxu0
  %2630 = vmatpush.msra.mxu0 0.0
  %2631 = vmatpush.msra.mxu0 0.0
  %2632 = vmatpush.msra.mxu0 0.0
  %2633 = vmatpush.msra.mxu0 0.0
  %2634 = vmatpush.msra.mxu0 0.0
  %2635 = vmatpush.msra.mxu0 0.0
  %2636 = vmatpush.msra.mxu0 0.0
  %2637 = vmatpush.msra.mxu0 0.0
  %2638 = vmatpush.msra.mxu0 0.0
  %2639 = vmatpush.msra.mxu0 0.0
  %2640 = vmatpush.msra.mxu0 0.0
  %2641 = vmatpush.msra.mxu0 0.0
  %2642 = vmatpush.msra.mxu0 0.0
  %2643 = vmatpush.msra.mxu0 0.0
  %2644 = vmatpush.msra.mxu0 0.0
  %2645 = vmatpush.msra.mxu0 %v130
  %2646 = vmatmul.f32.gmra.mxu0 %v538
  %v2647 = vpop.f32.mrf.mxu0
  %v2648 = vadd.f32 %v1976, %v2647
  %2649 = vdwg.mxu0
  %2650 = vmatpush.msra.mxu0 0.0
  %2651 = vmatpush.msra.mxu0 0.0
  %2652 = vmatpush.msra.mxu0 0.0
  %2653 = vmatpush.msra.mxu0 0.0
  %2654 = vmatpush.msra.mxu0 0.0
  %2655 = vmatpush.msra.mxu0 0.0
  %2656 = vmatpush.msra.mxu0 0.0
  %2657 = vmatpush.msra.mxu0 0.0
  %2658 = vmatpush.msra.mxu0 0.0
  %2659 = vmatpush.msra.mxu0 0.0
  %2660 = vmatpush.msra.mxu0 0.0
  %2661 = vmatpush.msra.mxu0 0.0
  %2662 = vmatpush.msra.mxu0 0.0
  %2663 = vmatpush.msra.mxu0 0.0
  %2664 = vmatpush.msra.mxu0 0.0
  %2665 = vmatpush.msra.mxu0 %v131
  %2666 = vmatmul.f32.gmra.mxu0 %v561
  %v2667 = vpop.f32.mrf.mxu0
  %v2668 = vadd.f32 %v1996, %v2667
  %2669 = vdwg.mxu0
  %2670 = vmatpush.msra.mxu0 0.0
  %2671 = vmatpush.msra.mxu0 0.0
  %2672 = vmatpush.msra.mxu0 0.0
  %2673 = vmatpush.msra.mxu0 0.0
  %2674 = vmatpush.msra.mxu0 0.0
  %2675 = vmatpush.msra.mxu0 0.0
  %2676 = vmatpush.msra.mxu0 0.0
  %2677 = vmatpush.msra.mxu0 0.0
  %2678 = vmatpush.msra.mxu0 0.0
  %2679 = vmatpush.msra.mxu0 0.0
  %2680 = vmatpush.msra.mxu0 0.0
  %2681 = vmatpush.msra.mxu0 0.0
  %2682 = vmatpush.msra.mxu0 0.0
  %2683 = vmatpush.msra.mxu0 0.0
  %2684 = vmatpush.msra.mxu0 0.0
  %2685 = vmatpush.msra.mxu0 %v132
  %2686 = vmatmul.f32.gmra.mxu0 %v584
  %v2687 = vpop.f32.mrf.mxu0
  %v2688 = vadd.f32 %v2016, %v2687
  %2689 = vdwg.mxu0
  %2690 = vmatpush.msra.mxu0 0.0
  %2691 = vmatpush.msra.mxu0 0.0
  %2692 = vmatpush.msra.mxu0 0.0
  %2693 = vmatpush.msra.mxu0 0.0
  %2694 = vmatpush.msra.mxu0 0.0
  %2695 = vmatpush.msra.mxu0 0.0
  %2696 = vmatpush.msra.mxu0 0.0
  %2697 = vmatpush.msra.mxu0 0.0
  %2698 = vmatpush.msra.mxu0 0.0
  %2699 = vmatpush.msra.mxu0 0.0
  %2700 = vmatpush.msra.mxu0 0.0
  %2701 = vmatpush.msra.mxu0 0.0
  %2702 = vmatpush.msra.mxu0 0.0
  %2703 = vmatpush.msra.mxu0 0.0
  %2704 = vmatpush.msra.mxu0 0.0
  %2705 = vmatpush.msra.mxu0 %v133
  %2706 = vmatmul.f32.gmra.mxu0 %v607
  %v2707 = vpop.f32.mrf.mxu0
  %v2708 = vadd.f32 %v2036, %v2707
  %2709 = vdwg.mxu0
  %2710 = vmatpush.msra.mxu0 0.0
  %2711 = vmatpush.msra.mxu0 0.0
  %2712 = vmatpush.msra.mxu0 0.0
  %2713 = vmatpush.msra.mxu0 0.0
  %2714 = vmatpush.msra.mxu0 0.0
  %2715 = vmatpush.msra.mxu0 0.0
  %2716 = vmatpush.msra.mxu0 0.0
  %2717 = vmatpush.msra.mxu0 0.0
  %2718 = vmatpush.msra.mxu0 0.0
  %2719 = vmatpush.msra.mxu0 0.0
  %2720 = vmatpush.msra.mxu0 0.0
  %2721 = vmatpush.msra.mxu0 0.0
  %2722 = vmatpush.msra.mxu0 0.0
  %2723 = vmatpush.msra.mxu0 0.0
  %2724 = vmatpush.msra.mxu0 0.0
  %2725 = vmatpush.msra.mxu0 %v134
  %2726 = vmatmul.f32.gmra.mxu0 %v630
  %v2727 = vpop.f32.mrf.mxu0
  %v2728 = vadd.f32 %v2056, %v2727
  %2729 = vdwg.mxu0
  %2730 = vmatpush.msra.mxu0 0.0
  %2731 = vmatpush.msra.mxu0 0.0
  %2732 = vmatpush.msra.mxu0 0.0
  %2733 = vmatpush.msra.mxu0 0.0
  %2734 = vmatpush.msra.mxu0 0.0
  %2735 = vmatpush.msra.mxu0 0.0
  %2736 = vmatpush.msra.mxu0 0.0
  %2737 = vmatpush.msra.mxu0 0.0
  %2738 = vmatpush.msra.mxu0 0.0
  %2739 = vmatpush.msra.mxu0 0.0
  %2740 = vmatpush.msra.mxu0 0.0
  %2741 = vmatpush.msra.mxu0 0.0
  %2742 = vmatpush.msra.mxu0 0.0
  %2743 = vmatpush.msra.mxu0 0.0
  %2744 = vmatpush.msra.mxu0 0.0
  %2745 = vmatpush.msra.mxu0 %v135
  %2746 = vmatmul.f32.gmra.mxu0 %v653
  %v2747 = vpop.f32.mrf.mxu0
  %v2748 = vadd.f32 %v2076, %v2747
  %2749 = vdwg.mxu0
  %2750 = vmatpush.msra.mxu0 0.0
  %2751 = vmatpush.msra.mxu0 0.0
  %2752 = vmatpush.msra.mxu0 0.0
  %2753 = vmatpush.msra.mxu0 0.0
  %2754 = vmatpush.msra.mxu0 0.0
  %2755 = vmatpush.msra.mxu0 0.0
  %2756 = vmatpush.msra.mxu0 0.0
  %2757 = vmatpush.msra.mxu0 0.0
  %2758 = vmatpush.msra.mxu0 0.0
  %2759 = vmatpush.msra.mxu0 0.0
  %2760 = vmatpush.msra.mxu0 0.0
  %2761 = vmatpush.msra.mxu0 0.0
  %2762 = vmatpush.msra.mxu0 0.0
  %2763 = vmatpush.msra.mxu0 0.0
  %2764 = vmatpush.msra.mxu0 0.0
  %2765 = vmatpush.msra.mxu0 %v136
  %2766 = vmatmul.f32.gmra.mxu0 %v676
  %v2767 = vpop.f32.mrf.mxu0
  %v2768 = vadd.f32 %v2096, %v2767
  %2769 = vdwg.mxu0
  %2770 = vmatpush.msra.mxu0 0.0
  %2771 = vmatpush.msra.mxu0 0.0
  %2772 = vmatpush.msra.mxu0 0.0
  %2773 = vmatpush.msra.mxu0 0.0
  %2774 = vmatpush.msra.mxu0 0.0
  %2775 = vmatpush.msra.mxu0 0.0
  %2776 = vmatpush.msra.mxu0 0.0
  %2777 = vmatpush.msra.mxu0 0.0
  %2778 = vmatpush.msra.mxu0 0.0
  %2779 = vmatpush.msra.mxu0 0.0
  %2780 = vmatpush.msra.mxu0 0.0
  %2781 = vmatpush.msra.mxu0 0.0
  %2782 = vmatpush.msra.mxu0 0.0
  %2783 = vmatpush.msra.mxu0 0.0
  %2784 = vmatpush.msra.mxu0 0.0
  %2785 = vmatpush.msra.mxu0 %v137
  %2786 = vmatmul.f32.gmra.mxu0 %v699
  %v2787 = vpop.f32.mrf.mxu0
  %v2788 = vadd.f32 %v2116, %v2787
  %2789 = vdwg.mxu0
  %2790 = vmatpush.msra.mxu0 0.0
  %2791 = vmatpush.msra.mxu0 0.0
  %2792 = vmatpush.msra.mxu0 0.0
  %2793 = vmatpush.msra.mxu0 0.0
  %2794 = vmatpush.msra.mxu0 0.0
  %2795 = vmatpush.msra.mxu0 0.0
  %2796 = vmatpush.msra.mxu0 0.0
  %2797 = vmatpush.msra.mxu0 0.0
  %2798 = vmatpush.msra.mxu0 0.0
  %2799 = vmatpush.msra.mxu0 0.0
  %2800 = vmatpush.msra.mxu0 0.0
  %2801 = vmatpush.msra.mxu0 0.0
  %2802 = vmatpush.msra.mxu0 0.0
  %2803 = vmatpush.msra.mxu0 0.0
  %2804 = vmatpush.msra.mxu0 0.0
  %2805 = vmatpush.msra.mxu0 %v138
  %2806 = vmatmul.f32.gmra.mxu0 %v722
  %v2807 = vpop.f32.mrf.mxu0
  %v2808 = vadd.f32 %v2136, %v2807
  %2809 = vdwg.mxu0
  %2810 = vmatpush.msra.mxu0 0.0
  %2811 = vmatpush.msra.mxu0 0.0
  %2812 = vmatpush.msra.mxu0 0.0
  %2813 = vmatpush.msra.mxu0 0.0
  %2814 = vmatpush.msra.mxu0 0.0
  %2815 = vmatpush.msra.mxu0 0.0
  %2816 = vmatpush.msra.mxu0 0.0
  %2817 = vmatpush.msra.mxu0 0.0
  %2818 = vmatpush.msra.mxu0 0.0
  %2819 = vmatpush.msra.mxu0 0.0
  %2820 = vmatpush.msra.mxu0 0.0
  %2821 = vmatpush.msra.mxu0 0.0
  %2822 = vmatpush.msra.mxu0 0.0
  %2823 = vmatpush.msra.mxu0 0.0
  %2824 = vmatpush.msra.mxu0 0.0
  %2825 = vmatpush.msra.mxu0 %v139
  %2826 = vmatmul.f32.gmra.mxu0 %v745
  %v2827 = vpop.f32.mrf.mxu0
  %v2828 = vadd.f32 %v2156, %v2827
  %2829 = vdwg.mxu0
  %2830 = vmatpush.msra.mxu0 0.0
  %2831 = vmatpush.msra.mxu0 0.0
  %2832 = vmatpush.msra.mxu0 0.0
  %2833 = vmatpush.msra.mxu0 0.0
  %2834 = vmatpush.msra.mxu0 0.0
  %2835 = vmatpush.msra.mxu0 0.0
  %2836 = vmatpush.msra.mxu0 0.0
  %2837 = vmatpush.msra.mxu0 0.0
  %2838 = vmatpush.msra.mxu0 0.0
  %2839 = vmatpush.msra.mxu0 0.0
  %2840 = vmatpush.msra.mxu0 0.0
  %2841 = vmatpush.msra.mxu0 0.0
  %2842 = vmatpush.msra.mxu0 0.0
  %2843 = vmatpush.msra.mxu0 0.0
  %2844 = vmatpush.msra.mxu0 0.0
  %2845 = vmatpush.msra.mxu0 %v140
  %2846 = vmatmul.f32.gmra.mxu0 %v768
  %v2847 = vpop.f32.mrf.mxu0
  %v2848 = vadd.f32 %v2176, %v2847
  %2849 = vdwg.mxu0
  %2850 = vmatpush.msra.mxu0 0.0
  %2851 = vmatpush.msra.mxu0 0.0
  %2852 = vmatpush.msra.mxu0 0.0
  %2853 = vmatpush.msra.mxu0 0.0
  %2854 = vmatpush.msra.mxu0 0.0
  %2855 = vmatpush.msra.mxu0 0.0
  %2856 = vmatpush.msra.mxu0 0.0
  %2857 = vmatpush.msra.mxu0 0.0
  %2858 = vmatpush.msra.mxu0 0.0
  %2859 = vmatpush.msra.mxu0 0.0
  %2860 = vmatpush.msra.mxu0 0.0
  %2861 = vmatpush.msra.mxu0 0.0
  %2862 = vmatpush.msra.mxu0 0.0
  %2863 = vmatpush.msra.mxu0 0.0
  %2864 = vmatpush.msra.mxu0 0.0
  %2865 = vmatpush.msra.mxu0 %v141
  %2866 = vmatmul.f32.gmra.mxu0 %v791
  %v2867 = vpop.f32.mrf.mxu0
  %v2868 = vadd.f32 %v2196, %v2867
  %2869 = vdwg.mxu0
  %2870 = vmatpush.msra.mxu0 0.0
  %2871 = vmatpush.msra.mxu0 0.0
  %2872 = vmatpush.msra.mxu0 0.0
  %2873 = vmatpush.msra.mxu0 0.0
  %2874 = vmatpush.msra.mxu0 0.0
  %2875 = vmatpush.msra.mxu0 0.0
  %2876 = vmatpush.msra.mxu0 0.0
  %2877 = vmatpush.msra.mxu0 0.0
  %2878 = vmatpush.msra.mxu0 0.0
  %2879 = vmatpush.msra.mxu0 0.0
  %2880 = vmatpush.msra.mxu0 0.0
  %2881 = vmatpush.msra.mxu0 0.0
  %2882 = vmatpush.msra.mxu0 0.0
  %2883 = vmatpush.msra.mxu0 0.0
  %2884 = vmatpush.msra.mxu0 0.0
  %2885 = vmatpush.msra.mxu0 %v142
  %2886 = vmatmul.f32.gmra.mxu0 %v814
  %v2887 = vpop.f32.mrf.mxu0
  %v2888 = vadd.f32 %v2216, %v2887
  %2889 = vdwg.mxu0
  %2890 = vmatpush.msra.mxu0 0.0
  %2891 = vmatpush.msra.mxu0 0.0
  %2892 = vmatpush.msra.mxu0 0.0
  %2893 = vmatpush.msra.mxu0 0.0
  %2894 = vmatpush.msra.mxu0 0.0
  %2895 = vmatpush.msra.mxu0 0.0
  %2896 = vmatpush.msra.mxu0 0.0
  %2897 = vmatpush.msra.mxu0 0.0
  %2898 = vmatpush.msra.mxu0 0.0
  %2899 = vmatpush.msra.mxu0 0.0
  %2900 = vmatpush.msra.mxu0 0.0
  %2901 = vmatpush.msra.mxu0 0.0
  %2902 = vmatpush.msra.mxu0 0.0
  %2903 = vmatpush.msra.mxu0 0.0
  %2904 = vmatpush.msra.mxu0 0.0
  %2905 = vmatpush.msra.mxu0 %v143
  %2906 = vmatmul.f32.gmra.mxu0 %v837
  %v2907 = vpop.f32.mrf.mxu0
  %v2908 = vadd.f32 %v2236, %v2907
  %2909 = vdwg.mxu0
  %2910 = vmatpush.msra.mxu0 0.0
  %2911 = vmatpush.msra.mxu0 0.0
  %2912 = vmatpush.msra.mxu0 0.0
  %2913 = vmatpush.msra.mxu0 0.0
  %2914 = vmatpush.msra.mxu0 0.0
  %2915 = vmatpush.msra.mxu0 0.0
  %2916 = vmatpush.msra.mxu0 0.0
  %2917 = vmatpush.msra.mxu0 0.0
  %2918 = vmatpush.msra.mxu0 0.0
  %2919 = vmatpush.msra.mxu0 0.0
  %2920 = vmatpush.msra.mxu0 0.0
  %2921 = vmatpush.msra.mxu0 0.0
  %2922 = vmatpush.msra.mxu0 0.0
  %2923 = vmatpush.msra.mxu0 0.0
  %2924 = vmatpush.msra.mxu0 0.0
  %2925 = vmatpush.msra.mxu0 %v144
  %2926 = vmatmul.f32.gmra.mxu0 %v860
  %v2927 = vpop.f32.mrf.mxu0
  %v2928 = vadd.f32 %v2256, %v2927
  %2929 = vdwg.mxu0
  %2962 = vrot.lane.b32.xlu0 %v2308, 8
  %v2963 = vpop.permute.xlu0 %2962
  %2964 = vrot.lane.b32.xlu0 %v2328, 8
  %v2965 = vpop.permute.xlu0 %2964
  %2966 = vrot.lane.b32.xlu0 %v2348, 8
  %v2967 = vpop.permute.xlu0 %2966
  %2968 = vrot.lane.b32.xlu0 %v2368, 8
  %v2969 = vpop.permute.xlu0 %2968
  %2970 = vrot.lane.b32.xlu0 %v2388, 8
  %v2971 = vpop.permute.xlu0 %2970
  %2972 = vrot.lane.b32.xlu0 %v2408, 8
  %v2973 = vpop.permute.xlu0 %2972
  %2974 = vrot.lane.b32.xlu0 %v2428, 8
  %v2975 = vpop.permute.xlu0 %2974
  %2976 = vrot.lane.b32.xlu0 %v2448, 8
  %v2977 = vpop.permute.xlu0 %2976
  %2978 = vrot.lane.b32.xlu0 %v2468, 8
  %v2979 = vpop.permute.xlu0 %2978
  %2980 = vrot.lane.b32.xlu0 %v2488, 8
  %v2981 = vpop.permute.xlu0 %2980
  %2982 = vrot.lane.b32.xlu0 %v2508, 8
  %v2983 = vpop.permute.xlu0 %2982
  %2984 = vrot.lane.b32.xlu0 %v2528, 8
  %v2985 = vpop.permute.xlu0 %2984
  %2986 = vrot.lane.b32.xlu0 %v2548, 8
  %v2987 = vpop.permute.xlu0 %2986
  %2988 = vrot.lane.b32.xlu0 %v2568, 8
  %v2989 = vpop.permute.xlu0 %2988
  %2990 = vrot.lane.b32.xlu0 %v2588, 8
  %v2991 = vpop.permute.xlu0 %2990
  %2992 = vrot.lane.b32.xlu0 %v2608, 8
  %v2993 = vpop.permute.xlu0 %2992
  %2994 = vrot.lane.b32.xlu0 %v2628, 8
  %v2995 = vpop.permute.xlu0 %2994
  %2996 = vrot.lane.b32.xlu0 %v2648, 8
  %v2997 = vpop.permute.xlu0 %2996
  %2998 = vrot.lane.b32.xlu0 %v2668, 8
  %v2999 = vpop.permute.xlu0 %2998
  %3000 = vrot.lane.b32.xlu0 %v2688, 8
  %v3001 = vpop.permute.xlu0 %3000
  %3002 = vrot.lane.b32.xlu0 %v2708, 8
  %v3003 = vpop.permute.xlu0 %3002
  %3004 = vrot.lane.b32.xlu0 %v2728, 8
  %v3005 = vpop.permute.xlu0 %3004
  %3006 = vrot.lane.b32.xlu0 %v2748, 8
  %v3007 = vpop.permute.xlu0 %3006
  %3008 = vrot.lane.b32.xlu0 %v2768, 8
  %v3009 = vpop.permute.xlu0 %3008
  %3010 = vrot.lane.b32.xlu0 %v2788, 8
  %v3011 = vpop.permute.xlu0 %3010
  %3012 = vrot.lane.b32.xlu0 %v2808, 8
  %v3013 = vpop.permute.xlu0 %3012
  %3014 = vrot.lane.b32.xlu0 %v2828, 8
  %v3015 = vpop.permute.xlu0 %3014
  %3016 = vrot.lane.b32.xlu0 %v2848, 8
  %v3017 = vpop.permute.xlu0 %3016
  %3018 = vrot.lane.b32.xlu0 %v2868, 8
  %v3019 = vpop.permute.xlu0 %3018
  %3020 = vrot.lane.b32.xlu0 %v2888, 8
  %v3021 = vpop.permute.xlu0 %3020
  %3022 = vrot.lane.b32.xlu0 %v2908, 8
  %v3023 = vpop.permute.xlu0 %3022
  %3024 = vrot.lane.b32.xlu0 %v2928, 8
  %v3025 = vpop.permute.xlu0 %3024
  %v3058 = vsel %vm145, %v2258, %v2963
  %v3059 = vsel %vm145, %v2259, %v2965
  %v3060 = vsel %vm145, %v2260, %v2967
  %v3061 = vsel %vm145, %v2261, %v2969
  %v3062 = vsel %vm145, %v2262, %v2971
  %v3063 = vsel %vm145, %v2263, %v2973
  %v3064 = vsel %vm145, %v2264, %v2975
  %v3065 = vsel %vm145, %v2265, %v2977
  %v3066 = vsel %vm145, %v2266, %v2979
  %v3067 = vsel %vm145, %v2267, %v2981
  %v3068 = vsel %vm145, %v2268, %v2983
  %v3069 = vsel %vm145, %v2269, %v2985
  %v3070 = vsel %vm145, %v2270, %v2987
  %v3071 = vsel %vm145, %v2271, %v2989
  %v3072 = vsel %vm145, %v2272, %v2991
  %v3073 = vsel %vm145, %v2273, %v2993
  %v3074 = vsel %vm145, %v2274, %v2995
  %v3075 = vsel %vm145, %v2275, %v2997
  %v3076 = vsel %vm145, %v2276, %v2999
  %v3077 = vsel %vm145, %v2277, %v3001
  %v3078 = vsel %vm145, %v2278, %v3003
  %v3079 = vsel %vm145, %v2279, %v3005
  %v3080 = vsel %vm145, %v2280, %v3007
  %v3081 = vsel %vm145, %v2281, %v3009
  %v3082 = vsel %vm145, %v2282, %v3011
  %v3083 = vsel %vm145, %v2283, %v3013
  %v3084 = vsel %vm145, %v2284, %v3015
  %v3085 = vsel %vm145, %v2285, %v3017
  %v3086 = vsel %vm145, %v2286, %v3019
  %v3087 = vsel %vm145, %v2287, %v3021
  %v3088 = vsel %vm145, %v2288, %v3023
  %v3089 = vsel %vm145, %v2289, %v3025
  %vm3090 = vcmask 123904
  %3091 = vst.msk [vmem:[%s4] sm:$0x3] %vm3090, %v3058
  %3092 = vst.msk [vmem:[%s4 + $0x2] sm:$0x3] %vm3090, %v3059
  %3093 = vst.msk [vmem:[%s4 + $0x4] sm:$0x3] %vm3090, %v3060
  %3094 = vst.msk [vmem:[%s4 + $0x6] sm:$0x3] %vm3090, %v3061
  %3095 = vst.msk [vmem:[%s4 + $0x8] sm:$0x3] %vm3090, %v3062
  %3096 = vst.msk [vmem:[%s4 + $0xa] sm:$0x3] %vm3090, %v3063
  %3097 = vst.msk [vmem:[%s4 + $0xc] sm:$0x3] %vm3090, %v3064
  %3098 = vst.msk [vmem:[%s4 + $0xe] sm:$0x3] %vm3090, %v3065
  %3099 = vst.msk [vmem:[%s4 + $0x10] sm:$0x3] %vm3090, %v3066
  %3100 = vst.msk [vmem:[%s4 + $0x12] sm:$0x3] %vm3090, %v3067
  %3101 = vst.msk [vmem:[%s4 + $0x14] sm:$0x3] %vm3090, %v3068
  %3102 = vst.msk [vmem:[%s4 + $0x16] sm:$0x3] %vm3090, %v3069
  %3103 = vst.msk [vmem:[%s4 + $0x18] sm:$0x3] %vm3090, %v3070
  %3104 = vst.msk [vmem:[%s4 + $0x1a] sm:$0x3] %vm3090, %v3071
  %3105 = vst.msk [vmem:[%s4 + $0x1c] sm:$0x3] %vm3090, %v3072
  %3106 = vst.msk [vmem:[%s4 + $0x1e] sm:$0x3] %vm3090, %v3073
  %3107 = vst.msk [vmem:[%s4 + $0x20] sm:$0x3] %vm3090, %v3074
  %3108 = vst.msk [vmem:[%s4 + $0x22] sm:$0x3] %vm3090, %v3075
  %3109 = vst.msk [vmem:[%s4 + $0x24] sm:$0x3] %vm3090, %v3076
  %3110 = vst.msk [vmem:[%s4 + $0x26] sm:$0x3] %vm3090, %v3077
  %3111 = vst.msk [vmem:[%s4 + $0x28] sm:$0x3] %vm3090, %v3078
  %3112 = vst.msk [vmem:[%s4 + $0x2a] sm:$0x3] %vm3090, %v3079
  %3113 = vst.msk [vmem:[%s4 + $0x2c] sm:$0x3] %vm3090, %v3080
  %3114 = vst.msk [vmem:[%s4 + $0x2e] sm:$0x3] %vm3090, %v3081
  %3115 = vst.msk [vmem:[%s4 + $0x30] sm:$0x3] %vm3090, %v3082
  %3116 = vst.msk [vmem:[%s4 + $0x32] sm:$0x3] %vm3090, %v3083
  %3117 = vst.msk [vmem:[%s4 + $0x34] sm:$0x3] %vm3090, %v3084
  %3118 = vst.msk [vmem:[%s4 + $0x36] sm:$0x3] %vm3090, %v3085
  %3119 = vst.msk [vmem:[%s4 + $0x38] sm:$0x3] %vm3090, %v3086
  %3120 = vst.msk [vmem:[%s4 + $0x3a] sm:$0x3] %vm3090, %v3087
  %3121 = vst.msk [vmem:[%s4 + $0x3c] sm:$0x3] %vm3090, %v3088
  %3122 = vst.msk [vmem:[%s4 + $0x3e] sm:$0x3] %vm3090, %v3089
  // Predicated region
  $region18: #{fourier_block2d_forward.2} parent=0 // pred_check
    _
  $region19: #{fourier_block2d_forward.2} parent=0 // pred_check_branch
    %3124 = sbr.rel (0) target = $region21
  $region20: #{fourier_block2d_forward.2} parent=0 // pred_region
    _
  $region21: #{fourier_block2d_forward.2} parent=0 // pred_fallthru
    _
  // Predicated region
  $region22: #{fourier_block2d_forward.2} parent=0 // pred_check
    _
  $region23: #{fourier_block2d_forward.2} parent=0 // pred_check_branch
    %3126 = sbr.rel (0) target = $region25
  $region24: #{fourier_block2d_forward.2} parent=0 // pred_region
    _
  $region25: #{fourier_block2d_forward.2} parent=0 // pred_fallthru
    _

// kernel: fourier_block2d_forward.3
$region0: #{fourier_block2d_forward.3}
  #allocation0 [shape = 'u32[]', space=smem, size = 0x4, offset = 0x4, fixed_abs, tag = 'smem constant byte address 0x4 - core index']
  #allocation1 [shape = 'u32[72,128]{1,0:T(1,128)}', space=vmem, size = 0x9000, scoped, tag = 'internal scratch']
  %s0 = inlined_call_operand.vmem [shape: f32[2,8,256], index: 0, kind: input, shape index: {}]
  %s1 = inlined_call_operand.vmem [shape: f32[2,8,256], index: 1, kind: input, shape index: {}]
  %s2 = inlined_call_operand.vmem [shape: f32[8,8], index: 2, kind: input, shape index: {}]
  %s3 = inlined_call_operand.vmem [shape: f32[8,1], index: 3, kind: input, shape index: {}]
  %s4 = inlined_call_operand.vmem [shape: f32[2,8,256], index: 4, kind: output, shape index: {}]
  %s5 = sld [smem:[#allocation0]]
  $region49: #{fourier_block2d_forward.3} parent=0
    _
  %s7 = ssub.s32 1, %s5
  %s8 = scalar_select 0, %s7, %s5
  loop: start=0, step=1, limit=4
  $region2: #{fourier_block2d_forward.3} parent=0 // loop_pre_header
    _
  $region3: #{fourier_block2d_forward.3} parent=0 // loop_header
    %s10 = sphi 0, %s14
    %p11 = scmp.ge.s32.totalorder %s10, 4
    %s17 = sphi 0, %s29
    %s18 = sphi 0, %s25
    %s19 = sphi 0, %s17
    %s20 = sphi 0, %s18
    %s21 = sphi 0, %s19
    %s22 = sphi 0, %s20
    %s34 = sphi 0, %s36
    %s37 = sphi 0, %s34
    %s38 = sphi 0, %s37
    %s54 = sphi 0, %s38
    %s62 = sphi 0, %s64
    %s65 = sphi 0, %s62
    %s66 = sphi 0, %s65
    %s82 = sphi 0, %s66
    %s86 = sphi 0, %s86
    %s88 = sphi 0, %s86
    %s89 = sphi 0, %s88
    %s103 = sphi 0, %s89
    %s107 = sphi 0, %s107
    %s109 = sphi 0, %s107
    %s110 = sphi 0, %s109
    %s124 = sphi 0, %s110
    %s132 = sphi 0, %s134
    %s135 = sphi 0, %s132
    %s136 = sphi 0, %s135
    %s152 = sphi 0, %s136
  $region4: #{fourier_block2d_forward.3} parent=0 // loop_header_branch
    %13 = sbr.rel (%p11) target = $region8
  $region5: #{fourier_block2d_forward.3} parent=0 // loop_body
    %s15 = ssub.s32 %s10, 1
    %s16 = ssub.s32 %s10, 2
    %s23 = sadd.s32 1, %s18
    %p24 = scmp.ge.s32.totalorder %s23, 1
    %s25 = scalar_select %p24, 0, %s23
    %s26 = sadd.s32 1, %s17
    %s27 = scalar_select %p24, %s26, %s17
    %p28 = scmp.ge.s32.totalorder %s27, 2
    %s29 = scalar_select %p28, 0, %s27
    %s30 = ssub.s32 %s17, %s29
    %s31 = ssub.s32 %s18, %s25
    %s32 = sor.u32 %s30, %s31
    %p33 = scmp.eq.s32.totalorder %s32, 0
    %s35 = sadd.s32 %s34, 1
    %s36 = scalar_select %p33, %s34, %s35
    %p39 = pneg %p33
    %p40 = scmp.eq.s32.totalorder %s10, 1
    %p41 = por %p39, %p40
    %p42 = scmp.ne.s32.totalorder %s34, %s37
    %p43 = scmp.eq.s32.totalorder %s10, 0
    %p44 = por %p42, %p43
    %p45 = scmp.ne.s32.totalorder %s34, %s37
    %p46 = scmp.eq.s32.totalorder %s15, 1
    %p47 = por %p45, %p46
    %p48 = scmp.ne.s32.totalorder %s37, %s38
    %p49 = scmp.eq.s32.totalorder %s15, 0
    %p50 = por %p48, %p49
    %p51 = scmp.ne.s32.totalorder %s37, %s38
    %p52 = scmp.eq.s32.totalorder %s16, 1
    %p53 = por %p51, %p52
    %p55 = scmp.ne.s32.totalorder %s38, %s54
    %p56 = scmp.eq.s32.totalorder %s16, 0
    %p57 = por %p55, %p56
    %s58 = ssub.s32 %s17, %s29
    %s59 = ssub.s32 %s18, %s25
    %s60 = sor.u32 %s58, %s59
    %p61 = scmp.eq.s32.totalorder %s60, 0
    %s63 = sadd.s32 %s62, 1
    %s64 = scalar_select %p61, %s62, %s63
    %p67 = pneg %p61
    %p68 = scmp.eq.s32.totalorder %s10, 1
    %p69 = por %p67, %p68
    %p70 = scmp.ne.s32.totalorder %s62, %s65
    %p71 = scmp.eq.s32.totalorder %s10, 0
    %p72 = por %p70, %p71
    %p73 = scmp.ne.s32.totalorder %s62, %s65
    %p74 = scmp.eq.s32.totalorder %s15, 1
    %p75 = por %p73, %p74
    %p76 = scmp.ne.s32.totalorder %s65, %s66
    %p77 = scmp.eq.s32.totalorder %s15, 0
    %p78 = por %p76, %p77
    %p79 = scmp.ne.s32.totalorder %s65, %s66
    %p80 = scmp.eq.s32.totalorder %s16, 1
    %p81 = por %p79, %p80
    %p83 = scmp.ne.s32.totalorder %s66, %s82
    %p84 = scmp.eq.s32.totalorder %s16, 0
    %p85 = por %p83, %p84
    %s87 = sadd.s32 %s86, 1
    %p90 = scmp.eq.s32.totalorder %s10, 1
    %p91 = scmp.ne.s32.totalorder %s86, %s88
    %p92 = scmp.eq.s32.totalorder %s10, 0
    %p93 = por %p91, %p92
    %p94 = scmp.ne.s32.totalorder %s86, %s88
    %p95 = scmp.eq.s32.totalorder %s15, 1
    %p96 = por %p94, %p95
    %p97 = scmp.ne.s32.totalorder %s88, %s89
    %p98 = scmp.eq.s32.totalorder %s15, 0
    %p99 = por %p97, %p98
    %p100 = scmp.ne.s32.totalorder %s88, %s89
    %p101 = scmp.eq.s32.totalorder %s16, 1
    %p102 = por %p100, %p101
    %p104 = scmp.ne.s32.totalorder %s89, %s103
    %p105 = scmp.eq.s32.totalorder %s16, 0
    %p106 = por %p104, %p105
    %s108 = sadd.s32 %s107, 1
    %p111 = scmp.eq.s32.totalorder %s10, 1
    %p112 = scmp.ne.s32.totalorder %s107, %s109
    %p113 = scmp.eq.s32.totalorder %s10, 0
    %p114 = por %p112, %p113
    %p115 = scmp.ne.s32.totalorder %s107, %s109
    %p116 = scmp.eq.s32.totalorder %s15, 1
    %p117 = por %p115, %p116
    %p118 = scmp.ne.s32.totalorder %s109, %s110
    %p119 = scmp.eq.s32.totalorder %s15, 0
    %p120 = por %p118, %p119
    %p121 = scmp.ne.s32.totalorder %s109, %s110
    %p122 = scmp.eq.s32.totalorder %s16, 1
    %p123 = por %p121, %p122
    %p125 = scmp.ne.s32.totalorder %s110, %s124
    %p126 = scmp.eq.s32.totalorder %s16, 0
    %p127 = por %p125, %p126
    %s128 = ssub.s32 %s17, %s29
    %s129 = ssub.s32 %s18, %s25
    %s130 = sor.u32 %s128, %s129
    %p131 = scmp.eq.s32.totalorder %s130, 0
    %s133 = sadd.s32 %s132, 1
    %s134 = scalar_select %p131, %s132, %s133
    %p137 = pneg %p131
    %p138 = scmp.eq.s32.totalorder %s10, 1
    %p139 = por %p137, %p138
    %p140 = scmp.ne.s32.totalorder %s132, %s135
    %p141 = scmp.eq.s32.totalorder %s10, 0
    %p142 = por %p140, %p141
    %p143 = scmp.ne.s32.totalorder %s132, %s135
    %p144 = scmp.eq.s32.totalorder %s15, 1
    %p145 = por %p143, %p144
    %p146 = scmp.ne.s32.totalorder %s135, %s136
    %p147 = scmp.eq.s32.totalorder %s15, 0
    %p148 = por %p146, %p147
    %p149 = scmp.ne.s32.totalorder %s135, %s136
    %p150 = scmp.eq.s32.totalorder %s16, 1
    %p151 = por %p149, %p150
    %p153 = scmp.ne.s32.totalorder %s136, %s152
    %p154 = scmp.eq.s32.totalorder %s16, 0
    %p155 = por %p153, %p154
    %p156 = scmp.le.s32.totalorder 1, %s10
    %p157 = scmp.lt.s32.totalorder %s10, 3
    %p158 = pnand %p156, %p157
    %p159 = pneg %p158
    // Predicated region
    $region9: #{fourier_block2d_forward.3} parent=5 // pred_check
      _
    $region10: #{fourier_block2d_forward.3} parent=5 // pred_check_branch
      %161 = sbr.rel (%p158) target = $region12
    $region11: #{fourier_block2d_forward.3} parent=5 // pred_region
      %s162 = ssub.s32 %s10, 1
      // Predicated region
      $region13: #{fourier_block2d_forward.3} parent=11 // pred_check
        %p163 = pneg %p99
      $region14: #{fourier_block2d_forward.3} parent=11 // pred_check_branch
        %165 = sbr.rel (%p163) target = $region16
      $region15: #{fourier_block2d_forward.3} parent=11 // pred_region
        _
      $region16: #{fourier_block2d_forward.3} parent=11 // pred_fallthru
        _
      // Predicated region
      $region17: #{fourier_block2d_forward.3} parent=11 // pred_check
        %p166 = pneg %p120
      $region18: #{fourier_block2d_forward.3} parent=11 // pred_check_branch
        %168 = sbr.rel (%p166) target = $region20
      $region19: #{fourier_block2d_forward.3} parent=11 // pred_region
        _
      $region20: #{fourier_block2d_forward.3} parent=11 // pred_fallthru
        _
    $region12: #{fourier_block2d_forward.3} parent=5 // pred_fallthru
      _
    %p169 = scmp.lt.s32.totalorder %s10, 2
    // Predicated region
    $region21: #{fourier_block2d_forward.3} parent=5 // pred_check
      %p170 = pneg %p169
    $region22: #{fourier_block2d_forward.3} parent=5 // pred_check_branch
      %172 = sbr.rel (%p170) target = $region24
    $region23: #{fourier_block2d_forward.3} parent=5 // pred_region
      // Predicated region
      $region25: #{fourier_block2d_forward.3} parent=23 // pred_check
        %p173 = pneg %p44
      $region26: #{fourier_block2d_forward.3} parent=23 // pred_check_branch
        %175 = sbr.rel (%p173) target = $region28
      $region27: #{fourier_block2d_forward.3} parent=23 // pred_region
        %s176 = smul.u32 2, %s18
        %p177 = scmp.lt.s32.totalorder %s17, 1
        %s178 = scalar_select %p177, %s17, 1
        %p179 = scmp.lt.s32.totalorder %s176, 1
        %s180 = scalar_select %p179, %s176, 1
        %s181 = smul.addr %s178, 2
        %s182 = sadd.s32 %s180, %s181
        %s183 = smul.addr %s182, 8
        %s184 = scalar_lea.vmem %s0, %s183
        %s185 = smul.u32 2, %s18
      $region28: #{fourier_block2d_forward.3} parent=23 // pred_fallthru
        _
      // Predicated region
      $region29: #{fourier_block2d_forward.3} parent=23 // pred_check
        %p186 = pneg %p72
      $region30: #{fourier_block2d_forward.3} parent=23 // pred_check_branch
        %188 = sbr.rel (%p186) target = $region32
      $region31: #{fourier_block2d_forward.3} parent=23 // pred_region
        %s189 = smul.u32 2, %s18
        %p190 = scmp.lt.s32.totalorder %s17, 1
        %s191 = scalar_select %p190, %s17, 1
        %p192 = scmp.lt.s32.totalorder %s189, 1
        %s193 = scalar_select %p192, %s189, 1
        %s194 = smul.addr %s191, 2
        %s195 = sadd.s32 %s193, %s194
        %s196 = smul.addr %s195, 8
        %s197 = scalar_lea.vmem %s1, %s196
        %s198 = smul.u32 2, %s18
      $region32: #{fourier_block2d_forward.3} parent=23 // pred_fallthru
        _
    $region24: #{fourier_block2d_forward.3} parent=5 // pred_fallthru
      _
    %p199 = scmp.le.s32.totalorder 1, %s10
    %p200 = scmp.lt.s32.totalorder %s10, 3
    %p201 = pnand %p199, %p200
    %p202 = pneg %p201
    // Predicated region
    $region33: #{fourier_block2d_forward.3} parent=5 // pred_check
      _
    $region34: #{fourier_block2d_forward.3} parent=5 // pred_check_branch
      %204 = sbr.rel (%p201) target = $region36
    $region35: #{fourier_block2d_forward.3} parent=5 // pred_region
      %s205 = ssub.s32 %s10, 1
      %s206 = smul.u32 2, %s20
      %p207 = scmp.lt.s32.totalorder %s19, 1
      %s208 = scalar_select %p207, %s19, 1
      %p209 = scmp.lt.s32.totalorder %s206, 1
      %s210 = scalar_select %p209, %s206, 1
      %s211 = smul.addr %s208, 2
      %s212 = sadd.s32 %s210, %s211
      %s213 = smul.addr %s212, 8
      %s214 = scalar_lea.vmem %s0, %s213
      %p215 = pneg %p50
      %p216 = pneg %p47
      %s217 = smul.u32 2, %s20
      %p218 = scmp.lt.s32.totalorder %s19, 1
      %s219 = scalar_select %p218, %s19, 1
      %p220 = scmp.lt.s32.totalorder %s217, 1
      %s221 = scalar_select %p220, %s217, 1
      %s222 = smul.addr %s219, 2
      %s223 = sadd.s32 %s221, %s222
      %s224 = smul.addr %s223, 8
      %s225 = scalar_lea.vmem %s1, %s224
      %p226 = pneg %p78
      %p227 = pneg %p75
      %p228 = pneg %p99
      %p229 = pneg %p96
      %p230 = pneg %p120
      %p231 = pneg %p117
      %p232 = pneg %p148
      %p233 = pneg %p145
      %s234 = smul.u32 2, %s20
      %p235 = scmp.lt.s32.totalorder %s19, 1
      %s236 = scalar_select %p235, %s19, 1
      %p237 = scmp.lt.s32.totalorder %s234, 1
      %s238 = scalar_select %p237, %s234, 1
      %s239 = smul.addr %s236, 2
      %s240 = sadd.s32 %s238, %s239
      %s241 = smul.addr %s240, 8
      %s242 = scalar_lea.vmem %s4, %s241
      %s243 = smul.u32 2, %s20
      %p244 = scmp.lt.s32.totalorder %s19, 1
      %s245 = scalar_select %p244, %s19, 1
      %p246 = scmp.lt.s32.totalorder %s243, 1
      %s247 = scalar_select %p246, %s243, 1
      %s248 = smul.addr %s245, 2
      %s249 = sadd.s32 %s247, %s248
      %s250 = smul.addr %s249, 8
      %s251 = scalar_lea.vmem %s0, %s250
      %s252 = smul.u32 2, %s20
      %s253 = smul.u32 2, %s20
      %p254 = scmp.lt.s32.totalorder %s19, 1
      %s255 = scalar_select %p254, %s19, 1
      %p256 = scmp.lt.s32.totalorder %s253, 1
      %s257 = scalar_select %p256, %s253, 1
      %s258 = smul.addr %s255, 2
      %s259 = sadd.s32 %s257, %s258
      %s260 = smul.addr %s259, 8
      %s261 = scalar_lea.vmem %s1, %s260
      %s262 = smul.u32 2, %s20
      %s263 = smul.u32 2, %s20
      %p264 = scmp.lt.s32.totalorder %s19, 1
      %s265 = scalar_select %p264, %s19, 1
      %p266 = scmp.lt.s32.totalorder %s263, 1
      %s267 = scalar_select %p266, %s263, 1
      %s268 = smul.addr %s265, 2
      %s269 = sadd.s32 %s267, %s268
      %s270 = smul.addr %s269, 8
      %s271 = scalar_lea.vmem %s4, %s270
      %s272 = smul.u32 2, %s20
      %v273 = vld [vmem:[%s2] sm:$0xff]
      %v274 = vld [vmem:[%s251] sm:$0xff]
      %v275 = vld [vmem:[%s251 + $0x8] sm:$0xff]
      %v276 = vld [vmem:[%s3] sm:$0xff]
      %278 = vset.pattern.permute.xlu0 0
      %279 = vperm.xlu0 %278, %v276
      %v280 = vpop.permute.xlu0 %279
      %vm282 = vcmask 64512
      %v284 = vsel %vm282, %v273, 0
      %286 = vmatpush.msra.mxu0 0.0
      %287 = vmatpush.msra.mxu0 0.0
      %288 = vmatpush.msra.mxu0 0.0
      %289 = vmatpush.msra.mxu0 0.0
      %290 = vmatpush.msra.mxu0 0.0
      %291 = vmatpush.msra.mxu0 0.0
      %292 = vmatpush.msra.mxu0 0.0
      %293 = vmatpush.msra.mxu0 0.0
      %294 = vmatpush.msra.mxu0 0.0
      %295 = vmatpush.msra.mxu0 0.0
      %296 = vmatpush.msra.mxu0 0.0
      %297 = vmatpush.msra.mxu0 0.0
      %298 = vmatpush.msra.mxu0 0.0
      %299 = vmatpush.msra.mxu0 0.0
      %300 = vmatpush.msra.mxu0 0.0
      %301 = vmatpush.msra.mxu0 %v274
      %302 = vmatmul.f32.gmra.mxu0 %v284
      %v303 = vpop.f32.mrf.mxu0
      %v304 = vadd.f32 %v280, %v303
      %305 = vdwg.mxu0
      %306 = vmatpush.msra.mxu0 0.0
      %307 = vmatpush.msra.mxu0 0.0
      %308 = vmatpush.msra.mxu0 0.0
      %309 = vmatpush.msra.mxu0 0.0
      %310 = vmatpush.msra.mxu0 0.0
      %311 = vmatpush.msra.mxu0 0.0
      %312 = vmatpush.msra.mxu0 0.0
      %313 = vmatpush.msra.mxu0 0.0
      %314 = vmatpush.msra.mxu0 0.0
      %315 = vmatpush.msra.mxu0 0.0
      %316 = vmatpush.msra.mxu0 0.0
      %317 = vmatpush.msra.mxu0 0.0
      %318 = vmatpush.msra.mxu0 0.0
      %319 = vmatpush.msra.mxu0 0.0
      %320 = vmatpush.msra.mxu0 0.0
      %321 = vmatpush.msra.mxu0 %v275
      %322 = vmatmul.f32.gmra.mxu0 %v284
      %v323 = vpop.f32.mrf.mxu0
      %v324 = vadd.f32 %v280, %v323
      %325 = vdwg.mxu0
      %v326 = vld [vmem:[%s261] sm:$0xff]
      %v327 = vld [vmem:[%s261 + $0x8] sm:$0xff]
      %v328 = vadd.f32 %v304, %v326
      %v329 = vadd.f32 %v324, %v327
      %v330 = vmul.f32 %v328, 0.5
      %v331 = vmul.f32 %v329, 0.5
      %v332 = vmul.f32 %v328, 0.70710677
      %v333 = vmul.f32 %v329, 0.70710677
      %v334 = vmul.f32 %v332, %v332
      %v335 = vmin.f32 16.0, %v334
      %v336 = vmul.f32 %v335, 2.1237322e-06
      %v337 = vadd.f32 %v336, 0.00028619796
      %v338 = vmul.f32 %v335, %v337
      %v339 = vadd.f32 %v338, 0.0036580483
      %v340 = vmul.f32 %v335, %v339
      %v341 = vadd.f32 %v340, 0.05243302
      %v342 = vmul.f32 %v335, %v341
      %v343 = vadd.f32 %v342, 0.18741608
      %v344 = vmul.f32 %v335, %v343
      %v345 = vadd.f32 %v344, 1.1283791
      %v346 = vmul.f32 %v332, %v345
      %v347 = vmul.f32 %v335, 3.8918573e-05
      %v348 = vadd.f32 %v347, 0.001143296
      %v349 = vmul.f32 %v335, %v348
      %v350 = vadd.f32 %v349, 0.014752088
      %v351 = vmul.f32 %v335, %v350
      %v352 = vadd.f32 %v351, 0.112945676
      %v353 = vmul.f32 %v335, %v352
      %v354 = vadd.f32 %v353, 0.4994258
      %v355 = vmul.f32 %v335, %v354
      %v356 = vadd.f32 %v355, 1.0
      %v357 = vrcp.pop %v356
      %v358 = vmul.f32 %v356, %v357
      %v359 = vsub.f32 1.0, %v358
      %v360 = vmul.f32 %v357, %v359
      %v361 = vadd.f32 %v357, %v360
      %vm362 = vweird.f32 %v356
      %vm363 = vweird.f32 %v357
      %vm364 = vmor %vm362, %vm363
      %v365 = vsel %vm364, %v357, %v361
      %v366 = vand.u32 2147483647, %v356
      %vm367 = vcmp.eq.f32.partialorder %v366, 8.507059e+37
      %v368 = vand.u32 %v356, 2147483648
      %v369 = vor.u32 1.1754944e-38, %v368
      %v370 = vsel %vm367, %v369, %v365
      %v371 = vmul.f32 %v346, %v370
      %v372 = vmin.f32 %v371, 1.0
      %v373 = vmax.f32 %v372, -1.0
      %v374 = vmul.f32 %v333, %v333
      %v375 = vmin.f32 16.0, %v374
      %v376 = vmul.f32 %v375, 2.1237322e-06
      %v377 = vadd.f32 %v376, 0.00028619796
      %v378 = vmul.f32 %v375, %v377
      %v379 = vadd.f32 %v378, 0.0036580483
      %v380 = vmul.f32 %v375, %v379
      %v381 = vadd.f32 %v380, 0.05243302
      %v382 = vmul.f32 %v375, %v381
      %v383 = vadd.f32 %v382, 0.18741608
      %v384 = vmul.f32 %v375, %v383
      %v385 = vadd.f32 %v384, 1.1283791
      %v386 = vmul.f32 %v333, %v385
      %v387 = vmul.f32 %v375, 3.8918573e-05
      %v388 = vadd.f32 %v387, 0.001143296
      %v389 = vmul.f32 %v375, %v388
      %v390 = vadd.f32 %v389, 0.014752088
      %v391 = vmul.f32 %v375, %v390
      %v392 = vadd.f32 %v391, 0.112945676
      %v393 = vmul.f32 %v375, %v392
      %v394 = vadd.f32 %v393, 0.4994258
      %v395 = vmul.f32 %v375, %v394
      %v396 = vadd.f32 %v395, 1.0
      %v397 = vrcp.pop %v396
      %v398 = vmul.f32 %v396, %v397
      %v399 = vsub.f32 1.0, %v398
      %v400 = vmul.f32 %v397, %v399
      %v401 = vadd.f32 %v397, %v400
      %vm402 = vweird.f32 %v396
      %vm403 = vweird.f32 %v397
      %vm404 = vmor %vm402, %vm403
      %v405 = vsel %vm404, %v397, %v401
      %v406 = vand.u32 2147483647, %v396
      %vm407 = vcmp.eq.f32.partialorder %v406, 8.507059e+37
      %v408 = vand.u32 %v396, 2147483648
      %v409 = vor.u32 1.1754944e-38, %v408
      %v410 = vsel %vm407, %v409, %v405
      %v411 = vmul.f32 %v386, %v410
      %v412 = vmin.f32 %v411, 1.0
      %v413 = vmax.f32 %v412, -1.0
      %v414 = vadd.f32 %v373, 1.0
      %v415 = vadd.f32 %v413, 1.0
      %v416 = vmul.f32 %v330, %v414
      %v417 = vmul.f32 %v331, %v415
      %418 = vst [vmem:[%s271] sm:$0xff] %v416
      %419 = vst [vmem:[%s271 + $0x8] sm:$0xff] %v417
      %s420 = smul.u32 2, %s20
      %p421 = scmp.lt.s32.totalorder %s19, 1
      %s422 = scalar_select %p421, %s19, 1
      %p423 = scmp.lt.s32.totalorder %s420, 1
      %s424 = scalar_select %p423, %s420, 1
      %s425 = smul.addr %s422, 2
      %s426 = sadd.s32 %s424, %s425
      %s427 = smul.addr %s426, 8
      %s428 = scalar_lea.vmem %s4, %s427
      // Predicated region
      $region37: #{fourier_block2d_forward.3} parent=35 // pred_check
        %p429 = pneg %p145
      $region38: #{fourier_block2d_forward.3} parent=35 // pred_check_branch
        %431 = sbr.rel (%p429) target = $region40
      $region39: #{fourier_block2d_forward.3} parent=35 // pred_region
        %s432 = smul.u32 2, %s20
      $region40: #{fourier_block2d_forward.3} parent=35 // pred_fallthru
        _
    $region36: #{fourier_block2d_forward.3} parent=5 // pred_fallthru
      _
    %p433 = scmp.le.s32.totalorder 2, %s10
    // Predicated region
    $region41: #{fourier_block2d_forward.3} parent=5 // pred_check
      %p434 = pneg %p433
    $region42: #{fourier_block2d_forward.3} parent=5 // pred_check_branch
      %436 = sbr.rel (%p434) target = $region44
    $region43: #{fourier_block2d_forward.3} parent=5 // pred_region
      %s437 = ssub.s32 %s10, 2
      // Predicated region
      $region45: #{fourier_block2d_forward.3} parent=43 // pred_check
        %p438 = pneg %p151
      $region46: #{fourier_block2d_forward.3} parent=43 // pred_check_branch
        %440 = sbr.rel (%p438) target = $region48
      $region47: #{fourier_block2d_forward.3} parent=43 // pred_region
        %s441 = smul.u32 2, %s22
        %p442 = scmp.lt.s32.totalorder %s21, 1
        %s443 = scalar_select %p442, %s21, 1
        %p444 = scmp.lt.s32.totalorder %s441, 1
        %s445 = scalar_select %p444, %s441, 1
        %s446 = smul.addr %s443, 2
        %s447 = sadd.s32 %s445, %s446
        %s448 = smul.addr %s447, 8
        %s449 = scalar_lea.vmem %s4, %s448
      $region48: #{fourier_block2d_forward.3} parent=43 // pred_fallthru
        _
    $region44: #{fourier_block2d_forward.3} parent=5 // pred_fallthru
      _
  $region6: #{fourier_block2d_forward.3} parent=0 // loop_footer
    %s14 = sadd.s32 1, %s10
  $region7: #{fourier_block2d_forward.3} parent=0 // loop_footer_branch
    %9 = sbr.rel target = $region3
  $region8: #{fourier_block2d_forward.3} parent=0 // loop_exit
    _

</llo_original>
